<compile_context>
chip_gen: v7x
topology: tpu7x:2x2x1
jax: 0.10.0
libtpu: 0.0.40
codegen_flags: <defaults>
</compile_context>

<pallas_src>
from functools import partial

import jax
import jax.numpy as jnp
from jax.experimental import pallas as pl
from jax.experimental.pallas import tpu as pltpu


def fcn_kernel(x_ref, w1_ref, b1_ref, wmid_ref, bmid_ref, w5_ref, b5_ref, o_ref):
    """One lane-dense batch tile of the 5-layer MLP (1->32->32->32->32->1, tanh).

    Layout is transposed vs. PyTorch: batch lives on the lane axis, activations
    are (features, TM), and hidden layers compute h = tanh(W @ h + b) with W
    stored (out_features, in_features).
    """
    x = x_ref[...]                                                  # (1, TM)

    # Layer 1 (in_features == 1): outer product on the VPU via broadcasting,
    # avoids a degenerate K=1 MXU matmul.
    h = jnp.tanh(w1_ref[...] * x + b1_ref[...])                     # (32,1)*(1,TM) -> (32,TM)

    # Layers 2-4: lane-dense (32,32) @ (32,TM) MXU dots, f32 accumulation.
    for l in range(3):                                              # static unroll
        h = jnp.tanh(
            jnp.dot(wmid_ref[l], h,
                    preferred_element_type=jnp.float32,
                    precision=jax.lax.Precision.HIGHEST)
            + bmid_ref[l])                                          # (32, TM)

    # Layer 5 (out_features == 1): VPU multiply + sublane reduction keeps the
    # result lane-dense (1, TM); no nearly-empty MXU result tile.
    y = jnp.sum(w5_ref[...] * h, axis=0, keepdims=True) + b5_ref[...]   # (1, TM)
    o_ref[...] = y.astype(o_ref.dtype)


def pack_params(params):
    """Repack PyTorch-convention params ((in,out) weights, (1,out) biases) into
    the kernel layout ONCE, outside the per-call path."""
    (w1, b1), (w2, b2), (w3, b3), (w4, b4), (w5, b5) = params
    f32 = jnp.float32
    return {
        "w1_t": w1.T.astype(f32),                                   # (32, 1)
        "b1_c": b1.reshape(32, 1).astype(f32),                      # (32, 1)
        "wmid": jnp.stack([w2.T, w3.T, w4.T]).astype(f32),          # (3, 32, 32)
        "bmid": jnp.stack([b2.reshape(32, 1),
                           b3.reshape(32, 1),
                           b4.reshape(32, 1)]).astype(f32),         # (3, 32, 1)
        "w5_c": w5.astype(f32),                                     # (32, 1) column
        "b5_s": b5.reshape(1, 1).astype(f32),                       # (1, 1)
    }


@partial(jax.jit, static_argnames=("tm",))
def fcn_forward(x, packed, *, tm=512):
    """x: (N, 1) float32.  packed: output of pack_params().  Returns (N, 1).

    For N <= tm (the real N=500 case) the whole problem is ONE full-array
    block -> grid=(1,), no padding, no output slice.  For larger N it falls
    back to lane-aligned tiles of width tm (keep tm in 512..1024)."""
    N = x.shape[0]
    x_row = x.astype(jnp.float32).reshape(1, N)                     # batch onto lanes

    if N <= tm:
        # Single full-array block: block dims == array dims, so the (8,128)
        # divisibility rule does not apply and no padding is needed.
        n_pad, tile, grid = N, N, (1,)
    else:
        assert tm % 128 == 0, "batch tile must be lane-aligned (multiple of 128)"
        n_pad = pl.cdiv(N, tm) * tm
        tile, grid = tm, (n_pad // tm,)
        if n_pad != N:
            x_row = jnp.pad(x_row, ((0, 0), (0, n_pad - N)))

    def const_spec(shape):
        # Full-array block, constant index -> loaded once, resident in VMEM.
        return pl.BlockSpec(shape, lambda i, _n=len(shape): (0,) * _n)

    in_specs = [
        pl.BlockSpec((1, tile), lambda i: (0, i)),      # lane-dense batch slab of x
        const_spec(packed["w1_t"].shape), const_spec(packed["b1_c"].shape),
        const_spec(packed["wmid"].shape), const_spec(packed["bmid"].shape),
        const_spec(packed["w5_c"].shape), const_spec(packed["b5_s"].shape),
    ]
    out_spec = pl.BlockSpec((1, tile), lambda i: (0, i))

    out = pl.pallas_call(
        fcn_kernel,
        out_shape=jax.ShapeDtypeStruct((1, n_pad), jnp.float32),
        grid_spec=pltpu.PrefetchScalarGridSpec(
            num_scalar_prefetch=0,
            grid=grid,
            in_specs=in_specs,
            out_specs=out_spec,
        ),
        compiler_params=pltpu.CompilerParams(
            # Only matters on multi-TC chips (v7x) at large N; harmless otherwise.
            dimension_semantics=("parallel",)),
    )(x_row, packed["w1_t"], packed["b1_c"], packed["wmid"],
      packed["bmid"], packed["w5_c"], packed["b5_s"])

    if n_pad != N:
        out = out[:, :N]
    return out.reshape(N, 1)                            # restore PyTorch (N, 1) layout


def init_params(key):
    """Deterministic init mirroring nn.Linear shapes (weights stored (in, out))."""
    sizes = [(1, 32), (32, 32), (32, 32), (32, 32), (32, 1)]
    params = []
    for (fan_in, fan_out) in sizes:
        key, kw, kb = jax.random.split(key, 3)
        bound = 1.0 / jnp.sqrt(fan_in)
        w = jax.random.uniform(kw, (fan_in, fan_out), jnp.float32, -bound, bound)
        b = jax.random.uniform(kb, (1, fan_out), jnp.float32, -bound, bound)
        params.append((w, b))
    return params


def fcn_reference(x, params):
    h = x
    for i, (w, b) in enumerate(params):
        h = h @ w + b
        if i < len(params) - 1:
            h = jnp.tanh(h)
    return h


if __name__ == "__main__":
    key = jax.random.PRNGKey(0)
    _, kp = jax.random.split(key)

    # Real workload from the spec: x = torch.linspace(-1, 1, 500).view(-1, 1)
    N = 500
    x = jnp.linspace(-1.0, 1.0, N, dtype=jnp.float32).reshape(-1, 1)
    params = init_params(kp)
    packed = pack_params(params)        # hoisted repacking: computed once

    out = fcn_forward(x, packed)        # tm=512 >= 500 -> one grid step, no pad/slice
    out = jax.block_until_ready(out)

    ref = fcn_reference(x, params)
    assert out.shape == (N, 1)
    assert jnp.allclose(out, ref, atol=1e-5, rtol=1e-5), "mismatch vs reference"

    print("KERNEL_OK")
</pallas_src>

<mosaic_0001>
module attributes {stable_mosaic.version = 11 : i64} {
  func.func @fcn_kernel(%arg0: i32, %arg1: memref<1x500xf32, #tpu.memory_space<vmem>>, %arg2: memref<32x1xf32, #tpu.memory_space<vmem>>, %arg3: memref<32x1xf32, #tpu.memory_space<vmem>>, %arg4: memref<3x32x32xf32, #tpu.memory_space<vmem>>, %arg5: memref<3x32x1xf32, #tpu.memory_space<vmem>>, %arg6: memref<32x1xf32, #tpu.memory_space<vmem>>, %arg7: memref<1x1xf32, #tpu.memory_space<vmem>>, %arg8: memref<1x500xf32, #tpu.memory_space<vmem>>) attributes {dimension_semantics = [#tpu.dimension_semantics<parallel>], iteration_bounds = array<i64: 1>, scalar_prefetch = 0 : i64, scratch_operands = 0 : i64, tpu.core_type = #tpu.core_type<tc>, window_params = [{transform_indices = @transform_0, window_bounds = array<i64: 1, 500>}, {pipeline_mode = #tpu.pipeline_mode<synchronous>, transform_indices = @transform_1, window_bounds = array<i64: 32, 1>}, {pipeline_mode = #tpu.pipeline_mode<synchronous>, transform_indices = @transform_2, window_bounds = array<i64: 32, 1>}, {pipeline_mode = #tpu.pipeline_mode<synchronous>, transform_indices = @transform_3, window_bounds = array<i64: 3, 32, 32>}, {pipeline_mode = #tpu.pipeline_mode<synchronous>, transform_indices = @transform_4, window_bounds = array<i64: 3, 32, 1>}, {pipeline_mode = #tpu.pipeline_mode<synchronous>, transform_indices = @transform_5, window_bounds = array<i64: 32, 1>}, {pipeline_mode = #tpu.pipeline_mode<synchronous>, transform_indices = @transform_6, window_bounds = array<i64: 1, 1>}, {transform_indices = @transform_7, window_bounds = array<i64: 1, 500>}]} {
    %c0 = arith.constant 0 : index
    %c0_0 = arith.constant 0 : index
    %0 = vector.load %arg1[%c0, %c0_0] : memref<1x500xf32, #tpu.memory_space<vmem>>, vector<1x500xf32>
    %c0_1 = arith.constant 0 : index
    %c0_2 = arith.constant 0 : index
    %1 = vector.load %arg2[%c0_1, %c0_2] : memref<32x1xf32, #tpu.memory_space<vmem>>, vector<32x1xf32>
    %2 = vector.broadcast %1 : vector<32x1xf32> to vector<32x500xf32>
    %3 = vector.broadcast %0 : vector<1x500xf32> to vector<32x500xf32>
    %4 = arith.mulf %2, %3 : vector<32x500xf32>
    %c0_3 = arith.constant 0 : index
    %c0_4 = arith.constant 0 : index
    %5 = vector.load %arg3[%c0_3, %c0_4] : memref<32x1xf32, #tpu.memory_space<vmem>>, vector<32x1xf32>
    %6 = vector.broadcast %5 : vector<32x1xf32> to vector<32x500xf32>
    %7 = arith.addf %4, %6 : vector<32x500xf32>
    %8 = math.tanh %7 : vector<32x500xf32>
    %c0_5 = arith.constant 0 : index
    %c0_6 = arith.constant 0 : index
    %c0_7 = arith.constant 0 : index
    %9 = vector.load %arg4[%c0_5, %c0_6, %c0_7] : memref<3x32x32xf32, #tpu.memory_space<vmem>>, vector<1x32x32xf32>
    %10 = vector.shape_cast %9 : vector<1x32x32xf32> to vector<32x32xf32>
    %cst = arith.constant dense<0.000000e+00> : vector<32x500xf32>
    %11 = tpu.matmul %10, %8, %cst {dimension_numbers = #tpu.dot_dimension_numbers<[1], [0], [0], [1], [0, 0, 1, 1], [], []>, precision = #tpu.contract_precision<fp32>} : vector<32x32xf32>, vector<32x500xf32>, vector<32x500xf32> -> vector<32x500xf32>
    %c0_8 = arith.constant 0 : index
    %c0_9 = arith.constant 0 : index
    %c0_10 = arith.constant 0 : index
    %12 = vector.load %arg5[%c0_8, %c0_9, %c0_10] : memref<3x32x1xf32, #tpu.memory_space<vmem>>, vector<1x32x1xf32>
    %13 = vector.shape_cast %12 : vector<1x32x1xf32> to vector<32x1xf32>
    %14 = vector.broadcast %13 : vector<32x1xf32> to vector<32x500xf32>
    %15 = arith.addf %11, %14 : vector<32x500xf32>
    %16 = math.tanh %15 : vector<32x500xf32>
    %c1 = arith.constant 1 : index
    %c0_11 = arith.constant 0 : index
    %c0_12 = arith.constant 0 : index
    %17 = vector.load %arg4[%c1, %c0_11, %c0_12] : memref<3x32x32xf32, #tpu.memory_space<vmem>>, vector<1x32x32xf32>
    %18 = vector.shape_cast %17 : vector<1x32x32xf32> to vector<32x32xf32>
    %cst_13 = arith.constant dense<0.000000e+00> : vector<32x500xf32>
    %19 = tpu.matmul %18, %16, %cst_13 {dimension_numbers = #tpu.dot_dimension_numbers<[1], [0], [0], [1], [0, 0, 1, 1], [], []>, precision = #tpu.contract_precision<fp32>} : vector<32x32xf32>, vector<32x500xf32>, vector<32x500xf32> -> vector<32x500xf32>
    %c1_14 = arith.constant 1 : index
    %c0_15 = arith.constant 0 : index
    %c0_16 = arith.constant 0 : index
    %20 = vector.load %arg5[%c1_14, %c0_15, %c0_16] : memref<3x32x1xf32, #tpu.memory_space<vmem>>, vector<1x32x1xf32>
    %21 = vector.shape_cast %20 : vector<1x32x1xf32> to vector<32x1xf32>
    %22 = vector.broadcast %21 : vector<32x1xf32> to vector<32x500xf32>
    %23 = arith.addf %19, %22 : vector<32x500xf32>
    %24 = math.tanh %23 : vector<32x500xf32>
    %c2 = arith.constant 2 : index
    %c0_17 = arith.constant 0 : index
    %c0_18 = arith.constant 0 : index
    %25 = vector.load %arg4[%c2, %c0_17, %c0_18] : memref<3x32x32xf32, #tpu.memory_space<vmem>>, vector<1x32x32xf32>
    %26 = vector.shape_cast %25 : vector<1x32x32xf32> to vector<32x32xf32>
    %cst_19 = arith.constant dense<0.000000e+00> : vector<32x500xf32>
    %27 = tpu.matmul %26, %24, %cst_19 {dimension_numbers = #tpu.dot_dimension_numbers<[1], [0], [0], [1], [0, 0, 1, 1], [], []>, precision = #tpu.contract_precision<fp32>} : vector<32x32xf32>, vector<32x500xf32>, vector<32x500xf32> -> vector<32x500xf32>
    %c2_20 = arith.constant 2 : index
    %c0_21 = arith.constant 0 : index
    %c0_22 = arith.constant 0 : index
    %28 = vector.load %arg5[%c2_20, %c0_21, %c0_22] : memref<3x32x1xf32, #tpu.memory_space<vmem>>, vector<1x32x1xf32>
    %29 = vector.shape_cast %28 : vector<1x32x1xf32> to vector<32x1xf32>
    %30 = vector.broadcast %29 : vector<32x1xf32> to vector<32x500xf32>
    %31 = arith.addf %27, %30 : vector<32x500xf32>
    %32 = math.tanh %31 : vector<32x500xf32>
    %c0_23 = arith.constant 0 : index
    %c0_24 = arith.constant 0 : index
    %33 = vector.load %arg6[%c0_23, %c0_24] : memref<32x1xf32, #tpu.memory_space<vmem>>, vector<32x1xf32>
    %34 = vector.broadcast %33 : vector<32x1xf32> to vector<32x500xf32>
    %35 = arith.mulf %34, %32 : vector<32x500xf32>
    %cst_25 = arith.constant dense<0.000000e+00> : vector<500xf32>
    %36 = vector.multi_reduction <add>, %35, %cst_25 [0] : vector<32x500xf32> to vector<500xf32>
    %37 = vector.shape_cast %36 : vector<500xf32> to vector<1x500xf32>
    %c0_26 = arith.constant 0 : index
    %c0_27 = arith.constant 0 : index
    %38 = vector.load %arg7[%c0_26, %c0_27] : memref<1x1xf32, #tpu.memory_space<vmem>>, vector<1x1xf32>
    %39 = vector.broadcast %38 : vector<1x1xf32> to vector<1x500xf32>
    %40 = arith.addf %37, %39 : vector<1x500xf32>
    %c0_28 = arith.constant 0 : index
    %c0_29 = arith.constant 0 : index
    %41 = vector.load %arg8[%c0_28, %c0_29] : memref<1x500xf32, #tpu.memory_space<vmem>>, vector<1x500xf32>
    tpu.vector_store %arg8[%c0_28, %c0_29], %40 {strides = array<i32>} : memref<1x500xf32, #tpu.memory_space<vmem>>, vector<1x500xf32>,
    return
  }
  func.func @transform_0(%arg0: i32) -> (i32, i32) {
    %c0_i32 = arith.constant 0 : i32
    %c0_i32_0 = arith.constant 0 : i32
    return %c0_i32, %arg0 : i32, i32
  }
  func.func @transform_1(%arg0: i32) -> (i32, i32) {
    %c0_i32 = arith.constant 0 : i32
    %c0_i32_0 = arith.constant 0 : i32
    %c0_i32_1 = arith.constant 0 : i32
    return %c0_i32, %c0_i32_0 : i32, i32
  }
  func.func @transform_2(%arg0: i32) -> (i32, i32) {
    %c0_i32 = arith.constant 0 : i32
    %c0_i32_0 = arith.constant 0 : i32
    %c0_i32_1 = arith.constant 0 : i32
    return %c0_i32, %c0_i32_0 : i32, i32
  }
  func.func @transform_3(%arg0: i32) -> (i32, i32, i32) {
    %c0_i32 = arith.constant 0 : i32
    %c0_i32_0 = arith.constant 0 : i32
    %c0_i32_1 = arith.constant 0 : i32
    %c0_i32_2 = arith.constant 0 : i32
    return %c0_i32, %c0_i32_0, %c0_i32_1 : i32, i32, i32
  }
  func.func @transform_4(%arg0: i32) -> (i32, i32, i32) {
    %c0_i32 = arith.constant 0 : i32
    %c0_i32_0 = arith.constant 0 : i32
    %c0_i32_1 = arith.constant 0 : i32
    %c0_i32_2 = arith.constant 0 : i32
    return %c0_i32, %c0_i32_0, %c0_i32_1 : i32, i32, i32
  }
  func.func @transform_5(%arg0: i32) -> (i32, i32) {
    %c0_i32 = arith.constant 0 : i32
    %c0_i32_0 = arith.constant 0 : i32
    %c0_i32_1 = arith.constant 0 : i32
    return %c0_i32, %c0_i32_0 : i32, i32
  }
  func.func @transform_6(%arg0: i32) -> (i32, i32) {
    %c0_i32 = arith.constant 0 : i32
    %c0_i32_0 = arith.constant 0 : i32
    %c0_i32_1 = arith.constant 0 : i32
    return %c0_i32, %c0_i32_0 : i32, i32
  }
  func.func @transform_7(%arg0: i32) -> (i32, i32) {
    %c0_i32 = arith.constant 0 : i32
    %c0_i32_0 = arith.constant 0 : i32
    return %c0_i32, %arg0 : i32, i32
  }
}

</mosaic_0001>

<llo_original>
// kernel: fcn_forward.1
$region0: #{fcn_forward.1}
  #allocation0 [shape = 'u32[]', space=smem, size = 0x4, offset = 0x4, fixed_abs, tag = 'smem constant byte address 0x4 - core index']
  #allocation1 [shape = 'u32[144,128]{1,0:T(1,128)}', space=vmem, size = 0x12000, scoped, tag = 'internal scratch']
  #allocation2 [shape = 'f32[1,1]{1,0:T(1,128)S(1)}', space=vmem, size = 0x200, scoped, tag = 'scoped memory for fcn_forward.1']
  %s0 = inlined_call_operand.vmem [shape: f32[1,500], index: 0, kind: input, shape index: {}]
  %s1 = inlined_call_operand.vmem [shape: f32[32,1], index: 1, kind: input, shape index: {}]
  %s2 = inlined_call_operand.vmem [shape: f32[32,1], index: 2, kind: input, shape index: {}]
  %s3 = inlined_call_operand.vmem [shape: f32[3,32,32], index: 3, kind: input, shape index: {}]
  %s4 = inlined_call_operand.vmem [shape: f32[3,32,1], index: 4, kind: input, shape index: {}]
  %s5 = inlined_call_operand.vmem [shape: f32[32,1], index: 5, kind: input, shape index: {}]
  %s6 = inlined_call_operand.<no memory space> [shape: f32[1,1], index: 6, kind: input, shape index: {}]
  %s7 = inlined_call_operand.hbm [shape: f32[1,500], index: 7, kind: output, shape index: {}]
  %s8 = sld [smem:[#allocation0]]
  $region38: #{fcn_forward.1} parent=0
    _
  %s10 = ssub.s32 1, %s8
  %s11 = scalar_select 0, %s10, %s8
  %v12 = vstv %s6
  %13 = vst [vmem:[#allocation2] sm:$0x1] %v12
  $region1: #{fcn_forward.1} parent=0
    #allocation3 [shape = 'u8[2048]{0}', space=vmem, size = 0x800, scoped, tag = 'output window, operand 0, single buffered']
    #allocation4 [shape = 's32[1]{0}', space=sflag, size = 0x4, scoped, tag = 'scoped memory for fcn_forward.1']
    %14 = vsyncpa [#allocation4], 0
    // Predicated region
    $region2: #{fcn_forward.1} parent=1 // pred_check
      _
    $region3: #{fcn_forward.1} parent=1 // pred_check_branch
      %16 = sbr.rel (0) target = $region5
    $region4: #{fcn_forward.1} parent=1 // pred_region
      _
    $region5: #{fcn_forward.1} parent=1 // pred_fallthru
      _
    // Predicated region
    $region6: #{fcn_forward.1} parent=1 // pred_check
      _
    $region7: #{fcn_forward.1} parent=1 // pred_check_branch
      %18 = sbr.rel (0) target = $region9
    $region8: #{fcn_forward.1} parent=1 // pred_region
      _
    $region9: #{fcn_forward.1} parent=1 // pred_fallthru
      _
    // Predicated region
    $region10: #{fcn_forward.1} parent=1 // pred_check
      _
    $region11: #{fcn_forward.1} parent=1 // pred_check_branch
      %20 = sbr.rel (0) target = $region13
    $region12: #{fcn_forward.1} parent=1 // pred_region
      _
    $region13: #{fcn_forward.1} parent=1 // pred_fallthru
      _
    // Predicated region
    $region14: #{fcn_forward.1} parent=1 // pred_check
      _
    $region15: #{fcn_forward.1} parent=1 // pred_check_branch
      %22 = sbr.rel (0) target = $region17
    $region16: #{fcn_forward.1} parent=1 // pred_region
      _
    $region17: #{fcn_forward.1} parent=1 // pred_fallthru
      _
    // Predicated region
    $region18: #{fcn_forward.1} parent=1 // pred_check
      _
    $region19: #{fcn_forward.1} parent=1 // pred_check_branch
      %24 = sbr.rel (0) target = $region21
    $region20: #{fcn_forward.1} parent=1 // pred_region
      _
    $region21: #{fcn_forward.1} parent=1 // pred_fallthru
      _
    // Predicated region
    $region22: #{fcn_forward.1} parent=1 // pred_check
      _
    $region23: #{fcn_forward.1} parent=1 // pred_check_branch
      %26 = sbr.rel (0) target = $region25
    $region24: #{fcn_forward.1} parent=1 // pred_region
      _
    $region25: #{fcn_forward.1} parent=1 // pred_fallthru
      _
    // Predicated region
    $region26: #{fcn_forward.1} parent=1 // pred_check
      _
    $region27: #{fcn_forward.1} parent=1 // pred_check_branch
      %28 = sbr.rel (0) target = $region29
    $region28: #{fcn_forward.1} parent=1 // pred_region
      _
    $region29: #{fcn_forward.1} parent=1 // pred_fallthru
      _
    %v29 = vld [vmem:[%s0] sm:$0xf]
    %v30 = vld [vmem:[%s1] sm:$0xff]
    %v31 = vld [vmem:[%s1 + $0x8] sm:$0xff]
    %v32 = vld [vmem:[%s1 + $0x10] sm:$0xff]
    %v33 = vld [vmem:[%s1 + $0x18] sm:$0xff]
    %35 = vset.pattern.permute.xlu0 0
    %36 = vperm.xlu0 %35, %v30
    %v37 = vpop.permute.xlu0 %36
    %40 = vset.pattern.permute.xlu0 0
    %41 = vperm.xlu0 %40, %v31
    %v42 = vpop.permute.xlu0 %41
    %45 = vset.pattern.permute.xlu0 0
    %46 = vperm.xlu0 %45, %v32
    %v47 = vpop.permute.xlu0 %46
    %50 = vset.pattern.permute.xlu0 0
    %51 = vperm.xlu0 %50, %v33
    %v52 = vpop.permute.xlu0 %51
    %v55 = vlaneseq
    %v56 = vshrl.u32 %v55, 7
    %v57 = vsub.s32 0, %v56
    %v58 = vrot.slane %v29, %v57
    %v59 = vlaneseq
    %v60 = vshrl.u32 %v59, 7
    %v61 = vsub.s32 1, %v60
    %v62 = vrot.slane %v29, %v61
    %v63 = vlaneseq
    %v64 = vshrl.u32 %v63, 7
    %v65 = vsub.s32 2, %v64
    %v66 = vrot.slane %v29, %v65
    %v67 = vlaneseq
    %v68 = vshrl.u32 %v67, 7
    %v69 = vsub.s32 3, %v68
    %v70 = vrot.slane %v29, %v69
    %v75 = vmul.f32 %v37, %v58
    %v76 = vmul.f32 %v37, %v62
    %v77 = vmul.f32 %v37, %v66
    %v78 = vmul.f32 %v37, %v70
    %v79 = vmul.f32 %v42, %v58
    %v80 = vmul.f32 %v42, %v62
    %v81 = vmul.f32 %v42, %v66
    %v82 = vmul.f32 %v42, %v70
    %v83 = vmul.f32 %v47, %v58
    %v84 = vmul.f32 %v47, %v62
    %v85 = vmul.f32 %v47, %v66
    %v86 = vmul.f32 %v47, %v70
    %v87 = vmul.f32 %v52, %v58
    %v88 = vmul.f32 %v52, %v62
    %v89 = vmul.f32 %v52, %v66
    %v90 = vmul.f32 %v52, %v70
    %v91 = vld [vmem:[%s2] sm:$0xff]
    %v92 = vld [vmem:[%s2 + $0x8] sm:$0xff]
    %v93 = vld [vmem:[%s2 + $0x10] sm:$0xff]
    %v94 = vld [vmem:[%s2 + $0x18] sm:$0xff]
    %96 = vset.pattern.permute.xlu0 0
    %97 = vperm.xlu0 %96, %v91
    %v98 = vpop.permute.xlu0 %97
    %101 = vset.pattern.permute.xlu0 0
    %102 = vperm.xlu0 %101, %v92
    %v103 = vpop.permute.xlu0 %102
    %106 = vset.pattern.permute.xlu0 0
    %107 = vperm.xlu0 %106, %v93
    %v108 = vpop.permute.xlu0 %107
    %111 = vset.pattern.permute.xlu0 0
    %112 = vperm.xlu0 %111, %v94
    %v113 = vpop.permute.xlu0 %112
    %v115 = vadd.f32 %v75, %v98
    %v116 = vadd.f32 %v76, %v98
    %v117 = vadd.f32 %v77, %v98
    %v118 = vadd.f32 %v78, %v98
    %v119 = vadd.f32 %v79, %v103
    %v120 = vadd.f32 %v80, %v103
    %v121 = vadd.f32 %v81, %v103
    %v122 = vadd.f32 %v82, %v103
    %v123 = vadd.f32 %v83, %v108
    %v124 = vadd.f32 %v84, %v108
    %v125 = vadd.f32 %v85, %v108
    %v126 = vadd.f32 %v86, %v108
    %v127 = vadd.f32 %v87, %v113
    %v128 = vadd.f32 %v88, %v113
    %v129 = vadd.f32 %v89, %v113
    %v130 = vadd.f32 %v90, %v113
    %v131 = vtanh.pop %v115
    %v132 = vtanh.pop %v116
    %v133 = vtanh.pop %v117
    %v134 = vtanh.pop %v118
    %v135 = vtanh.pop %v119
    %v136 = vtanh.pop %v120
    %v137 = vtanh.pop %v121
    %v138 = vtanh.pop %v122
    %v139 = vtanh.pop %v123
    %v140 = vtanh.pop %v124
    %v141 = vtanh.pop %v125
    %v142 = vtanh.pop %v126
    %v143 = vtanh.pop %v127
    %v144 = vtanh.pop %v128
    %v145 = vtanh.pop %v129
    %v146 = vtanh.pop %v130
    %v147 = vld [vmem:[%s3] sm:$0xff]
    %v148 = vld [vmem:[%s3 + $0x8] sm:$0xff]
    %v149 = vld [vmem:[%s3 + $0x10] sm:$0xff]
    %v150 = vld [vmem:[%s3 + $0x18] sm:$0xff]
    %v151 = vld [vmem:[%s4] sm:$0xff]
    %v152 = vld [vmem:[%s4 + $0x8] sm:$0xff]
    %v153 = vld [vmem:[%s4 + $0x10] sm:$0xff]
    %v154 = vld [vmem:[%s4 + $0x18] sm:$0xff]
    %156 = vset.pattern.permute.xlu0 0
    %157 = vperm.xlu0 %156, %v151
    %v158 = vpop.permute.xlu0 %157
    %161 = vset.pattern.permute.xlu0 0
    %162 = vperm.xlu0 %161, %v152
    %v163 = vpop.permute.xlu0 %162
    %166 = vset.pattern.permute.xlu0 0
    %167 = vperm.xlu0 %166, %v153
    %v168 = vpop.permute.xlu0 %167
    %171 = vset.pattern.permute.xlu0 0
    %172 = vperm.xlu0 %171, %v154
    %v173 = vpop.permute.xlu0 %172
    %vm175 = vcmask 261120
    %v177 = vsel %vm175, %v147, 0
    %v180 = vsel %vm175, %v148, 0
    %v183 = vsel %vm175, %v149, 0
    %v186 = vsel %vm175, %v150, 0
    %v188 = vand.u32 %v132, 4294901760
    %189 = vmatprep.subr.mxu0 %v188
    %v190 = vand.u32 %v131, 4294901760
    %191 = vmatpush1.msra.mxu0 %v190
    %v192 = vand.u32 %v136, 4294901760
    %193 = vmatprep.subr.mxu0 %v192
    %v194 = vand.u32 %v135, 4294901760
    %195 = vmatpush1.msra.mxu0 %v194
    %v196 = vand.u32 %v140, 4294901760
    %197 = vmatprep.subr.mxu0 %v196
    %v198 = vand.u32 %v139, 4294901760
    %199 = vmatpush1.msra.mxu0 %v198
    %v200 = vand.u32 %v144, 4294901760
    %201 = vmatprep.subr.mxu0 %v200
    %v202 = vand.u32 %v143, 4294901760
    %203 = vmatpush1.msra.mxu0 %v202
    %204 = vmatprep.subr.mxu0 0.0
    %205 = vmatpush1.msra.mxu0 0.0
    %206 = vmatprep.subr.mxu0 0.0
    %207 = vmatpush1.msra.mxu0 0.0
    %208 = vmatprep.subr.mxu0 0.0
    %209 = vmatpush1.msra.mxu0 0.0
    %210 = vmatprep.subr.mxu0 0.0
    %211 = vmatpush1.msra.mxu0 0.0
    %212 = vmatprep.subr.mxu0 0.0
    %213 = vmatpush1.msra.mxu0 0.0
    %214 = vmatprep.subr.mxu0 0.0
    %215 = vmatpush1.msra.mxu0 0.0
    %216 = vmatprep.subr.mxu0 0.0
    %217 = vmatpush1.msra.mxu0 0.0
    %218 = vmatprep.subr.mxu0 0.0
    %219 = vmatpush1.msra.mxu0 0.0
    %220 = vmatprep.subr.mxu0 0.0
    %221 = vmatpush1.msra.mxu0 0.0
    %222 = vmatprep.subr.mxu0 0.0
    %223 = vmatpush1.msra.mxu0 0.0
    %224 = vmatprep.subr.mxu0 0.0
    %225 = vmatpush1.msra.mxu0 0.0
    %226 = vmatprep.subr.mxu0 0.0
    %227 = vmatpush1.msra.mxu0 0.0
    %228 = vmatprep.subr.mxu0 0.0
    %229 = vmatpush1.msra.mxu0 0.0
    %230 = vmatprep.subr.mxu0 0.0
    %231 = vmatpush1.msra.mxu0 0.0
    %232 = vmatprep.subr.mxu0 0.0
    %233 = vmatpush1.msra.mxu0 0.0
    %234 = vmatprep.subr.mxu0 0.0
    %235 = vmatpush1.msra.mxu0 0.0
    %236 = vmatprep.subr.mxu0 0.0
    %237 = vmatpush1.msra.mxu0 0.0
    %238 = vmatprep.subr.mxu0 0.0
    %239 = vmatpush1.msra.mxu0 0.0
    %240 = vmatprep.subr.mxu0 0.0
    %241 = vmatpush1.msra.mxu0 0.0
    %242 = vmatprep.subr.mxu0 0.0
    %243 = vmatpush1.msra.mxu0 0.0
    %244 = vmatprep.subr.mxu0 0.0
    %245 = vmatpush1.msra.mxu0 0.0
    %246 = vmatprep.subr.mxu0 0.0
    %247 = vmatpush1.msra.mxu0 0.0
    %248 = vmatprep.subr.mxu0 0.0
    %249 = vmatpush1.msra.mxu0 0.0
    %250 = vmatprep.subr.mxu0 0.0
    %251 = vmatpush1.msra.mxu0 0.0
    %252 = vmatprep.subr.mxu0 0.0
    %253 = vmatpush1.msra.mxu0 0.0
    %254 = vmatprep.subr.mxu0 0.0
    %255 = vmatpush1.msra.mxu0 0.0
    %256 = vmatprep.subr.mxu0 0.0
    %257 = vmatpush1.msra.mxu0 0.0
    %258 = vmatprep.subr.mxu0 0.0
    %259 = vmatpush1.msra.mxu0 0.0
    %260 = vmatprep.mubr.f32.mxu0 0.0
    %v261 = vand.u32 %v177, 4294901760
    %v262 = vsub.f32 %v177, %v261
    %v263 = vand.u32 %v262, 4294901760
    %v264 = vsub.f32 %v262, %v263
    %v265 = vand.u32 %v264, 4294901760
    %266 = vmatmul.mubr.f32.gmra.mrb[0].mxu0 %v265
    %v267 = vpop.f32.mrb[0].mxu0
    %v268 = vadd.f32 %v158, %v267
    %v269 = vpop.f32.mrb[0].mxu0
    %v270 = vadd.f32 %v158, %v269
    %271 = vmatprep.mubr.f32.mxu0 0.0
    %v272 = vand.u32 %v180, 4294901760
    %v273 = vsub.f32 %v180, %v272
    %v274 = vand.u32 %v273, 4294901760
    %v275 = vsub.f32 %v273, %v274
    %v276 = vand.u32 %v275, 4294901760
    %277 = vmatmul.mubr.f32.gmra.mrb[0].mxu0 %v276
    %v278 = vpop.f32.mrb[0].mxu0
    %v279 = vadd.f32 %v163, %v278
    %v280 = vpop.f32.mrb[0].mxu0
    %v281 = vadd.f32 %v163, %v280
    %282 = vmatprep.mubr.f32.mxu0 0.0
    %v283 = vand.u32 %v183, 4294901760
    %v284 = vsub.f32 %v183, %v283
    %v285 = vand.u32 %v284, 4294901760
    %v286 = vsub.f32 %v284, %v285
    %v287 = vand.u32 %v286, 4294901760
    %288 = vmatmul.mubr.f32.gmra.mrb[0].mxu0 %v287
    %v289 = vpop.f32.mrb[0].mxu0
    %v290 = vadd.f32 %v168, %v289
    %v291 = vpop.f32.mrb[0].mxu0
    %v292 = vadd.f32 %v168, %v291
    %293 = vmatprep.mubr.f32.mxu0 0.0
    %v294 = vand.u32 %v186, 4294901760
    %v295 = vsub.f32 %v186, %v294
    %v296 = vand.u32 %v295, 4294901760
    %v297 = vsub.f32 %v295, %v296
    %v298 = vand.u32 %v297, 4294901760
    %299 = vmatmul.mubr.f32.gmra.mrb[0].mxu0 %v298
    %v300 = vpop.f32.mrb[0].mxu0
    %v301 = vadd.f32 %v173, %v300
    %v302 = vpop.f32.mrb[0].mxu0
    %v303 = vadd.f32 %v173, %v302
    %304 = vdwg.mxu0
    %v305 = vand.u32 %v132, 4294901760
    %v306 = vsub.f32 %v132, %v305
    %v307 = vand.u32 %v306, 4294901760
    %v308 = vsub.f32 %v306, %v307
    %v309 = vand.u32 %v308, 4294901760
    %310 = vmatprep.subr.mxu0 %v309
    %v311 = vand.u32 %v131, 4294901760
    %v312 = vsub.f32 %v131, %v311
    %v313 = vand.u32 %v312, 4294901760
    %v314 = vsub.f32 %v312, %v313
    %v315 = vand.u32 %v314, 4294901760
    %316 = vmatpush1.msra.mxu0 %v315
    %v317 = vand.u32 %v136, 4294901760
    %v318 = vsub.f32 %v136, %v317
    %v319 = vand.u32 %v318, 4294901760
    %v320 = vsub.f32 %v318, %v319
    %v321 = vand.u32 %v320, 4294901760
    %322 = vmatprep.subr.mxu0 %v321
    %v323 = vand.u32 %v135, 4294901760
    %v324 = vsub.f32 %v135, %v323
    %v325 = vand.u32 %v324, 4294901760
    %v326 = vsub.f32 %v324, %v325
    %v327 = vand.u32 %v326, 4294901760
    %328 = vmatpush1.msra.mxu0 %v327
    %v329 = vand.u32 %v140, 4294901760
    %v330 = vsub.f32 %v140, %v329
    %v331 = vand.u32 %v330, 4294901760
    %v332 = vsub.f32 %v330, %v331
    %v333 = vand.u32 %v332, 4294901760
    %334 = vmatprep.subr.mxu0 %v333
    %v335 = vand.u32 %v139, 4294901760
    %v336 = vsub.f32 %v139, %v335
    %v337 = vand.u32 %v336, 4294901760
    %v338 = vsub.f32 %v336, %v337
    %v339 = vand.u32 %v338, 4294901760
    %340 = vmatpush1.msra.mxu0 %v339
    %v341 = vand.u32 %v144, 4294901760
    %v342 = vsub.f32 %v144, %v341
    %v343 = vand.u32 %v342, 4294901760
    %v344 = vsub.f32 %v342, %v343
    %v345 = vand.u32 %v344, 4294901760
    %346 = vmatprep.subr.mxu0 %v345
    %v347 = vand.u32 %v143, 4294901760
    %v348 = vsub.f32 %v143, %v347
    %v349 = vand.u32 %v348, 4294901760
    %v350 = vsub.f32 %v348, %v349
    %v351 = vand.u32 %v350, 4294901760
    %352 = vmatpush1.msra.mxu0 %v351
    %353 = vmatprep.subr.mxu0 0.0
    %354 = vmatpush1.msra.mxu0 0.0
    %355 = vmatprep.subr.mxu0 0.0
    %356 = vmatpush1.msra.mxu0 0.0
    %357 = vmatprep.subr.mxu0 0.0
    %358 = vmatpush1.msra.mxu0 0.0
    %359 = vmatprep.subr.mxu0 0.0
    %360 = vmatpush1.msra.mxu0 0.0
    %361 = vmatprep.subr.mxu0 0.0
    %362 = vmatpush1.msra.mxu0 0.0
    %363 = vmatprep.subr.mxu0 0.0
    %364 = vmatpush1.msra.mxu0 0.0
    %365 = vmatprep.subr.mxu0 0.0
    %366 = vmatpush1.msra.mxu0 0.0
    %367 = vmatprep.subr.mxu0 0.0
    %368 = vmatpush1.msra.mxu0 0.0
    %369 = vmatprep.subr.mxu0 0.0
    %370 = vmatpush1.msra.mxu0 0.0
    %371 = vmatprep.subr.mxu0 0.0
    %372 = vmatpush1.msra.mxu0 0.0
    %373 = vmatprep.subr.mxu0 0.0
    %374 = vmatpush1.msra.mxu0 0.0
    %375 = vmatprep.subr.mxu0 0.0
    %376 = vmatpush1.msra.mxu0 0.0
    %377 = vmatprep.subr.mxu0 0.0
    %378 = vmatpush1.msra.mxu0 0.0
    %379 = vmatprep.subr.mxu0 0.0
    %380 = vmatpush1.msra.mxu0 0.0
    %381 = vmatprep.subr.mxu0 0.0
    %382 = vmatpush1.msra.mxu0 0.0
    %383 = vmatprep.subr.mxu0 0.0
    %384 = vmatpush1.msra.mxu0 0.0
    %385 = vmatprep.subr.mxu0 0.0
    %386 = vmatpush1.msra.mxu0 0.0
    %387 = vmatprep.subr.mxu0 0.0
    %388 = vmatpush1.msra.mxu0 0.0
    %389 = vmatprep.subr.mxu0 0.0
    %390 = vmatpush1.msra.mxu0 0.0
    %391 = vmatprep.subr.mxu0 0.0
    %392 = vmatpush1.msra.mxu0 0.0
    %393 = vmatprep.subr.mxu0 0.0
    %394 = vmatpush1.msra.mxu0 0.0
    %395 = vmatprep.subr.mxu0 0.0
    %396 = vmatpush1.msra.mxu0 0.0
    %397 = vmatprep.subr.mxu0 0.0
    %398 = vmatpush1.msra.mxu0 0.0
    %399 = vmatprep.subr.mxu0 0.0
    %400 = vmatpush1.msra.mxu0 0.0
    %401 = vmatprep.subr.mxu0 0.0
    %402 = vmatpush1.msra.mxu0 0.0
    %403 = vmatprep.subr.mxu0 0.0
    %404 = vmatpush1.msra.mxu0 0.0
    %405 = vmatprep.subr.mxu0 0.0
    %406 = vmatpush1.msra.mxu0 0.0
    %407 = vmatprep.subr.mxu0 0.0
    %408 = vmatpush1.msra.mxu0 0.0
    %409 = vmatprep.mubr.f32.mxu0 0.0
    %v410 = vand.u32 %v177, 4294901760
    %411 = vmatmul.mubr.f32.gmra.mrb[0].mxu0 %v410
    %v412 = vpop.f32.mrb[0].mxu0
    %v413 = vadd.f32 %v268, %v412
    %v414 = vpop.f32.mrb[0].mxu0
    %v415 = vadd.f32 %v270, %v414
    %416 = vmatprep.mubr.f32.mxu0 0.0
    %v417 = vand.u32 %v180, 4294901760
    %418 = vmatmul.mubr.f32.gmra.mrb[0].mxu0 %v417
    %v419 = vpop.f32.mrb[0].mxu0
    %v420 = vadd.f32 %v279, %v419
    %v421 = vpop.f32.mrb[0].mxu0
    %v422 = vadd.f32 %v281, %v421
    %423 = vmatprep.mubr.f32.mxu0 0.0
    %v424 = vand.u32 %v183, 4294901760
    %425 = vmatmul.mubr.f32.gmra.mrb[0].mxu0 %v424
    %v426 = vpop.f32.mrb[0].mxu0
    %v427 = vadd.f32 %v290, %v426
    %v428 = vpop.f32.mrb[0].mxu0
    %v429 = vadd.f32 %v292, %v428
    %430 = vmatprep.mubr.f32.mxu0 0.0
    %v431 = vand.u32 %v186, 4294901760
    %432 = vmatmul.mubr.f32.gmra.mrb[0].mxu0 %v431
    %v433 = vpop.f32.mrb[0].mxu0
    %v434 = vadd.f32 %v301, %v433
    %v435 = vpop.f32.mrb[0].mxu0
    %v436 = vadd.f32 %v303, %v435
    %437 = vdwg.mxu0
    %v438 = vand.u32 %v132, 4294901760
    %v439 = vsub.f32 %v132, %v438
    %440 = vmatprep.subr.mxu0 %v439
    %v441 = vand.u32 %v131, 4294901760
    %v442 = vsub.f32 %v131, %v441
    %443 = vmatpush1.msra.mxu0 %v442
    %v444 = vand.u32 %v136, 4294901760
    %v445 = vsub.f32 %v136, %v444
    %446 = vmatprep.subr.mxu0 %v445
    %v447 = vand.u32 %v135, 4294901760
    %v448 = vsub.f32 %v135, %v447
    %449 = vmatpush1.msra.mxu0 %v448
    %v450 = vand.u32 %v140, 4294901760
    %v451 = vsub.f32 %v140, %v450
    %452 = vmatprep.subr.mxu0 %v451
    %v453 = vand.u32 %v139, 4294901760
    %v454 = vsub.f32 %v139, %v453
    %455 = vmatpush1.msra.mxu0 %v454
    %v456 = vand.u32 %v144, 4294901760
    %v457 = vsub.f32 %v144, %v456
    %458 = vmatprep.subr.mxu0 %v457
    %v459 = vand.u32 %v143, 4294901760
    %v460 = vsub.f32 %v143, %v459
    %461 = vmatpush1.msra.mxu0 %v460
    %462 = vmatprep.subr.mxu0 0.0
    %463 = vmatpush1.msra.mxu0 0.0
    %464 = vmatprep.subr.mxu0 0.0
    %465 = vmatpush1.msra.mxu0 0.0
    %466 = vmatprep.subr.mxu0 0.0
    %467 = vmatpush1.msra.mxu0 0.0
    %468 = vmatprep.subr.mxu0 0.0
    %469 = vmatpush1.msra.mxu0 0.0
    %470 = vmatprep.subr.mxu0 0.0
    %471 = vmatpush1.msra.mxu0 0.0
    %472 = vmatprep.subr.mxu0 0.0
    %473 = vmatpush1.msra.mxu0 0.0
    %474 = vmatprep.subr.mxu0 0.0
    %475 = vmatpush1.msra.mxu0 0.0
    %476 = vmatprep.subr.mxu0 0.0
    %477 = vmatpush1.msra.mxu0 0.0
    %478 = vmatprep.subr.mxu0 0.0
    %479 = vmatpush1.msra.mxu0 0.0
    %480 = vmatprep.subr.mxu0 0.0
    %481 = vmatpush1.msra.mxu0 0.0
    %482 = vmatprep.subr.mxu0 0.0
    %483 = vmatpush1.msra.mxu0 0.0
    %484 = vmatprep.subr.mxu0 0.0
    %485 = vmatpush1.msra.mxu0 0.0
    %486 = vmatprep.subr.mxu0 0.0
    %487 = vmatpush1.msra.mxu0 0.0
    %488 = vmatprep.subr.mxu0 0.0
    %489 = vmatpush1.msra.mxu0 0.0
    %490 = vmatprep.subr.mxu0 0.0
    %491 = vmatpush1.msra.mxu0 0.0
    %492 = vmatprep.subr.mxu0 0.0
    %493 = vmatpush1.msra.mxu0 0.0
    %494 = vmatprep.subr.mxu0 0.0
    %495 = vmatpush1.msra.mxu0 0.0
    %496 = vmatprep.subr.mxu0 0.0
    %497 = vmatpush1.msra.mxu0 0.0
    %498 = vmatprep.subr.mxu0 0.0
    %499 = vmatpush1.msra.mxu0 0.0
    %500 = vmatprep.subr.mxu0 0.0
    %501 = vmatpush1.msra.mxu0 0.0
    %502 = vmatprep.subr.mxu0 0.0
    %503 = vmatpush1.msra.mxu0 0.0
    %504 = vmatprep.subr.mxu0 0.0
    %505 = vmatpush1.msra.mxu0 0.0
    %506 = vmatprep.subr.mxu0 0.0
    %507 = vmatpush1.msra.mxu0 0.0
    %508 = vmatprep.subr.mxu0 0.0
    %509 = vmatpush1.msra.mxu0 0.0
    %510 = vmatprep.subr.mxu0 0.0
    %511 = vmatpush1.msra.mxu0 0.0
    %512 = vmatprep.subr.mxu0 0.0
    %513 = vmatpush1.msra.mxu0 0.0
    %514 = vmatprep.subr.mxu0 0.0
    %515 = vmatpush1.msra.mxu0 0.0
    %516 = vmatprep.subr.mxu0 0.0
    %517 = vmatpush1.msra.mxu0 0.0
    %518 = vmatprep.mubr.f32.mxu0 0.0
    %v519 = vand.u32 %v177, 4294901760
    %v520 = vsub.f32 %v177, %v519
    %521 = vmatmul.mubr.f32.gmra.mrb[0].mxu0 %v520
    %v522 = vpop.f32.mrb[0].mxu0
    %v523 = vadd.f32 %v413, %v522
    %v524 = vpop.f32.mrb[0].mxu0
    %v525 = vadd.f32 %v415, %v524
    %526 = vmatprep.mubr.f32.mxu0 0.0
    %v527 = vand.u32 %v180, 4294901760
    %v528 = vsub.f32 %v180, %v527
    %529 = vmatmul.mubr.f32.gmra.mrb[0].mxu0 %v528
    %v530 = vpop.f32.mrb[0].mxu0
    %v531 = vadd.f32 %v420, %v530
    %v532 = vpop.f32.mrb[0].mxu0
    %v533 = vadd.f32 %v422, %v532
    %534 = vmatprep.mubr.f32.mxu0 0.0
    %v535 = vand.u32 %v183, 4294901760
    %v536 = vsub.f32 %v183, %v535
    %537 = vmatmul.mubr.f32.gmra.mrb[0].mxu0 %v536
    %v538 = vpop.f32.mrb[0].mxu0
    %v539 = vadd.f32 %v427, %v538
    %v540 = vpop.f32.mrb[0].mxu0
    %v541 = vadd.f32 %v429, %v540
    %542 = vmatprep.mubr.f32.mxu0 0.0
    %v543 = vand.u32 %v186, 4294901760
    %v544 = vsub.f32 %v186, %v543
    %545 = vmatmul.mubr.f32.gmra.mrb[0].mxu0 %v544
    %v546 = vpop.f32.mrb[0].mxu0
    %v547 = vadd.f32 %v434, %v546
    %v548 = vpop.f32.mrb[0].mxu0
    %v549 = vadd.f32 %v436, %v548
    %550 = vdwg.mxu0
    %v551 = vand.u32 %v132, 4294901760
    %552 = vmatprep.subr.mxu0 %v551
    %v553 = vand.u32 %v131, 4294901760
    %554 = vmatpush1.msra.mxu0 %v553
    %v555 = vand.u32 %v136, 4294901760
    %556 = vmatprep.subr.mxu0 %v555
    %v557 = vand.u32 %v135, 4294901760
    %558 = vmatpush1.msra.mxu0 %v557
    %v559 = vand.u32 %v140, 4294901760
    %560 = vmatprep.subr.mxu0 %v559
    %v561 = vand.u32 %v139, 4294901760
    %562 = vmatpush1.msra.mxu0 %v561
    %v563 = vand.u32 %v144, 4294901760
    %564 = vmatprep.subr.mxu0 %v563
    %v565 = vand.u32 %v143, 4294901760
    %566 = vmatpush1.msra.mxu0 %v565
    %567 = vmatprep.subr.mxu0 0.0
    %568 = vmatpush1.msra.mxu0 0.0
    %569 = vmatprep.subr.mxu0 0.0
    %570 = vmatpush1.msra.mxu0 0.0
    %571 = vmatprep.subr.mxu0 0.0
    %572 = vmatpush1.msra.mxu0 0.0
    %573 = vmatprep.subr.mxu0 0.0
    %574 = vmatpush1.msra.mxu0 0.0
    %575 = vmatprep.subr.mxu0 0.0
    %576 = vmatpush1.msra.mxu0 0.0
    %577 = vmatprep.subr.mxu0 0.0
    %578 = vmatpush1.msra.mxu0 0.0
    %579 = vmatprep.subr.mxu0 0.0
    %580 = vmatpush1.msra.mxu0 0.0
    %581 = vmatprep.subr.mxu0 0.0
    %582 = vmatpush1.msra.mxu0 0.0
    %583 = vmatprep.subr.mxu0 0.0
    %584 = vmatpush1.msra.mxu0 0.0
    %585 = vmatprep.subr.mxu0 0.0
    %586 = vmatpush1.msra.mxu0 0.0
    %587 = vmatprep.subr.mxu0 0.0
    %588 = vmatpush1.msra.mxu0 0.0
    %589 = vmatprep.subr.mxu0 0.0
    %590 = vmatpush1.msra.mxu0 0.0
    %591 = vmatprep.subr.mxu0 0.0
    %592 = vmatpush1.msra.mxu0 0.0
    %593 = vmatprep.subr.mxu0 0.0
    %594 = vmatpush1.msra.mxu0 0.0
    %595 = vmatprep.subr.mxu0 0.0
    %596 = vmatpush1.msra.mxu0 0.0
    %597 = vmatprep.subr.mxu0 0.0
    %598 = vmatpush1.msra.mxu0 0.0
    %599 = vmatprep.subr.mxu0 0.0
    %600 = vmatpush1.msra.mxu0 0.0
    %601 = vmatprep.subr.mxu0 0.0
    %602 = vmatpush1.msra.mxu0 0.0
    %603 = vmatprep.subr.mxu0 0.0
    %604 = vmatpush1.msra.mxu0 0.0
    %605 = vmatprep.subr.mxu0 0.0
    %606 = vmatpush1.msra.mxu0 0.0
    %607 = vmatprep.subr.mxu0 0.0
    %608 = vmatpush1.msra.mxu0 0.0
    %609 = vmatprep.subr.mxu0 0.0
    %610 = vmatpush1.msra.mxu0 0.0
    %611 = vmatprep.subr.mxu0 0.0
    %612 = vmatpush1.msra.mxu0 0.0
    %613 = vmatprep.subr.mxu0 0.0
    %614 = vmatpush1.msra.mxu0 0.0
    %615 = vmatprep.subr.mxu0 0.0
    %616 = vmatpush1.msra.mxu0 0.0
    %617 = vmatprep.subr.mxu0 0.0
    %618 = vmatpush1.msra.mxu0 0.0
    %619 = vmatprep.subr.mxu0 0.0
    %620 = vmatpush1.msra.mxu0 0.0
    %621 = vmatprep.subr.mxu0 0.0
    %622 = vmatpush1.msra.mxu0 0.0
    %623 = vmatprep.mubr.f32.mxu0 0.0
    %v624 = vand.u32 %v177, 4294901760
    %v625 = vsub.f32 %v177, %v624
    %v626 = vand.u32 %v625, 4294901760
    %627 = vmatmul.mubr.f32.gmra.mrb[0].mxu0 %v626
    %v628 = vpop.f32.mrb[0].mxu0
    %v629 = vadd.f32 %v523, %v628
    %v630 = vpop.f32.mrb[0].mxu0
    %v631 = vadd.f32 %v525, %v630
    %632 = vmatprep.mubr.f32.mxu0 0.0
    %v633 = vand.u32 %v180, 4294901760
    %v634 = vsub.f32 %v180, %v633
    %v635 = vand.u32 %v634, 4294901760
    %636 = vmatmul.mubr.f32.gmra.mrb[0].mxu0 %v635
    %v637 = vpop.f32.mrb[0].mxu0
    %v638 = vadd.f32 %v531, %v637
    %v639 = vpop.f32.mrb[0].mxu0
    %v640 = vadd.f32 %v533, %v639
    %641 = vmatprep.mubr.f32.mxu0 0.0
    %v642 = vand.u32 %v183, 4294901760
    %v643 = vsub.f32 %v183, %v642
    %v644 = vand.u32 %v643, 4294901760
    %645 = vmatmul.mubr.f32.gmra.mrb[0].mxu0 %v644
    %v646 = vpop.f32.mrb[0].mxu0
    %v647 = vadd.f32 %v539, %v646
    %v648 = vpop.f32.mrb[0].mxu0
    %v649 = vadd.f32 %v541, %v648
    %650 = vmatprep.mubr.f32.mxu0 0.0
    %v651 = vand.u32 %v186, 4294901760
    %v652 = vsub.f32 %v186, %v651
    %v653 = vand.u32 %v652, 4294901760
    %654 = vmatmul.mubr.f32.gmra.mrb[0].mxu0 %v653
    %v655 = vpop.f32.mrb[0].mxu0
    %v656 = vadd.f32 %v547, %v655
    %v657 = vpop.f32.mrb[0].mxu0
    %v658 = vadd.f32 %v549, %v657
    %659 = vdwg.mxu0
    %v660 = vand.u32 %v132, 4294901760
    %v661 = vsub.f32 %v132, %v660
    %v662 = vand.u32 %v661, 4294901760
    %663 = vmatprep.subr.mxu0 %v662
    %v664 = vand.u32 %v131, 4294901760
    %v665 = vsub.f32 %v131, %v664
    %v666 = vand.u32 %v665, 4294901760
    %667 = vmatpush1.msra.mxu0 %v666
    %v668 = vand.u32 %v136, 4294901760
    %v669 = vsub.f32 %v136, %v668
    %v670 = vand.u32 %v669, 4294901760
    %671 = vmatprep.subr.mxu0 %v670
    %v672 = vand.u32 %v135, 4294901760
    %v673 = vsub.f32 %v135, %v672
    %v674 = vand.u32 %v673, 4294901760
    %675 = vmatpush1.msra.mxu0 %v674
    %v676 = vand.u32 %v140, 4294901760
    %v677 = vsub.f32 %v140, %v676
    %v678 = vand.u32 %v677, 4294901760
    %679 = vmatprep.subr.mxu0 %v678
    %v680 = vand.u32 %v139, 4294901760
    %v681 = vsub.f32 %v139, %v680
    %v682 = vand.u32 %v681, 4294901760
    %683 = vmatpush1.msra.mxu0 %v682
    %v684 = vand.u32 %v144, 4294901760
    %v685 = vsub.f32 %v144, %v684
    %v686 = vand.u32 %v685, 4294901760
    %687 = vmatprep.subr.mxu0 %v686
    %v688 = vand.u32 %v143, 4294901760
    %v689 = vsub.f32 %v143, %v688
    %v690 = vand.u32 %v689, 4294901760
    %691 = vmatpush1.msra.mxu0 %v690
    %692 = vmatprep.subr.mxu0 0.0
    %693 = vmatpush1.msra.mxu0 0.0
    %694 = vmatprep.subr.mxu0 0.0
    %695 = vmatpush1.msra.mxu0 0.0
    %696 = vmatprep.subr.mxu0 0.0
    %697 = vmatpush1.msra.mxu0 0.0
    %698 = vmatprep.subr.mxu0 0.0
    %699 = vmatpush1.msra.mxu0 0.0
    %700 = vmatprep.subr.mxu0 0.0
    %701 = vmatpush1.msra.mxu0 0.0
    %702 = vmatprep.subr.mxu0 0.0
    %703 = vmatpush1.msra.mxu0 0.0
    %704 = vmatprep.subr.mxu0 0.0
    %705 = vmatpush1.msra.mxu0 0.0
    %706 = vmatprep.subr.mxu0 0.0
    %707 = vmatpush1.msra.mxu0 0.0
    %708 = vmatprep.subr.mxu0 0.0
    %709 = vmatpush1.msra.mxu0 0.0
    %710 = vmatprep.subr.mxu0 0.0
    %711 = vmatpush1.msra.mxu0 0.0
    %712 = vmatprep.subr.mxu0 0.0
    %713 = vmatpush1.msra.mxu0 0.0
    %714 = vmatprep.subr.mxu0 0.0
    %715 = vmatpush1.msra.mxu0 0.0
    %716 = vmatprep.subr.mxu0 0.0
    %717 = vmatpush1.msra.mxu0 0.0
    %718 = vmatprep.subr.mxu0 0.0
    %719 = vmatpush1.msra.mxu0 0.0
    %720 = vmatprep.subr.mxu0 0.0
    %721 = vmatpush1.msra.mxu0 0.0
    %722 = vmatprep.subr.mxu0 0.0
    %723 = vmatpush1.msra.mxu0 0.0
    %724 = vmatprep.subr.mxu0 0.0
    %725 = vmatpush1.msra.mxu0 0.0
    %726 = vmatprep.subr.mxu0 0.0
    %727 = vmatpush1.msra.mxu0 0.0
    %728 = vmatprep.subr.mxu0 0.0
    %729 = vmatpush1.msra.mxu0 0.0
    %730 = vmatprep.subr.mxu0 0.0
    %731 = vmatpush1.msra.mxu0 0.0
    %732 = vmatprep.subr.mxu0 0.0
    %733 = vmatpush1.msra.mxu0 0.0
    %734 = vmatprep.subr.mxu0 0.0
    %735 = vmatpush1.msra.mxu0 0.0
    %736 = vmatprep.subr.mxu0 0.0
    %737 = vmatpush1.msra.mxu0 0.0
    %738 = vmatprep.subr.mxu0 0.0
    %739 = vmatpush1.msra.mxu0 0.0
    %740 = vmatprep.subr.mxu0 0.0
    %741 = vmatpush1.msra.mxu0 0.0
    %742 = vmatprep.subr.mxu0 0.0
    %743 = vmatpush1.msra.mxu0 0.0
    %744 = vmatprep.subr.mxu0 0.0
    %745 = vmatpush1.msra.mxu0 0.0
    %746 = vmatprep.subr.mxu0 0.0
    %747 = vmatpush1.msra.mxu0 0.0
    %748 = vmatprep.mubr.f32.mxu0 0.0
    %v749 = vand.u32 %v177, 4294901760
    %750 = vmatmul.mubr.f32.gmra.mrb[0].mxu0 %v749
    %v751 = vpop.f32.mrb[0].mxu0
    %v752 = vadd.f32 %v629, %v751
    %v753 = vpop.f32.mrb[0].mxu0
    %v754 = vadd.f32 %v631, %v753
    %755 = vmatprep.mubr.f32.mxu0 0.0
    %v756 = vand.u32 %v180, 4294901760
    %757 = vmatmul.mubr.f32.gmra.mrb[0].mxu0 %v756
    %v758 = vpop.f32.mrb[0].mxu0
    %v759 = vadd.f32 %v638, %v758
    %v760 = vpop.f32.mrb[0].mxu0
    %v761 = vadd.f32 %v640, %v760
    %762 = vmatprep.mubr.f32.mxu0 0.0
    %v763 = vand.u32 %v183, 4294901760
    %764 = vmatmul.mubr.f32.gmra.mrb[0].mxu0 %v763
    %v765 = vpop.f32.mrb[0].mxu0
    %v766 = vadd.f32 %v647, %v765
    %v767 = vpop.f32.mrb[0].mxu0
    %v768 = vadd.f32 %v649, %v767
    %769 = vmatprep.mubr.f32.mxu0 0.0
    %v770 = vand.u32 %v186, 4294901760
    %771 = vmatmul.mubr.f32.gmra.mrb[0].mxu0 %v770
    %v772 = vpop.f32.mrb[0].mxu0
    %v773 = vadd.f32 %v656, %v772
    %v774 = vpop.f32.mrb[0].mxu0
    %v775 = vadd.f32 %v658, %v774
    %776 = vdwg.mxu0
    %v777 = vand.u32 %v132, 4294901760
    %778 = vmatprep.subr.mxu0 %v777
    %v779 = vand.u32 %v131, 4294901760
    %780 = vmatpush1.msra.mxu0 %v779
    %v781 = vand.u32 %v136, 4294901760
    %782 = vmatprep.subr.mxu0 %v781
    %v783 = vand.u32 %v135, 4294901760
    %784 = vmatpush1.msra.mxu0 %v783
    %v785 = vand.u32 %v140, 4294901760
    %786 = vmatprep.subr.mxu0 %v785
    %v787 = vand.u32 %v139, 4294901760
    %788 = vmatpush1.msra.mxu0 %v787
    %v789 = vand.u32 %v144, 4294901760
    %790 = vmatprep.subr.mxu0 %v789
    %v791 = vand.u32 %v143, 4294901760
    %792 = vmatpush1.msra.mxu0 %v791
    %793 = vmatprep.subr.mxu0 0.0
    %794 = vmatpush1.msra.mxu0 0.0
    %795 = vmatprep.subr.mxu0 0.0
    %796 = vmatpush1.msra.mxu0 0.0
    %797 = vmatprep.subr.mxu0 0.0
    %798 = vmatpush1.msra.mxu0 0.0
    %799 = vmatprep.subr.mxu0 0.0
    %800 = vmatpush1.msra.mxu0 0.0
    %801 = vmatprep.subr.mxu0 0.0
    %802 = vmatpush1.msra.mxu0 0.0
    %803 = vmatprep.subr.mxu0 0.0
    %804 = vmatpush1.msra.mxu0 0.0
    %805 = vmatprep.subr.mxu0 0.0
    %806 = vmatpush1.msra.mxu0 0.0
    %807 = vmatprep.subr.mxu0 0.0
    %808 = vmatpush1.msra.mxu0 0.0
    %809 = vmatprep.subr.mxu0 0.0
    %810 = vmatpush1.msra.mxu0 0.0
    %811 = vmatprep.subr.mxu0 0.0
    %812 = vmatpush1.msra.mxu0 0.0
    %813 = vmatprep.subr.mxu0 0.0
    %814 = vmatpush1.msra.mxu0 0.0
    %815 = vmatprep.subr.mxu0 0.0
    %816 = vmatpush1.msra.mxu0 0.0
    %817 = vmatprep.subr.mxu0 0.0
    %818 = vmatpush1.msra.mxu0 0.0
    %819 = vmatprep.subr.mxu0 0.0
    %820 = vmatpush1.msra.mxu0 0.0
    %821 = vmatprep.subr.mxu0 0.0
    %822 = vmatpush1.msra.mxu0 0.0
    %823 = vmatprep.subr.mxu0 0.0
    %824 = vmatpush1.msra.mxu0 0.0
    %825 = vmatprep.subr.mxu0 0.0
    %826 = vmatpush1.msra.mxu0 0.0
    %827 = vmatprep.subr.mxu0 0.0
    %828 = vmatpush1.msra.mxu0 0.0
    %829 = vmatprep.subr.mxu0 0.0
    %830 = vmatpush1.msra.mxu0 0.0
    %831 = vmatprep.subr.mxu0 0.0
    %832 = vmatpush1.msra.mxu0 0.0
    %833 = vmatprep.subr.mxu0 0.0
    %834 = vmatpush1.msra.mxu0 0.0
    %835 = vmatprep.subr.mxu0 0.0
    %836 = vmatpush1.msra.mxu0 0.0
    %837 = vmatprep.subr.mxu0 0.0
    %838 = vmatpush1.msra.mxu0 0.0
    %839 = vmatprep.subr.mxu0 0.0
    %840 = vmatpush1.msra.mxu0 0.0
    %841 = vmatprep.subr.mxu0 0.0
    %842 = vmatpush1.msra.mxu0 0.0
    %843 = vmatprep.subr.mxu0 0.0
    %844 = vmatpush1.msra.mxu0 0.0
    %845 = vmatprep.subr.mxu0 0.0
    %846 = vmatpush1.msra.mxu0 0.0
    %847 = vmatprep.subr.mxu0 0.0
    %848 = vmatpush1.msra.mxu0 0.0
    %849 = vmatprep.mubr.f32.mxu0 0.0
    %v850 = vand.u32 %v177, 4294901760
    %851 = vmatmul.mubr.f32.gmra.mrb[0].mxu0 %v850
    %v852 = vpop.f32.mrb[0].mxu0
    %v853 = vadd.f32 %v752, %v852
    %v854 = vpop.f32.mrb[0].mxu0
    %v855 = vadd.f32 %v754, %v854
    %856 = vmatprep.mubr.f32.mxu0 0.0
    %v857 = vand.u32 %v180, 4294901760
    %858 = vmatmul.mubr.f32.gmra.mrb[0].mxu0 %v857
    %v859 = vpop.f32.mrb[0].mxu0
    %v860 = vadd.f32 %v759, %v859
    %v861 = vpop.f32.mrb[0].mxu0
    %v862 = vadd.f32 %v761, %v861
    %863 = vmatprep.mubr.f32.mxu0 0.0
    %v864 = vand.u32 %v183, 4294901760
    %865 = vmatmul.mubr.f32.gmra.mrb[0].mxu0 %v864
    %v866 = vpop.f32.mrb[0].mxu0
    %v867 = vadd.f32 %v766, %v866
    %v868 = vpop.f32.mrb[0].mxu0
    %v869 = vadd.f32 %v768, %v868
    %870 = vmatprep.mubr.f32.mxu0 0.0
    %v871 = vand.u32 %v186, 4294901760
    %872 = vmatmul.mubr.f32.gmra.mrb[0].mxu0 %v871
    %v873 = vpop.f32.mrb[0].mxu0
    %v874 = vadd.f32 %v773, %v873
    %v875 = vpop.f32.mrb[0].mxu0
    %v876 = vadd.f32 %v775, %v875
    %877 = vdwg.mxu0
    %v878 = vand.u32 %v134, 4294901760
    %879 = vmatprep.subr.mxu0 %v878
    %v880 = vand.u32 %v133, 4294901760
    %881 = vmatpush1.msra.mxu0 %v880
    %v882 = vand.u32 %v138, 4294901760
    %883 = vmatprep.subr.mxu0 %v882
    %v884 = vand.u32 %v137, 4294901760
    %885 = vmatpush1.msra.mxu0 %v884
    %v886 = vand.u32 %v142, 4294901760
    %887 = vmatprep.subr.mxu0 %v886
    %v888 = vand.u32 %v141, 4294901760
    %889 = vmatpush1.msra.mxu0 %v888
    %v890 = vand.u32 %v146, 4294901760
    %891 = vmatprep.subr.mxu0 %v890
    %v892 = vand.u32 %v145, 4294901760
    %893 = vmatpush1.msra.mxu0 %v892
    %894 = vmatprep.subr.mxu0 0.0
    %895 = vmatpush1.msra.mxu0 0.0
    %896 = vmatprep.subr.mxu0 0.0
    %897 = vmatpush1.msra.mxu0 0.0
    %898 = vmatprep.subr.mxu0 0.0
    %899 = vmatpush1.msra.mxu0 0.0
    %900 = vmatprep.subr.mxu0 0.0
    %901 = vmatpush1.msra.mxu0 0.0
    %902 = vmatprep.subr.mxu0 0.0
    %903 = vmatpush1.msra.mxu0 0.0
    %904 = vmatprep.subr.mxu0 0.0
    %905 = vmatpush1.msra.mxu0 0.0
    %906 = vmatprep.subr.mxu0 0.0
    %907 = vmatpush1.msra.mxu0 0.0
    %908 = vmatprep.subr.mxu0 0.0
    %909 = vmatpush1.msra.mxu0 0.0
    %910 = vmatprep.subr.mxu0 0.0
    %911 = vmatpush1.msra.mxu0 0.0
    %912 = vmatprep.subr.mxu0 0.0
    %913 = vmatpush1.msra.mxu0 0.0
    %914 = vmatprep.subr.mxu0 0.0
    %915 = vmatpush1.msra.mxu0 0.0
    %916 = vmatprep.subr.mxu0 0.0
    %917 = vmatpush1.msra.mxu0 0.0
    %918 = vmatprep.subr.mxu0 0.0
    %919 = vmatpush1.msra.mxu0 0.0
    %920 = vmatprep.subr.mxu0 0.0
    %921 = vmatpush1.msra.mxu0 0.0
    %922 = vmatprep.subr.mxu0 0.0
    %923 = vmatpush1.msra.mxu0 0.0
    %924 = vmatprep.subr.mxu0 0.0
    %925 = vmatpush1.msra.mxu0 0.0
    %926 = vmatprep.subr.mxu0 0.0
    %927 = vmatpush1.msra.mxu0 0.0
    %928 = vmatprep.subr.mxu0 0.0
    %929 = vmatpush1.msra.mxu0 0.0
    %930 = vmatprep.subr.mxu0 0.0
    %931 = vmatpush1.msra.mxu0 0.0
    %932 = vmatprep.subr.mxu0 0.0
    %933 = vmatpush1.msra.mxu0 0.0
    %934 = vmatprep.subr.mxu0 0.0
    %935 = vmatpush1.msra.mxu0 0.0
    %936 = vmatprep.subr.mxu0 0.0
    %937 = vmatpush1.msra.mxu0 0.0
    %938 = vmatprep.subr.mxu0 0.0
    %939 = vmatpush1.msra.mxu0 0.0
    %940 = vmatprep.subr.mxu0 0.0
    %941 = vmatpush1.msra.mxu0 0.0
    %942 = vmatprep.subr.mxu0 0.0
    %943 = vmatpush1.msra.mxu0 0.0
    %944 = vmatprep.subr.mxu0 0.0
    %945 = vmatpush1.msra.mxu0 0.0
    %946 = vmatprep.subr.mxu0 0.0
    %947 = vmatpush1.msra.mxu0 0.0
    %948 = vmatprep.subr.mxu0 0.0
    %949 = vmatpush1.msra.mxu0 0.0
    %950 = vmatprep.mubr.f32.mxu0 0.0
    %v951 = vand.u32 %v177, 4294901760
    %v952 = vsub.f32 %v177, %v951
    %v953 = vand.u32 %v952, 4294901760
    %v954 = vsub.f32 %v952, %v953
    %v955 = vand.u32 %v954, 4294901760
    %956 = vmatmul.mubr.f32.gmra.mrb[0].mxu0 %v955
    %v957 = vpop.f32.mrb[0].mxu0
    %v958 = vadd.f32 %v158, %v957
    %v959 = vpop.f32.mrb[0].mxu0
    %v960 = vadd.f32 %v158, %v959
    %961 = vmatprep.mubr.f32.mxu0 0.0
    %v962 = vand.u32 %v180, 4294901760
    %v963 = vsub.f32 %v180, %v962
    %v964 = vand.u32 %v963, 4294901760
    %v965 = vsub.f32 %v963, %v964
    %v966 = vand.u32 %v965, 4294901760
    %967 = vmatmul.mubr.f32.gmra.mrb[0].mxu0 %v966
    %v968 = vpop.f32.mrb[0].mxu0
    %v969 = vadd.f32 %v163, %v968
    %v970 = vpop.f32.mrb[0].mxu0
    %v971 = vadd.f32 %v163, %v970
    %972 = vmatprep.mubr.f32.mxu0 0.0
    %v973 = vand.u32 %v183, 4294901760
    %v974 = vsub.f32 %v183, %v973
    %v975 = vand.u32 %v974, 4294901760
    %v976 = vsub.f32 %v974, %v975
    %v977 = vand.u32 %v976, 4294901760
    %978 = vmatmul.mubr.f32.gmra.mrb[0].mxu0 %v977
    %v979 = vpop.f32.mrb[0].mxu0
    %v980 = vadd.f32 %v168, %v979
    %v981 = vpop.f32.mrb[0].mxu0
    %v982 = vadd.f32 %v168, %v981
    %983 = vmatprep.mubr.f32.mxu0 0.0
    %v984 = vand.u32 %v186, 4294901760
    %v985 = vsub.f32 %v186, %v984
    %v986 = vand.u32 %v985, 4294901760
    %v987 = vsub.f32 %v985, %v986
    %v988 = vand.u32 %v987, 4294901760
    %989 = vmatmul.mubr.f32.gmra.mrb[0].mxu0 %v988
    %v990 = vpop.f32.mrb[0].mxu0
    %v991 = vadd.f32 %v173, %v990
    %v992 = vpop.f32.mrb[0].mxu0
    %v993 = vadd.f32 %v173, %v992
    %994 = vdwg.mxu0
    %v995 = vand.u32 %v134, 4294901760
    %v996 = vsub.f32 %v134, %v995
    %v997 = vand.u32 %v996, 4294901760
    %v998 = vsub.f32 %v996, %v997
    %v999 = vand.u32 %v998, 4294901760
    %1000 = vmatprep.subr.mxu0 %v999
    %v1001 = vand.u32 %v133, 4294901760
    %v1002 = vsub.f32 %v133, %v1001
    %v1003 = vand.u32 %v1002, 4294901760
    %v1004 = vsub.f32 %v1002, %v1003
    %v1005 = vand.u32 %v1004, 4294901760
    %1006 = vmatpush1.msra.mxu0 %v1005
    %v1007 = vand.u32 %v138, 4294901760
    %v1008 = vsub.f32 %v138, %v1007
    %v1009 = vand.u32 %v1008, 4294901760
    %v1010 = vsub.f32 %v1008, %v1009
    %v1011 = vand.u32 %v1010, 4294901760
    %1012 = vmatprep.subr.mxu0 %v1011
    %v1013 = vand.u32 %v137, 4294901760
    %v1014 = vsub.f32 %v137, %v1013
    %v1015 = vand.u32 %v1014, 4294901760
    %v1016 = vsub.f32 %v1014, %v1015
    %v1017 = vand.u32 %v1016, 4294901760
    %1018 = vmatpush1.msra.mxu0 %v1017
    %v1019 = vand.u32 %v142, 4294901760
    %v1020 = vsub.f32 %v142, %v1019
    %v1021 = vand.u32 %v1020, 4294901760
    %v1022 = vsub.f32 %v1020, %v1021
    %v1023 = vand.u32 %v1022, 4294901760
    %1024 = vmatprep.subr.mxu0 %v1023
    %v1025 = vand.u32 %v141, 4294901760
    %v1026 = vsub.f32 %v141, %v1025
    %v1027 = vand.u32 %v1026, 4294901760
    %v1028 = vsub.f32 %v1026, %v1027
    %v1029 = vand.u32 %v1028, 4294901760
    %1030 = vmatpush1.msra.mxu0 %v1029
    %v1031 = vand.u32 %v146, 4294901760
    %v1032 = vsub.f32 %v146, %v1031
    %v1033 = vand.u32 %v1032, 4294901760
    %v1034 = vsub.f32 %v1032, %v1033
    %v1035 = vand.u32 %v1034, 4294901760
    %1036 = vmatprep.subr.mxu0 %v1035
    %v1037 = vand.u32 %v145, 4294901760
    %v1038 = vsub.f32 %v145, %v1037
    %v1039 = vand.u32 %v1038, 4294901760
    %v1040 = vsub.f32 %v1038, %v1039
    %v1041 = vand.u32 %v1040, 4294901760
    %1042 = vmatpush1.msra.mxu0 %v1041
    %1043 = vmatprep.subr.mxu0 0.0
    %1044 = vmatpush1.msra.mxu0 0.0
    %1045 = vmatprep.subr.mxu0 0.0
    %1046 = vmatpush1.msra.mxu0 0.0
    %1047 = vmatprep.subr.mxu0 0.0
    %1048 = vmatpush1.msra.mxu0 0.0
    %1049 = vmatprep.subr.mxu0 0.0
    %1050 = vmatpush1.msra.mxu0 0.0
    %1051 = vmatprep.subr.mxu0 0.0
    %1052 = vmatpush1.msra.mxu0 0.0
    %1053 = vmatprep.subr.mxu0 0.0
    %1054 = vmatpush1.msra.mxu0 0.0
    %1055 = vmatprep.subr.mxu0 0.0
    %1056 = vmatpush1.msra.mxu0 0.0
    %1057 = vmatprep.subr.mxu0 0.0
    %1058 = vmatpush1.msra.mxu0 0.0
    %1059 = vmatprep.subr.mxu0 0.0
    %1060 = vmatpush1.msra.mxu0 0.0
    %1061 = vmatprep.subr.mxu0 0.0
    %1062 = vmatpush1.msra.mxu0 0.0
    %1063 = vmatprep.subr.mxu0 0.0
    %1064 = vmatpush1.msra.mxu0 0.0
    %1065 = vmatprep.subr.mxu0 0.0
    %1066 = vmatpush1.msra.mxu0 0.0
    %1067 = vmatprep.subr.mxu0 0.0
    %1068 = vmatpush1.msra.mxu0 0.0
    %1069 = vmatprep.subr.mxu0 0.0
    %1070 = vmatpush1.msra.mxu0 0.0
    %1071 = vmatprep.subr.mxu0 0.0
    %1072 = vmatpush1.msra.mxu0 0.0
    %1073 = vmatprep.subr.mxu0 0.0
    %1074 = vmatpush1.msra.mxu0 0.0
    %1075 = vmatprep.subr.mxu0 0.0
    %1076 = vmatpush1.msra.mxu0 0.0
    %1077 = vmatprep.subr.mxu0 0.0
    %1078 = vmatpush1.msra.mxu0 0.0
    %1079 = vmatprep.subr.mxu0 0.0
    %1080 = vmatpush1.msra.mxu0 0.0
    %1081 = vmatprep.subr.mxu0 0.0
    %1082 = vmatpush1.msra.mxu0 0.0
    %1083 = vmatprep.subr.mxu0 0.0
    %1084 = vmatpush1.msra.mxu0 0.0
    %1085 = vmatprep.subr.mxu0 0.0
    %1086 = vmatpush1.msra.mxu0 0.0
    %1087 = vmatprep.subr.mxu0 0.0
    %1088 = vmatpush1.msra.mxu0 0.0
    %1089 = vmatprep.subr.mxu0 0.0
    %1090 = vmatpush1.msra.mxu0 0.0
    %1091 = vmatprep.subr.mxu0 0.0
    %1092 = vmatpush1.msra.mxu0 0.0
    %1093 = vmatprep.subr.mxu0 0.0
    %1094 = vmatpush1.msra.mxu0 0.0
    %1095 = vmatprep.subr.mxu0 0.0
    %1096 = vmatpush1.msra.mxu0 0.0
    %1097 = vmatprep.subr.mxu0 0.0
    %1098 = vmatpush1.msra.mxu0 0.0
    %1099 = vmatprep.mubr.f32.mxu0 0.0
    %v1100 = vand.u32 %v177, 4294901760
    %1101 = vmatmul.mubr.f32.gmra.mrb[0].mxu0 %v1100
    %v1102 = vpop.f32.mrb[0].mxu0
    %v1103 = vadd.f32 %v958, %v1102
    %v1104 = vpop.f32.mrb[0].mxu0
    %v1105 = vadd.f32 %v960, %v1104
    %1106 = vmatprep.mubr.f32.mxu0 0.0
    %v1107 = vand.u32 %v180, 4294901760
    %1108 = vmatmul.mubr.f32.gmra.mrb[0].mxu0 %v1107
    %v1109 = vpop.f32.mrb[0].mxu0
    %v1110 = vadd.f32 %v969, %v1109
    %v1111 = vpop.f32.mrb[0].mxu0
    %v1112 = vadd.f32 %v971, %v1111
    %1113 = vmatprep.mubr.f32.mxu0 0.0
    %v1114 = vand.u32 %v183, 4294901760
    %1115 = vmatmul.mubr.f32.gmra.mrb[0].mxu0 %v1114
    %v1116 = vpop.f32.mrb[0].mxu0
    %v1117 = vadd.f32 %v980, %v1116
    %v1118 = vpop.f32.mrb[0].mxu0
    %v1119 = vadd.f32 %v982, %v1118
    %1120 = vmatprep.mubr.f32.mxu0 0.0
    %v1121 = vand.u32 %v186, 4294901760
    %1122 = vmatmul.mubr.f32.gmra.mrb[0].mxu0 %v1121
    %v1123 = vpop.f32.mrb[0].mxu0
    %v1124 = vadd.f32 %v991, %v1123
    %v1125 = vpop.f32.mrb[0].mxu0
    %v1126 = vadd.f32 %v993, %v1125
    %1127 = vdwg.mxu0
    %v1128 = vand.u32 %v134, 4294901760
    %v1129 = vsub.f32 %v134, %v1128
    %1130 = vmatprep.subr.mxu0 %v1129
    %v1131 = vand.u32 %v133, 4294901760
    %v1132 = vsub.f32 %v133, %v1131
    %1133 = vmatpush1.msra.mxu0 %v1132
    %v1134 = vand.u32 %v138, 4294901760
    %v1135 = vsub.f32 %v138, %v1134
    %1136 = vmatprep.subr.mxu0 %v1135
    %v1137 = vand.u32 %v137, 4294901760
    %v1138 = vsub.f32 %v137, %v1137
    %1139 = vmatpush1.msra.mxu0 %v1138
    %v1140 = vand.u32 %v142, 4294901760
    %v1141 = vsub.f32 %v142, %v1140
    %1142 = vmatprep.subr.mxu0 %v1141
    %v1143 = vand.u32 %v141, 4294901760
    %v1144 = vsub.f32 %v141, %v1143
    %1145 = vmatpush1.msra.mxu0 %v1144
    %v1146 = vand.u32 %v146, 4294901760
    %v1147 = vsub.f32 %v146, %v1146
    %1148 = vmatprep.subr.mxu0 %v1147
    %v1149 = vand.u32 %v145, 4294901760
    %v1150 = vsub.f32 %v145, %v1149
    %1151 = vmatpush1.msra.mxu0 %v1150
    %1152 = vmatprep.subr.mxu0 0.0
    %1153 = vmatpush1.msra.mxu0 0.0
    %1154 = vmatprep.subr.mxu0 0.0
    %1155 = vmatpush1.msra.mxu0 0.0
    %1156 = vmatprep.subr.mxu0 0.0
    %1157 = vmatpush1.msra.mxu0 0.0
    %1158 = vmatprep.subr.mxu0 0.0
    %1159 = vmatpush1.msra.mxu0 0.0
    %1160 = vmatprep.subr.mxu0 0.0
    %1161 = vmatpush1.msra.mxu0 0.0
    %1162 = vmatprep.subr.mxu0 0.0
    %1163 = vmatpush1.msra.mxu0 0.0
    %1164 = vmatprep.subr.mxu0 0.0
    %1165 = vmatpush1.msra.mxu0 0.0
    %1166 = vmatprep.subr.mxu0 0.0
    %1167 = vmatpush1.msra.mxu0 0.0
    %1168 = vmatprep.subr.mxu0 0.0
    %1169 = vmatpush1.msra.mxu0 0.0
    %1170 = vmatprep.subr.mxu0 0.0
    %1171 = vmatpush1.msra.mxu0 0.0
    %1172 = vmatprep.subr.mxu0 0.0
    %1173 = vmatpush1.msra.mxu0 0.0
    %1174 = vmatprep.subr.mxu0 0.0
    %1175 = vmatpush1.msra.mxu0 0.0
    %1176 = vmatprep.subr.mxu0 0.0
    %1177 = vmatpush1.msra.mxu0 0.0
    %1178 = vmatprep.subr.mxu0 0.0
    %1179 = vmatpush1.msra.mxu0 0.0
    %1180 = vmatprep.subr.mxu0 0.0
    %1181 = vmatpush1.msra.mxu0 0.0
    %1182 = vmatprep.subr.mxu0 0.0
    %1183 = vmatpush1.msra.mxu0 0.0
    %1184 = vmatprep.subr.mxu0 0.0
    %1185 = vmatpush1.msra.mxu0 0.0
    %1186 = vmatprep.subr.mxu0 0.0
    %1187 = vmatpush1.msra.mxu0 0.0
    %1188 = vmatprep.subr.mxu0 0.0
    %1189 = vmatpush1.msra.mxu0 0.0
    %1190 = vmatprep.subr.mxu0 0.0
    %1191 = vmatpush1.msra.mxu0 0.0
    %1192 = vmatprep.subr.mxu0 0.0
    %1193 = vmatpush1.msra.mxu0 0.0
    %1194 = vmatprep.subr.mxu0 0.0
    %1195 = vmatpush1.msra.mxu0 0.0
    %1196 = vmatprep.subr.mxu0 0.0
    %1197 = vmatpush1.msra.mxu0 0.0
    %1198 = vmatprep.subr.mxu0 0.0
    %1199 = vmatpush1.msra.mxu0 0.0
    %1200 = vmatprep.subr.mxu0 0.0
    %1201 = vmatpush1.msra.mxu0 0.0
    %1202 = vmatprep.subr.mxu0 0.0
    %1203 = vmatpush1.msra.mxu0 0.0
    %1204 = vmatprep.subr.mxu0 0.0
    %1205 = vmatpush1.msra.mxu0 0.0
    %1206 = vmatprep.subr.mxu0 0.0
    %1207 = vmatpush1.msra.mxu0 0.0
    %1208 = vmatprep.mubr.f32.mxu0 0.0
    %v1209 = vand.u32 %v177, 4294901760
    %v1210 = vsub.f32 %v177, %v1209
    %1211 = vmatmul.mubr.f32.gmra.mrb[0].mxu0 %v1210
    %v1212 = vpop.f32.mrb[0].mxu0
    %v1213 = vadd.f32 %v1103, %v1212
    %v1214 = vpop.f32.mrb[0].mxu0
    %v1215 = vadd.f32 %v1105, %v1214
    %1216 = vmatprep.mubr.f32.mxu0 0.0
    %v1217 = vand.u32 %v180, 4294901760
    %v1218 = vsub.f32 %v180, %v1217
    %1219 = vmatmul.mubr.f32.gmra.mrb[0].mxu0 %v1218
    %v1220 = vpop.f32.mrb[0].mxu0
    %v1221 = vadd.f32 %v1110, %v1220
    %v1222 = vpop.f32.mrb[0].mxu0
    %v1223 = vadd.f32 %v1112, %v1222
    %1224 = vmatprep.mubr.f32.mxu0 0.0
    %v1225 = vand.u32 %v183, 4294901760
    %v1226 = vsub.f32 %v183, %v1225
    %1227 = vmatmul.mubr.f32.gmra.mrb[0].mxu0 %v1226
    %v1228 = vpop.f32.mrb[0].mxu0
    %v1229 = vadd.f32 %v1117, %v1228
    %v1230 = vpop.f32.mrb[0].mxu0
    %v1231 = vadd.f32 %v1119, %v1230
    %1232 = vmatprep.mubr.f32.mxu0 0.0
    %v1233 = vand.u32 %v186, 4294901760
    %v1234 = vsub.f32 %v186, %v1233
    %1235 = vmatmul.mubr.f32.gmra.mrb[0].mxu0 %v1234
    %v1236 = vpop.f32.mrb[0].mxu0
    %v1237 = vadd.f32 %v1124, %v1236
    %v1238 = vpop.f32.mrb[0].mxu0
    %v1239 = vadd.f32 %v1126, %v1238
    %1240 = vdwg.mxu0
    %v1241 = vand.u32 %v134, 4294901760
    %1242 = vmatprep.subr.mxu0 %v1241
    %v1243 = vand.u32 %v133, 4294901760
    %1244 = vmatpush1.msra.mxu0 %v1243
    %v1245 = vand.u32 %v138, 4294901760
    %1246 = vmatprep.subr.mxu0 %v1245
    %v1247 = vand.u32 %v137, 4294901760
    %1248 = vmatpush1.msra.mxu0 %v1247
    %v1249 = vand.u32 %v142, 4294901760
    %1250 = vmatprep.subr.mxu0 %v1249
    %v1251 = vand.u32 %v141, 4294901760
    %1252 = vmatpush1.msra.mxu0 %v1251
    %v1253 = vand.u32 %v146, 4294901760
    %1254 = vmatprep.subr.mxu0 %v1253
    %v1255 = vand.u32 %v145, 4294901760
    %1256 = vmatpush1.msra.mxu0 %v1255
    %1257 = vmatprep.subr.mxu0 0.0
    %1258 = vmatpush1.msra.mxu0 0.0
    %1259 = vmatprep.subr.mxu0 0.0
    %1260 = vmatpush1.msra.mxu0 0.0
    %1261 = vmatprep.subr.mxu0 0.0
    %1262 = vmatpush1.msra.mxu0 0.0
    %1263 = vmatprep.subr.mxu0 0.0
    %1264 = vmatpush1.msra.mxu0 0.0
    %1265 = vmatprep.subr.mxu0 0.0
    %1266 = vmatpush1.msra.mxu0 0.0
    %1267 = vmatprep.subr.mxu0 0.0
    %1268 = vmatpush1.msra.mxu0 0.0
    %1269 = vmatprep.subr.mxu0 0.0
    %1270 = vmatpush1.msra.mxu0 0.0
    %1271 = vmatprep.subr.mxu0 0.0
    %1272 = vmatpush1.msra.mxu0 0.0
    %1273 = vmatprep.subr.mxu0 0.0
    %1274 = vmatpush1.msra.mxu0 0.0
    %1275 = vmatprep.subr.mxu0 0.0
    %1276 = vmatpush1.msra.mxu0 0.0
    %1277 = vmatprep.subr.mxu0 0.0
    %1278 = vmatpush1.msra.mxu0 0.0
    %1279 = vmatprep.subr.mxu0 0.0
    %1280 = vmatpush1.msra.mxu0 0.0
    %1281 = vmatprep.subr.mxu0 0.0
    %1282 = vmatpush1.msra.mxu0 0.0
    %1283 = vmatprep.subr.mxu0 0.0
    %1284 = vmatpush1.msra.mxu0 0.0
    %1285 = vmatprep.subr.mxu0 0.0
    %1286 = vmatpush1.msra.mxu0 0.0
    %1287 = vmatprep.subr.mxu0 0.0
    %1288 = vmatpush1.msra.mxu0 0.0
    %1289 = vmatprep.subr.mxu0 0.0
    %1290 = vmatpush1.msra.mxu0 0.0
    %1291 = vmatprep.subr.mxu0 0.0
    %1292 = vmatpush1.msra.mxu0 0.0
    %1293 = vmatprep.subr.mxu0 0.0
    %1294 = vmatpush1.msra.mxu0 0.0
    %1295 = vmatprep.subr.mxu0 0.0
    %1296 = vmatpush1.msra.mxu0 0.0
    %1297 = vmatprep.subr.mxu0 0.0
    %1298 = vmatpush1.msra.mxu0 0.0
    %1299 = vmatprep.subr.mxu0 0.0
    %1300 = vmatpush1.msra.mxu0 0.0
    %1301 = vmatprep.subr.mxu0 0.0
    %1302 = vmatpush1.msra.mxu0 0.0
    %1303 = vmatprep.subr.mxu0 0.0
    %1304 = vmatpush1.msra.mxu0 0.0
    %1305 = vmatprep.subr.mxu0 0.0
    %1306 = vmatpush1.msra.mxu0 0.0
    %1307 = vmatprep.subr.mxu0 0.0
    %1308 = vmatpush1.msra.mxu0 0.0
    %1309 = vmatprep.subr.mxu0 0.0
    %1310 = vmatpush1.msra.mxu0 0.0
    %1311 = vmatprep.subr.mxu0 0.0
    %1312 = vmatpush1.msra.mxu0 0.0
    %1313 = vmatprep.mubr.f32.mxu0 0.0
    %v1314 = vand.u32 %v177, 4294901760
    %v1315 = vsub.f32 %v177, %v1314
    %v1316 = vand.u32 %v1315, 4294901760
    %1317 = vmatmul.mubr.f32.gmra.mrb[0].mxu0 %v1316
    %v1318 = vpop.f32.mrb[0].mxu0
    %v1319 = vadd.f32 %v1213, %v1318
    %v1320 = vpop.f32.mrb[0].mxu0
    %v1321 = vadd.f32 %v1215, %v1320
    %1322 = vmatprep.mubr.f32.mxu0 0.0
    %v1323 = vand.u32 %v180, 4294901760
    %v1324 = vsub.f32 %v180, %v1323
    %v1325 = vand.u32 %v1324, 4294901760
    %1326 = vmatmul.mubr.f32.gmra.mrb[0].mxu0 %v1325
    %v1327 = vpop.f32.mrb[0].mxu0
    %v1328 = vadd.f32 %v1221, %v1327
    %v1329 = vpop.f32.mrb[0].mxu0
    %v1330 = vadd.f32 %v1223, %v1329
    %1331 = vmatprep.mubr.f32.mxu0 0.0
    %v1332 = vand.u32 %v183, 4294901760
    %v1333 = vsub.f32 %v183, %v1332
    %v1334 = vand.u32 %v1333, 4294901760
    %1335 = vmatmul.mubr.f32.gmra.mrb[0].mxu0 %v1334
    %v1336 = vpop.f32.mrb[0].mxu0
    %v1337 = vadd.f32 %v1229, %v1336
    %v1338 = vpop.f32.mrb[0].mxu0
    %v1339 = vadd.f32 %v1231, %v1338
    %1340 = vmatprep.mubr.f32.mxu0 0.0
    %v1341 = vand.u32 %v186, 4294901760
    %v1342 = vsub.f32 %v186, %v1341
    %v1343 = vand.u32 %v1342, 4294901760
    %1344 = vmatmul.mubr.f32.gmra.mrb[0].mxu0 %v1343
    %v1345 = vpop.f32.mrb[0].mxu0
    %v1346 = vadd.f32 %v1237, %v1345
    %v1347 = vpop.f32.mrb[0].mxu0
    %v1348 = vadd.f32 %v1239, %v1347
    %1349 = vdwg.mxu0
    %v1350 = vand.u32 %v134, 4294901760
    %v1351 = vsub.f32 %v134, %v1350
    %v1352 = vand.u32 %v1351, 4294901760
    %1353 = vmatprep.subr.mxu0 %v1352
    %v1354 = vand.u32 %v133, 4294901760
    %v1355 = vsub.f32 %v133, %v1354
    %v1356 = vand.u32 %v1355, 4294901760
    %1357 = vmatpush1.msra.mxu0 %v1356
    %v1358 = vand.u32 %v138, 4294901760
    %v1359 = vsub.f32 %v138, %v1358
    %v1360 = vand.u32 %v1359, 4294901760
    %1361 = vmatprep.subr.mxu0 %v1360
    %v1362 = vand.u32 %v137, 4294901760
    %v1363 = vsub.f32 %v137, %v1362
    %v1364 = vand.u32 %v1363, 4294901760
    %1365 = vmatpush1.msra.mxu0 %v1364
    %v1366 = vand.u32 %v142, 4294901760
    %v1367 = vsub.f32 %v142, %v1366
    %v1368 = vand.u32 %v1367, 4294901760
    %1369 = vmatprep.subr.mxu0 %v1368
    %v1370 = vand.u32 %v141, 4294901760
    %v1371 = vsub.f32 %v141, %v1370
    %v1372 = vand.u32 %v1371, 4294901760
    %1373 = vmatpush1.msra.mxu0 %v1372
    %v1374 = vand.u32 %v146, 4294901760
    %v1375 = vsub.f32 %v146, %v1374
    %v1376 = vand.u32 %v1375, 4294901760
    %1377 = vmatprep.subr.mxu0 %v1376
    %v1378 = vand.u32 %v145, 4294901760
    %v1379 = vsub.f32 %v145, %v1378
    %v1380 = vand.u32 %v1379, 4294901760
    %1381 = vmatpush1.msra.mxu0 %v1380
    %1382 = vmatprep.subr.mxu0 0.0
    %1383 = vmatpush1.msra.mxu0 0.0
    %1384 = vmatprep.subr.mxu0 0.0
    %1385 = vmatpush1.msra.mxu0 0.0
    %1386 = vmatprep.subr.mxu0 0.0
    %1387 = vmatpush1.msra.mxu0 0.0
    %1388 = vmatprep.subr.mxu0 0.0
    %1389 = vmatpush1.msra.mxu0 0.0
    %1390 = vmatprep.subr.mxu0 0.0
    %1391 = vmatpush1.msra.mxu0 0.0
    %1392 = vmatprep.subr.mxu0 0.0
    %1393 = vmatpush1.msra.mxu0 0.0
    %1394 = vmatprep.subr.mxu0 0.0
    %1395 = vmatpush1.msra.mxu0 0.0
    %1396 = vmatprep.subr.mxu0 0.0
    %1397 = vmatpush1.msra.mxu0 0.0
    %1398 = vmatprep.subr.mxu0 0.0
    %1399 = vmatpush1.msra.mxu0 0.0
    %1400 = vmatprep.subr.mxu0 0.0
    %1401 = vmatpush1.msra.mxu0 0.0
    %1402 = vmatprep.subr.mxu0 0.0
    %1403 = vmatpush1.msra.mxu0 0.0
    %1404 = vmatprep.subr.mxu0 0.0
    %1405 = vmatpush1.msra.mxu0 0.0
    %1406 = vmatprep.subr.mxu0 0.0
    %1407 = vmatpush1.msra.mxu0 0.0
    %1408 = vmatprep.subr.mxu0 0.0
    %1409 = vmatpush1.msra.mxu0 0.0
    %1410 = vmatprep.subr.mxu0 0.0
    %1411 = vmatpush1.msra.mxu0 0.0
    %1412 = vmatprep.subr.mxu0 0.0
    %1413 = vmatpush1.msra.mxu0 0.0
    %1414 = vmatprep.subr.mxu0 0.0
    %1415 = vmatpush1.msra.mxu0 0.0
    %1416 = vmatprep.subr.mxu0 0.0
    %1417 = vmatpush1.msra.mxu0 0.0
    %1418 = vmatprep.subr.mxu0 0.0
    %1419 = vmatpush1.msra.mxu0 0.0
    %1420 = vmatprep.subr.mxu0 0.0
    %1421 = vmatpush1.msra.mxu0 0.0
    %1422 = vmatprep.subr.mxu0 0.0
    %1423 = vmatpush1.msra.mxu0 0.0
    %1424 = vmatprep.subr.mxu0 0.0
    %1425 = vmatpush1.msra.mxu0 0.0
    %1426 = vmatprep.subr.mxu0 0.0
    %1427 = vmatpush1.msra.mxu0 0.0
    %1428 = vmatprep.subr.mxu0 0.0
    %1429 = vmatpush1.msra.mxu0 0.0
    %1430 = vmatprep.subr.mxu0 0.0
    %1431 = vmatpush1.msra.mxu0 0.0
    %1432 = vmatprep.subr.mxu0 0.0
    %1433 = vmatpush1.msra.mxu0 0.0
    %1434 = vmatprep.subr.mxu0 0.0
    %1435 = vmatpush1.msra.mxu0 0.0
    %1436 = vmatprep.subr.mxu0 0.0
    %1437 = vmatpush1.msra.mxu0 0.0
    %1438 = vmatprep.mubr.f32.mxu0 0.0
    %v1439 = vand.u32 %v177, 4294901760
    %1440 = vmatmul.mubr.f32.gmra.mrb[0].mxu0 %v1439
    %v1441 = vpop.f32.mrb[0].mxu0
    %v1442 = vadd.f32 %v1319, %v1441
    %v1443 = vpop.f32.mrb[0].mxu0
    %v1444 = vadd.f32 %v1321, %v1443
    %1445 = vmatprep.mubr.f32.mxu0 0.0
    %v1446 = vand.u32 %v180, 4294901760
    %1447 = vmatmul.mubr.f32.gmra.mrb[0].mxu0 %v1446
    %v1448 = vpop.f32.mrb[0].mxu0
    %v1449 = vadd.f32 %v1328, %v1448
    %v1450 = vpop.f32.mrb[0].mxu0
    %v1451 = vadd.f32 %v1330, %v1450
    %1452 = vmatprep.mubr.f32.mxu0 0.0
    %v1453 = vand.u32 %v183, 4294901760
    %1454 = vmatmul.mubr.f32.gmra.mrb[0].mxu0 %v1453
    %v1455 = vpop.f32.mrb[0].mxu0
    %v1456 = vadd.f32 %v1337, %v1455
    %v1457 = vpop.f32.mrb[0].mxu0
    %v1458 = vadd.f32 %v1339, %v1457
    %1459 = vmatprep.mubr.f32.mxu0 0.0
    %v1460 = vand.u32 %v186, 4294901760
    %1461 = vmatmul.mubr.f32.gmra.mrb[0].mxu0 %v1460
    %v1462 = vpop.f32.mrb[0].mxu0
    %v1463 = vadd.f32 %v1346, %v1462
    %v1464 = vpop.f32.mrb[0].mxu0
    %v1465 = vadd.f32 %v1348, %v1464
    %1466 = vdwg.mxu0
    %v1467 = vand.u32 %v134, 4294901760
    %1468 = vmatprep.subr.mxu0 %v1467
    %v1469 = vand.u32 %v133, 4294901760
    %1470 = vmatpush1.msra.mxu0 %v1469
    %v1471 = vand.u32 %v138, 4294901760
    %1472 = vmatprep.subr.mxu0 %v1471
    %v1473 = vand.u32 %v137, 4294901760
    %1474 = vmatpush1.msra.mxu0 %v1473
    %v1475 = vand.u32 %v142, 4294901760
    %1476 = vmatprep.subr.mxu0 %v1475
    %v1477 = vand.u32 %v141, 4294901760
    %1478 = vmatpush1.msra.mxu0 %v1477
    %v1479 = vand.u32 %v146, 4294901760
    %1480 = vmatprep.subr.mxu0 %v1479
    %v1481 = vand.u32 %v145, 4294901760
    %1482 = vmatpush1.msra.mxu0 %v1481
    %1483 = vmatprep.subr.mxu0 0.0
    %1484 = vmatpush1.msra.mxu0 0.0
    %1485 = vmatprep.subr.mxu0 0.0
    %1486 = vmatpush1.msra.mxu0 0.0
    %1487 = vmatprep.subr.mxu0 0.0
    %1488 = vmatpush1.msra.mxu0 0.0
    %1489 = vmatprep.subr.mxu0 0.0
    %1490 = vmatpush1.msra.mxu0 0.0
    %1491 = vmatprep.subr.mxu0 0.0
    %1492 = vmatpush1.msra.mxu0 0.0
    %1493 = vmatprep.subr.mxu0 0.0
    %1494 = vmatpush1.msra.mxu0 0.0
    %1495 = vmatprep.subr.mxu0 0.0
    %1496 = vmatpush1.msra.mxu0 0.0
    %1497 = vmatprep.subr.mxu0 0.0
    %1498 = vmatpush1.msra.mxu0 0.0
    %1499 = vmatprep.subr.mxu0 0.0
    %1500 = vmatpush1.msra.mxu0 0.0
    %1501 = vmatprep.subr.mxu0 0.0
    %1502 = vmatpush1.msra.mxu0 0.0
    %1503 = vmatprep.subr.mxu0 0.0
    %1504 = vmatpush1.msra.mxu0 0.0
    %1505 = vmatprep.subr.mxu0 0.0
    %1506 = vmatpush1.msra.mxu0 0.0
    %1507 = vmatprep.subr.mxu0 0.0
    %1508 = vmatpush1.msra.mxu0 0.0
    %1509 = vmatprep.subr.mxu0 0.0
    %1510 = vmatpush1.msra.mxu0 0.0
    %1511 = vmatprep.subr.mxu0 0.0
    %1512 = vmatpush1.msra.mxu0 0.0
    %1513 = vmatprep.subr.mxu0 0.0
    %1514 = vmatpush1.msra.mxu0 0.0
    %1515 = vmatprep.subr.mxu0 0.0
    %1516 = vmatpush1.msra.mxu0 0.0
    %1517 = vmatprep.subr.mxu0 0.0
    %1518 = vmatpush1.msra.mxu0 0.0
    %1519 = vmatprep.subr.mxu0 0.0
    %1520 = vmatpush1.msra.mxu0 0.0
    %1521 = vmatprep.subr.mxu0 0.0
    %1522 = vmatpush1.msra.mxu0 0.0
    %1523 = vmatprep.subr.mxu0 0.0
    %1524 = vmatpush1.msra.mxu0 0.0
    %1525 = vmatprep.subr.mxu0 0.0
    %1526 = vmatpush1.msra.mxu0 0.0
    %1527 = vmatprep.subr.mxu0 0.0
    %1528 = vmatpush1.msra.mxu0 0.0
    %1529 = vmatprep.subr.mxu0 0.0
    %1530 = vmatpush1.msra.mxu0 0.0
    %1531 = vmatprep.subr.mxu0 0.0
    %1532 = vmatpush1.msra.mxu0 0.0
    %1533 = vmatprep.subr.mxu0 0.0
    %1534 = vmatpush1.msra.mxu0 0.0
    %1535 = vmatprep.subr.mxu0 0.0
    %1536 = vmatpush1.msra.mxu0 0.0
    %1537 = vmatprep.subr.mxu0 0.0
    %1538 = vmatpush1.msra.mxu0 0.0
    %1539 = vmatprep.mubr.f32.mxu0 0.0
    %v1540 = vand.u32 %v177, 4294901760
    %1541 = vmatmul.mubr.f32.gmra.mrb[0].mxu0 %v1540
    %v1542 = vpop.f32.mrb[0].mxu0
    %v1543 = vadd.f32 %v1442, %v1542
    %v1544 = vpop.f32.mrb[0].mxu0
    %v1545 = vadd.f32 %v1444, %v1544
    %1546 = vmatprep.mubr.f32.mxu0 0.0
    %v1547 = vand.u32 %v180, 4294901760
    %1548 = vmatmul.mubr.f32.gmra.mrb[0].mxu0 %v1547
    %v1549 = vpop.f32.mrb[0].mxu0
    %v1550 = vadd.f32 %v1449, %v1549
    %v1551 = vpop.f32.mrb[0].mxu0
    %v1552 = vadd.f32 %v1451, %v1551
    %1553 = vmatprep.mubr.f32.mxu0 0.0
    %v1554 = vand.u32 %v183, 4294901760
    %1555 = vmatmul.mubr.f32.gmra.mrb[0].mxu0 %v1554
    %v1556 = vpop.f32.mrb[0].mxu0
    %v1557 = vadd.f32 %v1456, %v1556
    %v1558 = vpop.f32.mrb[0].mxu0
    %v1559 = vadd.f32 %v1458, %v1558
    %1560 = vmatprep.mubr.f32.mxu0 0.0
    %v1561 = vand.u32 %v186, 4294901760
    %1562 = vmatmul.mubr.f32.gmra.mrb[0].mxu0 %v1561
    %v1563 = vpop.f32.mrb[0].mxu0
    %v1564 = vadd.f32 %v1463, %v1563
    %v1565 = vpop.f32.mrb[0].mxu0
    %v1566 = vadd.f32 %v1465, %v1565
    %1567 = vdwg.mxu0
    %v1568 = vtanh.pop %v853
    %v1569 = vtanh.pop %v855
    %v1570 = vtanh.pop %v1543
    %v1571 = vtanh.pop %v1545
    %v1572 = vtanh.pop %v860
    %v1573 = vtanh.pop %v862
    %v1574 = vtanh.pop %v1550
    %v1575 = vtanh.pop %v1552
    %v1576 = vtanh.pop %v867
    %v1577 = vtanh.pop %v869
    %v1578 = vtanh.pop %v1557
    %v1579 = vtanh.pop %v1559
    %v1580 = vtanh.pop %v874
    %v1581 = vtanh.pop %v876
    %v1582 = vtanh.pop %v1564
    %v1583 = vtanh.pop %v1566
    %s1584 = scalar_lea.vmem %s3, 32
    %v1585 = vld [vmem:[%s1584] sm:$0xff]
    %v1586 = vld [vmem:[%s1584 + $0x8] sm:$0xff]
    %v1587 = vld [vmem:[%s1584 + $0x10] sm:$0xff]
    %v1588 = vld [vmem:[%s1584 + $0x18] sm:$0xff]
    %s1589 = scalar_lea.vmem %s4, 32
    %v1590 = vld [vmem:[%s1589] sm:$0xff]
    %v1591 = vld [vmem:[%s1589 + $0x8] sm:$0xff]
    %v1592 = vld [vmem:[%s1589 + $0x10] sm:$0xff]
    %v1593 = vld [vmem:[%s1589 + $0x18] sm:$0xff]
    %1595 = vset.pattern.permute.xlu0 0
    %1596 = vperm.xlu0 %1595, %v1590
    %v1597 = vpop.permute.xlu0 %1596
    %1600 = vset.pattern.permute.xlu0 0
    %1601 = vperm.xlu0 %1600, %v1591
    %v1602 = vpop.permute.xlu0 %1601
    %1605 = vset.pattern.permute.xlu0 0
    %1606 = vperm.xlu0 %1605, %v1592
    %v1607 = vpop.permute.xlu0 %1606
    %1610 = vset.pattern.permute.xlu0 0
    %1611 = vperm.xlu0 %1610, %v1593
    %v1612 = vpop.permute.xlu0 %1611
    %v1615 = vsel %vm175, %v1585, 0
    %v1618 = vsel %vm175, %v1586, 0
    %v1621 = vsel %vm175, %v1587, 0
    %v1624 = vsel %vm175, %v1588, 0
    %v1626 = vand.u32 %v1569, 4294901760
    %1627 = vmatprep.subr.mxu0 %v1626
    %v1628 = vand.u32 %v1568, 4294901760
    %1629 = vmatpush1.msra.mxu0 %v1628
    %v1630 = vand.u32 %v1573, 4294901760
    %1631 = vmatprep.subr.mxu0 %v1630
    %v1632 = vand.u32 %v1572, 4294901760
    %1633 = vmatpush1.msra.mxu0 %v1632
    %v1634 = vand.u32 %v1577, 4294901760
    %1635 = vmatprep.subr.mxu0 %v1634
    %v1636 = vand.u32 %v1576, 4294901760
    %1637 = vmatpush1.msra.mxu0 %v1636
    %v1638 = vand.u32 %v1581, 4294901760
    %1639 = vmatprep.subr.mxu0 %v1638
    %v1640 = vand.u32 %v1580, 4294901760
    %1641 = vmatpush1.msra.mxu0 %v1640
    %1642 = vmatprep.subr.mxu0 0.0
    %1643 = vmatpush1.msra.mxu0 0.0
    %1644 = vmatprep.subr.mxu0 0.0
    %1645 = vmatpush1.msra.mxu0 0.0
    %1646 = vmatprep.subr.mxu0 0.0
    %1647 = vmatpush1.msra.mxu0 0.0
    %1648 = vmatprep.subr.mxu0 0.0
    %1649 = vmatpush1.msra.mxu0 0.0
    %1650 = vmatprep.subr.mxu0 0.0
    %1651 = vmatpush1.msra.mxu0 0.0
    %1652 = vmatprep.subr.mxu0 0.0
    %1653 = vmatpush1.msra.mxu0 0.0
    %1654 = vmatprep.subr.mxu0 0.0
    %1655 = vmatpush1.msra.mxu0 0.0
    %1656 = vmatprep.subr.mxu0 0.0
    %1657 = vmatpush1.msra.mxu0 0.0
    %1658 = vmatprep.subr.mxu0 0.0
    %1659 = vmatpush1.msra.mxu0 0.0
    %1660 = vmatprep.subr.mxu0 0.0
    %1661 = vmatpush1.msra.mxu0 0.0
    %1662 = vmatprep.subr.mxu0 0.0
    %1663 = vmatpush1.msra.mxu0 0.0
    %1664 = vmatprep.subr.mxu0 0.0
    %1665 = vmatpush1.msra.mxu0 0.0
    %1666 = vmatprep.subr.mxu0 0.0
    %1667 = vmatpush1.msra.mxu0 0.0
    %1668 = vmatprep.subr.mxu0 0.0
    %1669 = vmatpush1.msra.mxu0 0.0
    %1670 = vmatprep.subr.mxu0 0.0
    %1671 = vmatpush1.msra.mxu0 0.0
    %1672 = vmatprep.subr.mxu0 0.0
    %1673 = vmatpush1.msra.mxu0 0.0
    %1674 = vmatprep.subr.mxu0 0.0
    %1675 = vmatpush1.msra.mxu0 0.0
    %1676 = vmatprep.subr.mxu0 0.0
    %1677 = vmatpush1.msra.mxu0 0.0
    %1678 = vmatprep.subr.mxu0 0.0
    %1679 = vmatpush1.msra.mxu0 0.0
    %1680 = vmatprep.subr.mxu0 0.0
    %1681 = vmatpush1.msra.mxu0 0.0
    %1682 = vmatprep.subr.mxu0 0.0
    %1683 = vmatpush1.msra.mxu0 0.0
    %1684 = vmatprep.subr.mxu0 0.0
    %1685 = vmatpush1.msra.mxu0 0.0
    %1686 = vmatprep.subr.mxu0 0.0
    %1687 = vmatpush1.msra.mxu0 0.0
    %1688 = vmatprep.subr.mxu0 0.0
    %1689 = vmatpush1.msra.mxu0 0.0
    %1690 = vmatprep.subr.mxu0 0.0
    %1691 = vmatpush1.msra.mxu0 0.0
    %1692 = vmatprep.subr.mxu0 0.0
    %1693 = vmatpush1.msra.mxu0 0.0
    %1694 = vmatprep.subr.mxu0 0.0
    %1695 = vmatpush1.msra.mxu0 0.0
    %1696 = vmatprep.subr.mxu0 0.0
    %1697 = vmatpush1.msra.mxu0 0.0
    %1698 = vmatprep.mubr.f32.mxu0 0.0
    %v1699 = vand.u32 %v1615, 4294901760
    %v1700 = vsub.f32 %v1615, %v1699
    %v1701 = vand.u32 %v1700, 4294901760
    %v1702 = vsub.f32 %v1700, %v1701
    %v1703 = vand.u32 %v1702, 4294901760
    %1704 = vmatmul.mubr.f32.gmra.mrb[0].mxu0 %v1703
    %v1705 = vpop.f32.mrb[0].mxu0
    %v1706 = vadd.f32 %v1597, %v1705
    %v1707 = vpop.f32.mrb[0].mxu0
    %v1708 = vadd.f32 %v1597, %v1707
    %1709 = vmatprep.mubr.f32.mxu0 0.0
    %v1710 = vand.u32 %v1618, 4294901760
    %v1711 = vsub.f32 %v1618, %v1710
    %v1712 = vand.u32 %v1711, 4294901760
    %v1713 = vsub.f32 %v1711, %v1712
    %v1714 = vand.u32 %v1713, 4294901760
    %1715 = vmatmul.mubr.f32.gmra.mrb[0].mxu0 %v1714
    %v1716 = vpop.f32.mrb[0].mxu0
    %v1717 = vadd.f32 %v1602, %v1716
    %v1718 = vpop.f32.mrb[0].mxu0
    %v1719 = vadd.f32 %v1602, %v1718
    %1720 = vmatprep.mubr.f32.mxu0 0.0
    %v1721 = vand.u32 %v1621, 4294901760
    %v1722 = vsub.f32 %v1621, %v1721
    %v1723 = vand.u32 %v1722, 4294901760
    %v1724 = vsub.f32 %v1722, %v1723
    %v1725 = vand.u32 %v1724, 4294901760
    %1726 = vmatmul.mubr.f32.gmra.mrb[0].mxu0 %v1725
    %v1727 = vpop.f32.mrb[0].mxu0
    %v1728 = vadd.f32 %v1607, %v1727
    %v1729 = vpop.f32.mrb[0].mxu0
    %v1730 = vadd.f32 %v1607, %v1729
    %1731 = vmatprep.mubr.f32.mxu0 0.0
    %v1732 = vand.u32 %v1624, 4294901760
    %v1733 = vsub.f32 %v1624, %v1732
    %v1734 = vand.u32 %v1733, 4294901760
    %v1735 = vsub.f32 %v1733, %v1734
    %v1736 = vand.u32 %v1735, 4294901760
    %1737 = vmatmul.mubr.f32.gmra.mrb[0].mxu0 %v1736
    %v1738 = vpop.f32.mrb[0].mxu0
    %v1739 = vadd.f32 %v1612, %v1738
    %v1740 = vpop.f32.mrb[0].mxu0
    %v1741 = vadd.f32 %v1612, %v1740
    %1742 = vdwg.mxu0
    %v1743 = vand.u32 %v1569, 4294901760
    %v1744 = vsub.f32 %v1569, %v1743
    %v1745 = vand.u32 %v1744, 4294901760
    %v1746 = vsub.f32 %v1744, %v1745
    %v1747 = vand.u32 %v1746, 4294901760
    %1748 = vmatprep.subr.mxu0 %v1747
    %v1749 = vand.u32 %v1568, 4294901760
    %v1750 = vsub.f32 %v1568, %v1749
    %v1751 = vand.u32 %v1750, 4294901760
    %v1752 = vsub.f32 %v1750, %v1751
    %v1753 = vand.u32 %v1752, 4294901760
    %1754 = vmatpush1.msra.mxu0 %v1753
    %v1755 = vand.u32 %v1573, 4294901760
    %v1756 = vsub.f32 %v1573, %v1755
    %v1757 = vand.u32 %v1756, 4294901760
    %v1758 = vsub.f32 %v1756, %v1757
    %v1759 = vand.u32 %v1758, 4294901760
    %1760 = vmatprep.subr.mxu0 %v1759
    %v1761 = vand.u32 %v1572, 4294901760
    %v1762 = vsub.f32 %v1572, %v1761
    %v1763 = vand.u32 %v1762, 4294901760
    %v1764 = vsub.f32 %v1762, %v1763
    %v1765 = vand.u32 %v1764, 4294901760
    %1766 = vmatpush1.msra.mxu0 %v1765
    %v1767 = vand.u32 %v1577, 4294901760
    %v1768 = vsub.f32 %v1577, %v1767
    %v1769 = vand.u32 %v1768, 4294901760
    %v1770 = vsub.f32 %v1768, %v1769
    %v1771 = vand.u32 %v1770, 4294901760
    %1772 = vmatprep.subr.mxu0 %v1771
    %v1773 = vand.u32 %v1576, 4294901760
    %v1774 = vsub.f32 %v1576, %v1773
    %v1775 = vand.u32 %v1774, 4294901760
    %v1776 = vsub.f32 %v1774, %v1775
    %v1777 = vand.u32 %v1776, 4294901760
    %1778 = vmatpush1.msra.mxu0 %v1777
    %v1779 = vand.u32 %v1581, 4294901760
    %v1780 = vsub.f32 %v1581, %v1779
    %v1781 = vand.u32 %v1780, 4294901760
    %v1782 = vsub.f32 %v1780, %v1781
    %v1783 = vand.u32 %v1782, 4294901760
    %1784 = vmatprep.subr.mxu0 %v1783
    %v1785 = vand.u32 %v1580, 4294901760
    %v1786 = vsub.f32 %v1580, %v1785
    %v1787 = vand.u32 %v1786, 4294901760
    %v1788 = vsub.f32 %v1786, %v1787
    %v1789 = vand.u32 %v1788, 4294901760
    %1790 = vmatpush1.msra.mxu0 %v1789
    %1791 = vmatprep.subr.mxu0 0.0
    %1792 = vmatpush1.msra.mxu0 0.0
    %1793 = vmatprep.subr.mxu0 0.0
    %1794 = vmatpush1.msra.mxu0 0.0
    %1795 = vmatprep.subr.mxu0 0.0
    %1796 = vmatpush1.msra.mxu0 0.0
    %1797 = vmatprep.subr.mxu0 0.0
    %1798 = vmatpush1.msra.mxu0 0.0
    %1799 = vmatprep.subr.mxu0 0.0
    %1800 = vmatpush1.msra.mxu0 0.0
    %1801 = vmatprep.subr.mxu0 0.0
    %1802 = vmatpush1.msra.mxu0 0.0
    %1803 = vmatprep.subr.mxu0 0.0
    %1804 = vmatpush1.msra.mxu0 0.0
    %1805 = vmatprep.subr.mxu0 0.0
    %1806 = vmatpush1.msra.mxu0 0.0
    %1807 = vmatprep.subr.mxu0 0.0
    %1808 = vmatpush1.msra.mxu0 0.0
    %1809 = vmatprep.subr.mxu0 0.0
    %1810 = vmatpush1.msra.mxu0 0.0
    %1811 = vmatprep.subr.mxu0 0.0
    %1812 = vmatpush1.msra.mxu0 0.0
    %1813 = vmatprep.subr.mxu0 0.0
    %1814 = vmatpush1.msra.mxu0 0.0
    %1815 = vmatprep.subr.mxu0 0.0
    %1816 = vmatpush1.msra.mxu0 0.0
    %1817 = vmatprep.subr.mxu0 0.0
    %1818 = vmatpush1.msra.mxu0 0.0
    %1819 = vmatprep.subr.mxu0 0.0
    %1820 = vmatpush1.msra.mxu0 0.0
    %1821 = vmatprep.subr.mxu0 0.0
    %1822 = vmatpush1.msra.mxu0 0.0
    %1823 = vmatprep.subr.mxu0 0.0
    %1824 = vmatpush1.msra.mxu0 0.0
    %1825 = vmatprep.subr.mxu0 0.0
    %1826 = vmatpush1.msra.mxu0 0.0
    %1827 = vmatprep.subr.mxu0 0.0
    %1828 = vmatpush1.msra.mxu0 0.0
    %1829 = vmatprep.subr.mxu0 0.0
    %1830 = vmatpush1.msra.mxu0 0.0
    %1831 = vmatprep.subr.mxu0 0.0
    %1832 = vmatpush1.msra.mxu0 0.0
    %1833 = vmatprep.subr.mxu0 0.0
    %1834 = vmatpush1.msra.mxu0 0.0
    %1835 = vmatprep.subr.mxu0 0.0
    %1836 = vmatpush1.msra.mxu0 0.0
    %1837 = vmatprep.subr.mxu0 0.0
    %1838 = vmatpush1.msra.mxu0 0.0
    %1839 = vmatprep.subr.mxu0 0.0
    %1840 = vmatpush1.msra.mxu0 0.0
    %1841 = vmatprep.subr.mxu0 0.0
    %1842 = vmatpush1.msra.mxu0 0.0
    %1843 = vmatprep.subr.mxu0 0.0
    %1844 = vmatpush1.msra.mxu0 0.0
    %1845 = vmatprep.subr.mxu0 0.0
    %1846 = vmatpush1.msra.mxu0 0.0
    %1847 = vmatprep.mubr.f32.mxu0 0.0
    %v1848 = vand.u32 %v1615, 4294901760
    %1849 = vmatmul.mubr.f32.gmra.mrb[0].mxu0 %v1848
    %v1850 = vpop.f32.mrb[0].mxu0
    %v1851 = vadd.f32 %v1706, %v1850
    %v1852 = vpop.f32.mrb[0].mxu0
    %v1853 = vadd.f32 %v1708, %v1852
    %1854 = vmatprep.mubr.f32.mxu0 0.0
    %v1855 = vand.u32 %v1618, 4294901760
    %1856 = vmatmul.mubr.f32.gmra.mrb[0].mxu0 %v1855
    %v1857 = vpop.f32.mrb[0].mxu0
    %v1858 = vadd.f32 %v1717, %v1857
    %v1859 = vpop.f32.mrb[0].mxu0
    %v1860 = vadd.f32 %v1719, %v1859
    %1861 = vmatprep.mubr.f32.mxu0 0.0
    %v1862 = vand.u32 %v1621, 4294901760
    %1863 = vmatmul.mubr.f32.gmra.mrb[0].mxu0 %v1862
    %v1864 = vpop.f32.mrb[0].mxu0
    %v1865 = vadd.f32 %v1728, %v1864
    %v1866 = vpop.f32.mrb[0].mxu0
    %v1867 = vadd.f32 %v1730, %v1866
    %1868 = vmatprep.mubr.f32.mxu0 0.0
    %v1869 = vand.u32 %v1624, 4294901760
    %1870 = vmatmul.mubr.f32.gmra.mrb[0].mxu0 %v1869
    %v1871 = vpop.f32.mrb[0].mxu0
    %v1872 = vadd.f32 %v1739, %v1871
    %v1873 = vpop.f32.mrb[0].mxu0
    %v1874 = vadd.f32 %v1741, %v1873
    %1875 = vdwg.mxu0
    %v1876 = vand.u32 %v1569, 4294901760
    %v1877 = vsub.f32 %v1569, %v1876
    %1878 = vmatprep.subr.mxu0 %v1877
    %v1879 = vand.u32 %v1568, 4294901760
    %v1880 = vsub.f32 %v1568, %v1879
    %1881 = vmatpush1.msra.mxu0 %v1880
    %v1882 = vand.u32 %v1573, 4294901760
    %v1883 = vsub.f32 %v1573, %v1882
    %1884 = vmatprep.subr.mxu0 %v1883
    %v1885 = vand.u32 %v1572, 4294901760
    %v1886 = vsub.f32 %v1572, %v1885
    %1887 = vmatpush1.msra.mxu0 %v1886
    %v1888 = vand.u32 %v1577, 4294901760
    %v1889 = vsub.f32 %v1577, %v1888
    %1890 = vmatprep.subr.mxu0 %v1889
    %v1891 = vand.u32 %v1576, 4294901760
    %v1892 = vsub.f32 %v1576, %v1891
    %1893 = vmatpush1.msra.mxu0 %v1892
    %v1894 = vand.u32 %v1581, 4294901760
    %v1895 = vsub.f32 %v1581, %v1894
    %1896 = vmatprep.subr.mxu0 %v1895
    %v1897 = vand.u32 %v1580, 4294901760
    %v1898 = vsub.f32 %v1580, %v1897
    %1899 = vmatpush1.msra.mxu0 %v1898
    %1900 = vmatprep.subr.mxu0 0.0
    %1901 = vmatpush1.msra.mxu0 0.0
    %1902 = vmatprep.subr.mxu0 0.0
    %1903 = vmatpush1.msra.mxu0 0.0
    %1904 = vmatprep.subr.mxu0 0.0
    %1905 = vmatpush1.msra.mxu0 0.0
    %1906 = vmatprep.subr.mxu0 0.0
    %1907 = vmatpush1.msra.mxu0 0.0
    %1908 = vmatprep.subr.mxu0 0.0
    %1909 = vmatpush1.msra.mxu0 0.0
    %1910 = vmatprep.subr.mxu0 0.0
    %1911 = vmatpush1.msra.mxu0 0.0
    %1912 = vmatprep.subr.mxu0 0.0
    %1913 = vmatpush1.msra.mxu0 0.0
    %1914 = vmatprep.subr.mxu0 0.0
    %1915 = vmatpush1.msra.mxu0 0.0
    %1916 = vmatprep.subr.mxu0 0.0
    %1917 = vmatpush1.msra.mxu0 0.0
    %1918 = vmatprep.subr.mxu0 0.0
    %1919 = vmatpush1.msra.mxu0 0.0
    %1920 = vmatprep.subr.mxu0 0.0
    %1921 = vmatpush1.msra.mxu0 0.0
    %1922 = vmatprep.subr.mxu0 0.0
    %1923 = vmatpush1.msra.mxu0 0.0
    %1924 = vmatprep.subr.mxu0 0.0
    %1925 = vmatpush1.msra.mxu0 0.0
    %1926 = vmatprep.subr.mxu0 0.0
    %1927 = vmatpush1.msra.mxu0 0.0
    %1928 = vmatprep.subr.mxu0 0.0
    %1929 = vmatpush1.msra.mxu0 0.0
    %1930 = vmatprep.subr.mxu0 0.0
    %1931 = vmatpush1.msra.mxu0 0.0
    %1932 = vmatprep.subr.mxu0 0.0
    %1933 = vmatpush1.msra.mxu0 0.0
    %1934 = vmatprep.subr.mxu0 0.0
    %1935 = vmatpush1.msra.mxu0 0.0
    %1936 = vmatprep.subr.mxu0 0.0
    %1937 = vmatpush1.msra.mxu0 0.0
    %1938 = vmatprep.subr.mxu0 0.0
    %1939 = vmatpush1.msra.mxu0 0.0
    %1940 = vmatprep.subr.mxu0 0.0
    %1941 = vmatpush1.msra.mxu0 0.0
    %1942 = vmatprep.subr.mxu0 0.0
    %1943 = vmatpush1.msra.mxu0 0.0
    %1944 = vmatprep.subr.mxu0 0.0
    %1945 = vmatpush1.msra.mxu0 0.0
    %1946 = vmatprep.subr.mxu0 0.0
    %1947 = vmatpush1.msra.mxu0 0.0
    %1948 = vmatprep.subr.mxu0 0.0
    %1949 = vmatpush1.msra.mxu0 0.0
    %1950 = vmatprep.subr.mxu0 0.0
    %1951 = vmatpush1.msra.mxu0 0.0
    %1952 = vmatprep.subr.mxu0 0.0
    %1953 = vmatpush1.msra.mxu0 0.0
    %1954 = vmatprep.subr.mxu0 0.0
    %1955 = vmatpush1.msra.mxu0 0.0
    %1956 = vmatprep.mubr.f32.mxu0 0.0
    %v1957 = vand.u32 %v1615, 4294901760
    %v1958 = vsub.f32 %v1615, %v1957
    %1959 = vmatmul.mubr.f32.gmra.mrb[0].mxu0 %v1958
    %v1960 = vpop.f32.mrb[0].mxu0
    %v1961 = vadd.f32 %v1851, %v1960
    %v1962 = vpop.f32.mrb[0].mxu0
    %v1963 = vadd.f32 %v1853, %v1962
    %1964 = vmatprep.mubr.f32.mxu0 0.0
    %v1965 = vand.u32 %v1618, 4294901760
    %v1966 = vsub.f32 %v1618, %v1965
    %1967 = vmatmul.mubr.f32.gmra.mrb[0].mxu0 %v1966
    %v1968 = vpop.f32.mrb[0].mxu0
    %v1969 = vadd.f32 %v1858, %v1968
    %v1970 = vpop.f32.mrb[0].mxu0
    %v1971 = vadd.f32 %v1860, %v1970
    %1972 = vmatprep.mubr.f32.mxu0 0.0
    %v1973 = vand.u32 %v1621, 4294901760
    %v1974 = vsub.f32 %v1621, %v1973
    %1975 = vmatmul.mubr.f32.gmra.mrb[0].mxu0 %v1974
    %v1976 = vpop.f32.mrb[0].mxu0
    %v1977 = vadd.f32 %v1865, %v1976
    %v1978 = vpop.f32.mrb[0].mxu0
    %v1979 = vadd.f32 %v1867, %v1978
    %1980 = vmatprep.mubr.f32.mxu0 0.0
    %v1981 = vand.u32 %v1624, 4294901760
    %v1982 = vsub.f32 %v1624, %v1981
    %1983 = vmatmul.mubr.f32.gmra.mrb[0].mxu0 %v1982
    %v1984 = vpop.f32.mrb[0].mxu0
    %v1985 = vadd.f32 %v1872, %v1984
    %v1986 = vpop.f32.mrb[0].mxu0
    %v1987 = vadd.f32 %v1874, %v1986
    %1988 = vdwg.mxu0
    %v1989 = vand.u32 %v1569, 4294901760
    %1990 = vmatprep.subr.mxu0 %v1989
    %v1991 = vand.u32 %v1568, 4294901760
    %1992 = vmatpush1.msra.mxu0 %v1991
    %v1993 = vand.u32 %v1573, 4294901760
    %1994 = vmatprep.subr.mxu0 %v1993
    %v1995 = vand.u32 %v1572, 4294901760
    %1996 = vmatpush1.msra.mxu0 %v1995
    %v1997 = vand.u32 %v1577, 4294901760
    %1998 = vmatprep.subr.mxu0 %v1997
    %v1999 = vand.u32 %v1576, 4294901760
    %2000 = vmatpush1.msra.mxu0 %v1999
    %v2001 = vand.u32 %v1581, 4294901760
    %2002 = vmatprep.subr.mxu0 %v2001
    %v2003 = vand.u32 %v1580, 4294901760
    %2004 = vmatpush1.msra.mxu0 %v2003
    %2005 = vmatprep.subr.mxu0 0.0
    %2006 = vmatpush1.msra.mxu0 0.0
    %2007 = vmatprep.subr.mxu0 0.0
    %2008 = vmatpush1.msra.mxu0 0.0
    %2009 = vmatprep.subr.mxu0 0.0
    %2010 = vmatpush1.msra.mxu0 0.0
    %2011 = vmatprep.subr.mxu0 0.0
    %2012 = vmatpush1.msra.mxu0 0.0
    %2013 = vmatprep.subr.mxu0 0.0
    %2014 = vmatpush1.msra.mxu0 0.0
    %2015 = vmatprep.subr.mxu0 0.0
    %2016 = vmatpush1.msra.mxu0 0.0
    %2017 = vmatprep.subr.mxu0 0.0
    %2018 = vmatpush1.msra.mxu0 0.0
    %2019 = vmatprep.subr.mxu0 0.0
    %2020 = vmatpush1.msra.mxu0 0.0
    %2021 = vmatprep.subr.mxu0 0.0
    %2022 = vmatpush1.msra.mxu0 0.0
    %2023 = vmatprep.subr.mxu0 0.0
    %2024 = vmatpush1.msra.mxu0 0.0
    %2025 = vmatprep.subr.mxu0 0.0
    %2026 = vmatpush1.msra.mxu0 0.0
    %2027 = vmatprep.subr.mxu0 0.0
    %2028 = vmatpush1.msra.mxu0 0.0
    %2029 = vmatprep.subr.mxu0 0.0
    %2030 = vmatpush1.msra.mxu0 0.0
    %2031 = vmatprep.subr.mxu0 0.0
    %2032 = vmatpush1.msra.mxu0 0.0
    %2033 = vmatprep.subr.mxu0 0.0
    %2034 = vmatpush1.msra.mxu0 0.0
    %2035 = vmatprep.subr.mxu0 0.0
    %2036 = vmatpush1.msra.mxu0 0.0
    %2037 = vmatprep.subr.mxu0 0.0
    %2038 = vmatpush1.msra.mxu0 0.0
    %2039 = vmatprep.subr.mxu0 0.0
    %2040 = vmatpush1.msra.mxu0 0.0
    %2041 = vmatprep.subr.mxu0 0.0
    %2042 = vmatpush1.msra.mxu0 0.0
    %2043 = vmatprep.subr.mxu0 0.0
    %2044 = vmatpush1.msra.mxu0 0.0
    %2045 = vmatprep.subr.mxu0 0.0
    %2046 = vmatpush1.msra.mxu0 0.0
    %2047 = vmatprep.subr.mxu0 0.0
    %2048 = vmatpush1.msra.mxu0 0.0
    %2049 = vmatprep.subr.mxu0 0.0
    %2050 = vmatpush1.msra.mxu0 0.0
    %2051 = vmatprep.subr.mxu0 0.0
    %2052 = vmatpush1.msra.mxu0 0.0
    %2053 = vmatprep.subr.mxu0 0.0
    %2054 = vmatpush1.msra.mxu0 0.0
    %2055 = vmatprep.subr.mxu0 0.0
    %2056 = vmatpush1.msra.mxu0 0.0
    %2057 = vmatprep.subr.mxu0 0.0
    %2058 = vmatpush1.msra.mxu0 0.0
    %2059 = vmatprep.subr.mxu0 0.0
    %2060 = vmatpush1.msra.mxu0 0.0
    %2061 = vmatprep.mubr.f32.mxu0 0.0
    %v2062 = vand.u32 %v1615, 4294901760
    %v2063 = vsub.f32 %v1615, %v2062
    %v2064 = vand.u32 %v2063, 4294901760
    %2065 = vmatmul.mubr.f32.gmra.mrb[0].mxu0 %v2064
    %v2066 = vpop.f32.mrb[0].mxu0
    %v2067 = vadd.f32 %v1961, %v2066
    %v2068 = vpop.f32.mrb[0].mxu0
    %v2069 = vadd.f32 %v1963, %v2068
    %2070 = vmatprep.mubr.f32.mxu0 0.0
    %v2071 = vand.u32 %v1618, 4294901760
    %v2072 = vsub.f32 %v1618, %v2071
    %v2073 = vand.u32 %v2072, 4294901760
    %2074 = vmatmul.mubr.f32.gmra.mrb[0].mxu0 %v2073
    %v2075 = vpop.f32.mrb[0].mxu0
    %v2076 = vadd.f32 %v1969, %v2075
    %v2077 = vpop.f32.mrb[0].mxu0
    %v2078 = vadd.f32 %v1971, %v2077
    %2079 = vmatprep.mubr.f32.mxu0 0.0
    %v2080 = vand.u32 %v1621, 4294901760
    %v2081 = vsub.f32 %v1621, %v2080
    %v2082 = vand.u32 %v2081, 4294901760
    %2083 = vmatmul.mubr.f32.gmra.mrb[0].mxu0 %v2082
    %v2084 = vpop.f32.mrb[0].mxu0
    %v2085 = vadd.f32 %v1977, %v2084
    %v2086 = vpop.f32.mrb[0].mxu0
    %v2087 = vadd.f32 %v1979, %v2086
    %2088 = vmatprep.mubr.f32.mxu0 0.0
    %v2089 = vand.u32 %v1624, 4294901760
    %v2090 = vsub.f32 %v1624, %v2089
    %v2091 = vand.u32 %v2090, 4294901760
    %2092 = vmatmul.mubr.f32.gmra.mrb[0].mxu0 %v2091
    %v2093 = vpop.f32.mrb[0].mxu0
    %v2094 = vadd.f32 %v1985, %v2093
    %v2095 = vpop.f32.mrb[0].mxu0
    %v2096 = vadd.f32 %v1987, %v2095
    %2097 = vdwg.mxu0
    %v2098 = vand.u32 %v1569, 4294901760
    %v2099 = vsub.f32 %v1569, %v2098
    %v2100 = vand.u32 %v2099, 4294901760
    %2101 = vmatprep.subr.mxu0 %v2100
    %v2102 = vand.u32 %v1568, 4294901760
    %v2103 = vsub.f32 %v1568, %v2102
    %v2104 = vand.u32 %v2103, 4294901760
    %2105 = vmatpush1.msra.mxu0 %v2104
    %v2106 = vand.u32 %v1573, 4294901760
    %v2107 = vsub.f32 %v1573, %v2106
    %v2108 = vand.u32 %v2107, 4294901760
    %2109 = vmatprep.subr.mxu0 %v2108
    %v2110 = vand.u32 %v1572, 4294901760
    %v2111 = vsub.f32 %v1572, %v2110
    %v2112 = vand.u32 %v2111, 4294901760
    %2113 = vmatpush1.msra.mxu0 %v2112
    %v2114 = vand.u32 %v1577, 4294901760
    %v2115 = vsub.f32 %v1577, %v2114
    %v2116 = vand.u32 %v2115, 4294901760
    %2117 = vmatprep.subr.mxu0 %v2116
    %v2118 = vand.u32 %v1576, 4294901760
    %v2119 = vsub.f32 %v1576, %v2118
    %v2120 = vand.u32 %v2119, 4294901760
    %2121 = vmatpush1.msra.mxu0 %v2120
    %v2122 = vand.u32 %v1581, 4294901760
    %v2123 = vsub.f32 %v1581, %v2122
    %v2124 = vand.u32 %v2123, 4294901760
    %2125 = vmatprep.subr.mxu0 %v2124
    %v2126 = vand.u32 %v1580, 4294901760
    %v2127 = vsub.f32 %v1580, %v2126
    %v2128 = vand.u32 %v2127, 4294901760
    %2129 = vmatpush1.msra.mxu0 %v2128
    %2130 = vmatprep.subr.mxu0 0.0
    %2131 = vmatpush1.msra.mxu0 0.0
    %2132 = vmatprep.subr.mxu0 0.0
    %2133 = vmatpush1.msra.mxu0 0.0
    %2134 = vmatprep.subr.mxu0 0.0
    %2135 = vmatpush1.msra.mxu0 0.0
    %2136 = vmatprep.subr.mxu0 0.0
    %2137 = vmatpush1.msra.mxu0 0.0
    %2138 = vmatprep.subr.mxu0 0.0
    %2139 = vmatpush1.msra.mxu0 0.0
    %2140 = vmatprep.subr.mxu0 0.0
    %2141 = vmatpush1.msra.mxu0 0.0
    %2142 = vmatprep.subr.mxu0 0.0
    %2143 = vmatpush1.msra.mxu0 0.0
    %2144 = vmatprep.subr.mxu0 0.0
    %2145 = vmatpush1.msra.mxu0 0.0
    %2146 = vmatprep.subr.mxu0 0.0
    %2147 = vmatpush1.msra.mxu0 0.0
    %2148 = vmatprep.subr.mxu0 0.0
    %2149 = vmatpush1.msra.mxu0 0.0
    %2150 = vmatprep.subr.mxu0 0.0
    %2151 = vmatpush1.msra.mxu0 0.0
    %2152 = vmatprep.subr.mxu0 0.0
    %2153 = vmatpush1.msra.mxu0 0.0
    %2154 = vmatprep.subr.mxu0 0.0
    %2155 = vmatpush1.msra.mxu0 0.0
    %2156 = vmatprep.subr.mxu0 0.0
    %2157 = vmatpush1.msra.mxu0 0.0
    %2158 = vmatprep.subr.mxu0 0.0
    %2159 = vmatpush1.msra.mxu0 0.0
    %2160 = vmatprep.subr.mxu0 0.0
    %2161 = vmatpush1.msra.mxu0 0.0
    %2162 = vmatprep.subr.mxu0 0.0
    %2163 = vmatpush1.msra.mxu0 0.0
    %2164 = vmatprep.subr.mxu0 0.0
    %2165 = vmatpush1.msra.mxu0 0.0
    %2166 = vmatprep.subr.mxu0 0.0
    %2167 = vmatpush1.msra.mxu0 0.0
    %2168 = vmatprep.subr.mxu0 0.0
    %2169 = vmatpush1.msra.mxu0 0.0
    %2170 = vmatprep.subr.mxu0 0.0
    %2171 = vmatpush1.msra.mxu0 0.0
    %2172 = vmatprep.subr.mxu0 0.0
    %2173 = vmatpush1.msra.mxu0 0.0
    %2174 = vmatprep.subr.mxu0 0.0
    %2175 = vmatpush1.msra.mxu0 0.0
    %2176 = vmatprep.subr.mxu0 0.0
    %2177 = vmatpush1.msra.mxu0 0.0
    %2178 = vmatprep.subr.mxu0 0.0
    %2179 = vmatpush1.msra.mxu0 0.0
    %2180 = vmatprep.subr.mxu0 0.0
    %2181 = vmatpush1.msra.mxu0 0.0
    %2182 = vmatprep.subr.mxu0 0.0
    %2183 = vmatpush1.msra.mxu0 0.0
    %2184 = vmatprep.subr.mxu0 0.0
    %2185 = vmatpush1.msra.mxu0 0.0
    %2186 = vmatprep.mubr.f32.mxu0 0.0
    %v2187 = vand.u32 %v1615, 4294901760
    %2188 = vmatmul.mubr.f32.gmra.mrb[0].mxu0 %v2187
    %v2189 = vpop.f32.mrb[0].mxu0
    %v2190 = vadd.f32 %v2067, %v2189
    %v2191 = vpop.f32.mrb[0].mxu0
    %v2192 = vadd.f32 %v2069, %v2191
    %2193 = vmatprep.mubr.f32.mxu0 0.0
    %v2194 = vand.u32 %v1618, 4294901760
    %2195 = vmatmul.mubr.f32.gmra.mrb[0].mxu0 %v2194
    %v2196 = vpop.f32.mrb[0].mxu0
    %v2197 = vadd.f32 %v2076, %v2196
    %v2198 = vpop.f32.mrb[0].mxu0
    %v2199 = vadd.f32 %v2078, %v2198
    %2200 = vmatprep.mubr.f32.mxu0 0.0
    %v2201 = vand.u32 %v1621, 4294901760
    %2202 = vmatmul.mubr.f32.gmra.mrb[0].mxu0 %v2201
    %v2203 = vpop.f32.mrb[0].mxu0
    %v2204 = vadd.f32 %v2085, %v2203
    %v2205 = vpop.f32.mrb[0].mxu0
    %v2206 = vadd.f32 %v2087, %v2205
    %2207 = vmatprep.mubr.f32.mxu0 0.0
    %v2208 = vand.u32 %v1624, 4294901760
    %2209 = vmatmul.mubr.f32.gmra.mrb[0].mxu0 %v2208
    %v2210 = vpop.f32.mrb[0].mxu0
    %v2211 = vadd.f32 %v2094, %v2210
    %v2212 = vpop.f32.mrb[0].mxu0
    %v2213 = vadd.f32 %v2096, %v2212
    %2214 = vdwg.mxu0
    %v2215 = vand.u32 %v1569, 4294901760
    %2216 = vmatprep.subr.mxu0 %v2215
    %v2217 = vand.u32 %v1568, 4294901760
    %2218 = vmatpush1.msra.mxu0 %v2217
    %v2219 = vand.u32 %v1573, 4294901760
    %2220 = vmatprep.subr.mxu0 %v2219
    %v2221 = vand.u32 %v1572, 4294901760
    %2222 = vmatpush1.msra.mxu0 %v2221
    %v2223 = vand.u32 %v1577, 4294901760
    %2224 = vmatprep.subr.mxu0 %v2223
    %v2225 = vand.u32 %v1576, 4294901760
    %2226 = vmatpush1.msra.mxu0 %v2225
    %v2227 = vand.u32 %v1581, 4294901760
    %2228 = vmatprep.subr.mxu0 %v2227
    %v2229 = vand.u32 %v1580, 4294901760
    %2230 = vmatpush1.msra.mxu0 %v2229
    %2231 = vmatprep.subr.mxu0 0.0
    %2232 = vmatpush1.msra.mxu0 0.0
    %2233 = vmatprep.subr.mxu0 0.0
    %2234 = vmatpush1.msra.mxu0 0.0
    %2235 = vmatprep.subr.mxu0 0.0
    %2236 = vmatpush1.msra.mxu0 0.0
    %2237 = vmatprep.subr.mxu0 0.0
    %2238 = vmatpush1.msra.mxu0 0.0
    %2239 = vmatprep.subr.mxu0 0.0
    %2240 = vmatpush1.msra.mxu0 0.0
    %2241 = vmatprep.subr.mxu0 0.0
    %2242 = vmatpush1.msra.mxu0 0.0
    %2243 = vmatprep.subr.mxu0 0.0
    %2244 = vmatpush1.msra.mxu0 0.0
    %2245 = vmatprep.subr.mxu0 0.0
    %2246 = vmatpush1.msra.mxu0 0.0
    %2247 = vmatprep.subr.mxu0 0.0
    %2248 = vmatpush1.msra.mxu0 0.0
    %2249 = vmatprep.subr.mxu0 0.0
    %2250 = vmatpush1.msra.mxu0 0.0
    %2251 = vmatprep.subr.mxu0 0.0
    %2252 = vmatpush1.msra.mxu0 0.0
    %2253 = vmatprep.subr.mxu0 0.0
    %2254 = vmatpush1.msra.mxu0 0.0
    %2255 = vmatprep.subr.mxu0 0.0
    %2256 = vmatpush1.msra.mxu0 0.0
    %2257 = vmatprep.subr.mxu0 0.0
    %2258 = vmatpush1.msra.mxu0 0.0
    %2259 = vmatprep.subr.mxu0 0.0
    %2260 = vmatpush1.msra.mxu0 0.0
    %2261 = vmatprep.subr.mxu0 0.0
    %2262 = vmatpush1.msra.mxu0 0.0
    %2263 = vmatprep.subr.mxu0 0.0
    %2264 = vmatpush1.msra.mxu0 0.0
    %2265 = vmatprep.subr.mxu0 0.0
    %2266 = vmatpush1.msra.mxu0 0.0
    %2267 = vmatprep.subr.mxu0 0.0
    %2268 = vmatpush1.msra.mxu0 0.0
    %2269 = vmatprep.subr.mxu0 0.0
    %2270 = vmatpush1.msra.mxu0 0.0
    %2271 = vmatprep.subr.mxu0 0.0
    %2272 = vmatpush1.msra.mxu0 0.0
    %2273 = vmatprep.subr.mxu0 0.0
    %2274 = vmatpush1.msra.mxu0 0.0
    %2275 = vmatprep.subr.mxu0 0.0
    %2276 = vmatpush1.msra.mxu0 0.0
    %2277 = vmatprep.subr.mxu0 0.0
    %2278 = vmatpush1.msra.mxu0 0.0
    %2279 = vmatprep.subr.mxu0 0.0
    %2280 = vmatpush1.msra.mxu0 0.0
    %2281 = vmatprep.subr.mxu0 0.0
    %2282 = vmatpush1.msra.mxu0 0.0
    %2283 = vmatprep.subr.mxu0 0.0
    %2284 = vmatpush1.msra.mxu0 0.0
    %2285 = vmatprep.subr.mxu0 0.0
    %2286 = vmatpush1.msra.mxu0 0.0
    %2287 = vmatprep.mubr.f32.mxu0 0.0
    %v2288 = vand.u32 %v1615, 4294901760
    %2289 = vmatmul.mubr.f32.gmra.mrb[0].mxu0 %v2288
    %v2290 = vpop.f32.mrb[0].mxu0
    %v2291 = vadd.f32 %v2190, %v2290
    %v2292 = vpop.f32.mrb[0].mxu0
    %v2293 = vadd.f32 %v2192, %v2292
    %2294 = vmatprep.mubr.f32.mxu0 0.0
    %v2295 = vand.u32 %v1618, 4294901760
    %2296 = vmatmul.mubr.f32.gmra.mrb[0].mxu0 %v2295
    %v2297 = vpop.f32.mrb[0].mxu0
    %v2298 = vadd.f32 %v2197, %v2297
    %v2299 = vpop.f32.mrb[0].mxu0
    %v2300 = vadd.f32 %v2199, %v2299
    %2301 = vmatprep.mubr.f32.mxu0 0.0
    %v2302 = vand.u32 %v1621, 4294901760
    %2303 = vmatmul.mubr.f32.gmra.mrb[0].mxu0 %v2302
    %v2304 = vpop.f32.mrb[0].mxu0
    %v2305 = vadd.f32 %v2204, %v2304
    %v2306 = vpop.f32.mrb[0].mxu0
    %v2307 = vadd.f32 %v2206, %v2306
    %2308 = vmatprep.mubr.f32.mxu0 0.0
    %v2309 = vand.u32 %v1624, 4294901760
    %2310 = vmatmul.mubr.f32.gmra.mrb[0].mxu0 %v2309
    %v2311 = vpop.f32.mrb[0].mxu0
    %v2312 = vadd.f32 %v2211, %v2311
    %v2313 = vpop.f32.mrb[0].mxu0
    %v2314 = vadd.f32 %v2213, %v2313
    %2315 = vdwg.mxu0
    %v2316 = vand.u32 %v1571, 4294901760
    %2317 = vmatprep.subr.mxu0 %v2316
    %v2318 = vand.u32 %v1570, 4294901760
    %2319 = vmatpush1.msra.mxu0 %v2318
    %v2320 = vand.u32 %v1575, 4294901760
    %2321 = vmatprep.subr.mxu0 %v2320
    %v2322 = vand.u32 %v1574, 4294901760
    %2323 = vmatpush1.msra.mxu0 %v2322
    %v2324 = vand.u32 %v1579, 4294901760
    %2325 = vmatprep.subr.mxu0 %v2324
    %v2326 = vand.u32 %v1578, 4294901760
    %2327 = vmatpush1.msra.mxu0 %v2326
    %v2328 = vand.u32 %v1583, 4294901760
    %2329 = vmatprep.subr.mxu0 %v2328
    %v2330 = vand.u32 %v1582, 4294901760
    %2331 = vmatpush1.msra.mxu0 %v2330
    %2332 = vmatprep.subr.mxu0 0.0
    %2333 = vmatpush1.msra.mxu0 0.0
    %2334 = vmatprep.subr.mxu0 0.0
    %2335 = vmatpush1.msra.mxu0 0.0
    %2336 = vmatprep.subr.mxu0 0.0
    %2337 = vmatpush1.msra.mxu0 0.0
    %2338 = vmatprep.subr.mxu0 0.0
    %2339 = vmatpush1.msra.mxu0 0.0
    %2340 = vmatprep.subr.mxu0 0.0
    %2341 = vmatpush1.msra.mxu0 0.0
    %2342 = vmatprep.subr.mxu0 0.0
    %2343 = vmatpush1.msra.mxu0 0.0
    %2344 = vmatprep.subr.mxu0 0.0
    %2345 = vmatpush1.msra.mxu0 0.0
    %2346 = vmatprep.subr.mxu0 0.0
    %2347 = vmatpush1.msra.mxu0 0.0
    %2348 = vmatprep.subr.mxu0 0.0
    %2349 = vmatpush1.msra.mxu0 0.0
    %2350 = vmatprep.subr.mxu0 0.0
    %2351 = vmatpush1.msra.mxu0 0.0
    %2352 = vmatprep.subr.mxu0 0.0
    %2353 = vmatpush1.msra.mxu0 0.0
    %2354 = vmatprep.subr.mxu0 0.0
    %2355 = vmatpush1.msra.mxu0 0.0
    %2356 = vmatprep.subr.mxu0 0.0
    %2357 = vmatpush1.msra.mxu0 0.0
    %2358 = vmatprep.subr.mxu0 0.0
    %2359 = vmatpush1.msra.mxu0 0.0
    %2360 = vmatprep.subr.mxu0 0.0
    %2361 = vmatpush1.msra.mxu0 0.0
    %2362 = vmatprep.subr.mxu0 0.0
    %2363 = vmatpush1.msra.mxu0 0.0
    %2364 = vmatprep.subr.mxu0 0.0
    %2365 = vmatpush1.msra.mxu0 0.0
    %2366 = vmatprep.subr.mxu0 0.0
    %2367 = vmatpush1.msra.mxu0 0.0
    %2368 = vmatprep.subr.mxu0 0.0
    %2369 = vmatpush1.msra.mxu0 0.0
    %2370 = vmatprep.subr.mxu0 0.0
    %2371 = vmatpush1.msra.mxu0 0.0
    %2372 = vmatprep.subr.mxu0 0.0
    %2373 = vmatpush1.msra.mxu0 0.0
    %2374 = vmatprep.subr.mxu0 0.0
    %2375 = vmatpush1.msra.mxu0 0.0
    %2376 = vmatprep.subr.mxu0 0.0
    %2377 = vmatpush1.msra.mxu0 0.0
    %2378 = vmatprep.subr.mxu0 0.0
    %2379 = vmatpush1.msra.mxu0 0.0
    %2380 = vmatprep.subr.mxu0 0.0
    %2381 = vmatpush1.msra.mxu0 0.0
    %2382 = vmatprep.subr.mxu0 0.0
    %2383 = vmatpush1.msra.mxu0 0.0
    %2384 = vmatprep.subr.mxu0 0.0
    %2385 = vmatpush1.msra.mxu0 0.0
    %2386 = vmatprep.subr.mxu0 0.0
    %2387 = vmatpush1.msra.mxu0 0.0
    %2388 = vmatprep.mubr.f32.mxu0 0.0
    %v2389 = vand.u32 %v1615, 4294901760
    %v2390 = vsub.f32 %v1615, %v2389
    %v2391 = vand.u32 %v2390, 4294901760
    %v2392 = vsub.f32 %v2390, %v2391
    %v2393 = vand.u32 %v2392, 4294901760
    %2394 = vmatmul.mubr.f32.gmra.mrb[0].mxu0 %v2393
    %v2395 = vpop.f32.mrb[0].mxu0
    %v2396 = vadd.f32 %v1597, %v2395
    %v2397 = vpop.f32.mrb[0].mxu0
    %v2398 = vadd.f32 %v1597, %v2397
    %2399 = vmatprep.mubr.f32.mxu0 0.0
    %v2400 = vand.u32 %v1618, 4294901760
    %v2401 = vsub.f32 %v1618, %v2400
    %v2402 = vand.u32 %v2401, 4294901760
    %v2403 = vsub.f32 %v2401, %v2402
    %v2404 = vand.u32 %v2403, 4294901760
    %2405 = vmatmul.mubr.f32.gmra.mrb[0].mxu0 %v2404
    %v2406 = vpop.f32.mrb[0].mxu0
    %v2407 = vadd.f32 %v1602, %v2406
    %v2408 = vpop.f32.mrb[0].mxu0
    %v2409 = vadd.f32 %v1602, %v2408
    %2410 = vmatprep.mubr.f32.mxu0 0.0
    %v2411 = vand.u32 %v1621, 4294901760
    %v2412 = vsub.f32 %v1621, %v2411
    %v2413 = vand.u32 %v2412, 4294901760
    %v2414 = vsub.f32 %v2412, %v2413
    %v2415 = vand.u32 %v2414, 4294901760
    %2416 = vmatmul.mubr.f32.gmra.mrb[0].mxu0 %v2415
    %v2417 = vpop.f32.mrb[0].mxu0
    %v2418 = vadd.f32 %v1607, %v2417
    %v2419 = vpop.f32.mrb[0].mxu0
    %v2420 = vadd.f32 %v1607, %v2419
    %2421 = vmatprep.mubr.f32.mxu0 0.0
    %v2422 = vand.u32 %v1624, 4294901760
    %v2423 = vsub.f32 %v1624, %v2422
    %v2424 = vand.u32 %v2423, 4294901760
    %v2425 = vsub.f32 %v2423, %v2424
    %v2426 = vand.u32 %v2425, 4294901760
    %2427 = vmatmul.mubr.f32.gmra.mrb[0].mxu0 %v2426
    %v2428 = vpop.f32.mrb[0].mxu0
    %v2429 = vadd.f32 %v1612, %v2428
    %v2430 = vpop.f32.mrb[0].mxu0
    %v2431 = vadd.f32 %v1612, %v2430
    %2432 = vdwg.mxu0
    %v2433 = vand.u32 %v1571, 4294901760
    %v2434 = vsub.f32 %v1571, %v2433
    %v2435 = vand.u32 %v2434, 4294901760
    %v2436 = vsub.f32 %v2434, %v2435
    %v2437 = vand.u32 %v2436, 4294901760
    %2438 = vmatprep.subr.mxu0 %v2437
    %v2439 = vand.u32 %v1570, 4294901760
    %v2440 = vsub.f32 %v1570, %v2439
    %v2441 = vand.u32 %v2440, 4294901760
    %v2442 = vsub.f32 %v2440, %v2441
    %v2443 = vand.u32 %v2442, 4294901760
    %2444 = vmatpush1.msra.mxu0 %v2443
    %v2445 = vand.u32 %v1575, 4294901760
    %v2446 = vsub.f32 %v1575, %v2445
    %v2447 = vand.u32 %v2446, 4294901760
    %v2448 = vsub.f32 %v2446, %v2447
    %v2449 = vand.u32 %v2448, 4294901760
    %2450 = vmatprep.subr.mxu0 %v2449
    %v2451 = vand.u32 %v1574, 4294901760
    %v2452 = vsub.f32 %v1574, %v2451
    %v2453 = vand.u32 %v2452, 4294901760
    %v2454 = vsub.f32 %v2452, %v2453
    %v2455 = vand.u32 %v2454, 4294901760
    %2456 = vmatpush1.msra.mxu0 %v2455
    %v2457 = vand.u32 %v1579, 4294901760
    %v2458 = vsub.f32 %v1579, %v2457
    %v2459 = vand.u32 %v2458, 4294901760
    %v2460 = vsub.f32 %v2458, %v2459
    %v2461 = vand.u32 %v2460, 4294901760
    %2462 = vmatprep.subr.mxu0 %v2461
    %v2463 = vand.u32 %v1578, 4294901760
    %v2464 = vsub.f32 %v1578, %v2463
    %v2465 = vand.u32 %v2464, 4294901760
    %v2466 = vsub.f32 %v2464, %v2465
    %v2467 = vand.u32 %v2466, 4294901760
    %2468 = vmatpush1.msra.mxu0 %v2467
    %v2469 = vand.u32 %v1583, 4294901760
    %v2470 = vsub.f32 %v1583, %v2469
    %v2471 = vand.u32 %v2470, 4294901760
    %v2472 = vsub.f32 %v2470, %v2471
    %v2473 = vand.u32 %v2472, 4294901760
    %2474 = vmatprep.subr.mxu0 %v2473
    %v2475 = vand.u32 %v1582, 4294901760
    %v2476 = vsub.f32 %v1582, %v2475
    %v2477 = vand.u32 %v2476, 4294901760
    %v2478 = vsub.f32 %v2476, %v2477
    %v2479 = vand.u32 %v2478, 4294901760
    %2480 = vmatpush1.msra.mxu0 %v2479
    %2481 = vmatprep.subr.mxu0 0.0
    %2482 = vmatpush1.msra.mxu0 0.0
    %2483 = vmatprep.subr.mxu0 0.0
    %2484 = vmatpush1.msra.mxu0 0.0
    %2485 = vmatprep.subr.mxu0 0.0
    %2486 = vmatpush1.msra.mxu0 0.0
    %2487 = vmatprep.subr.mxu0 0.0
    %2488 = vmatpush1.msra.mxu0 0.0
    %2489 = vmatprep.subr.mxu0 0.0
    %2490 = vmatpush1.msra.mxu0 0.0
    %2491 = vmatprep.subr.mxu0 0.0
    %2492 = vmatpush1.msra.mxu0 0.0
    %2493 = vmatprep.subr.mxu0 0.0
    %2494 = vmatpush1.msra.mxu0 0.0
    %2495 = vmatprep.subr.mxu0 0.0
    %2496 = vmatpush1.msra.mxu0 0.0
    %2497 = vmatprep.subr.mxu0 0.0
    %2498 = vmatpush1.msra.mxu0 0.0
    %2499 = vmatprep.subr.mxu0 0.0
    %2500 = vmatpush1.msra.mxu0 0.0
    %2501 = vmatprep.subr.mxu0 0.0
    %2502 = vmatpush1.msra.mxu0 0.0
    %2503 = vmatprep.subr.mxu0 0.0
    %2504 = vmatpush1.msra.mxu0 0.0
    %2505 = vmatprep.subr.mxu0 0.0
    %2506 = vmatpush1.msra.mxu0 0.0
    %2507 = vmatprep.subr.mxu0 0.0
    %2508 = vmatpush1.msra.mxu0 0.0
    %2509 = vmatprep.subr.mxu0 0.0
    %2510 = vmatpush1.msra.mxu0 0.0
    %2511 = vmatprep.subr.mxu0 0.0
    %2512 = vmatpush1.msra.mxu0 0.0
    %2513 = vmatprep.subr.mxu0 0.0
    %2514 = vmatpush1.msra.mxu0 0.0
    %2515 = vmatprep.subr.mxu0 0.0
    %2516 = vmatpush1.msra.mxu0 0.0
    %2517 = vmatprep.subr.mxu0 0.0
    %2518 = vmatpush1.msra.mxu0 0.0
    %2519 = vmatprep.subr.mxu0 0.0
    %2520 = vmatpush1.msra.mxu0 0.0
    %2521 = vmatprep.subr.mxu0 0.0
    %2522 = vmatpush1.msra.mxu0 0.0
    %2523 = vmatprep.subr.mxu0 0.0
    %2524 = vmatpush1.msra.mxu0 0.0
    %2525 = vmatprep.subr.mxu0 0.0
    %2526 = vmatpush1.msra.mxu0 0.0
    %2527 = vmatprep.subr.mxu0 0.0
    %2528 = vmatpush1.msra.mxu0 0.0
    %2529 = vmatprep.subr.mxu0 0.0
    %2530 = vmatpush1.msra.mxu0 0.0
    %2531 = vmatprep.subr.mxu0 0.0
    %2532 = vmatpush1.msra.mxu0 0.0
    %2533 = vmatprep.subr.mxu0 0.0
    %2534 = vmatpush1.msra.mxu0 0.0
    %2535 = vmatprep.subr.mxu0 0.0
    %2536 = vmatpush1.msra.mxu0 0.0
    %2537 = vmatprep.mubr.f32.mxu0 0.0
    %v2538 = vand.u32 %v1615, 4294901760
    %2539 = vmatmul.mubr.f32.gmra.mrb[0].mxu0 %v2538
    %v2540 = vpop.f32.mrb[0].mxu0
    %v2541 = vadd.f32 %v2396, %v2540
    %v2542 = vpop.f32.mrb[0].mxu0
    %v2543 = vadd.f32 %v2398, %v2542
    %2544 = vmatprep.mubr.f32.mxu0 0.0
    %v2545 = vand.u32 %v1618, 4294901760
    %2546 = vmatmul.mubr.f32.gmra.mrb[0].mxu0 %v2545
    %v2547 = vpop.f32.mrb[0].mxu0
    %v2548 = vadd.f32 %v2407, %v2547
    %v2549 = vpop.f32.mrb[0].mxu0
    %v2550 = vadd.f32 %v2409, %v2549
    %2551 = vmatprep.mubr.f32.mxu0 0.0
    %v2552 = vand.u32 %v1621, 4294901760
    %2553 = vmatmul.mubr.f32.gmra.mrb[0].mxu0 %v2552
    %v2554 = vpop.f32.mrb[0].mxu0
    %v2555 = vadd.f32 %v2418, %v2554
    %v2556 = vpop.f32.mrb[0].mxu0
    %v2557 = vadd.f32 %v2420, %v2556
    %2558 = vmatprep.mubr.f32.mxu0 0.0
    %v2559 = vand.u32 %v1624, 4294901760
    %2560 = vmatmul.mubr.f32.gmra.mrb[0].mxu0 %v2559
    %v2561 = vpop.f32.mrb[0].mxu0
    %v2562 = vadd.f32 %v2429, %v2561
    %v2563 = vpop.f32.mrb[0].mxu0
    %v2564 = vadd.f32 %v2431, %v2563
    %2565 = vdwg.mxu0
    %v2566 = vand.u32 %v1571, 4294901760
    %v2567 = vsub.f32 %v1571, %v2566
    %2568 = vmatprep.subr.mxu0 %v2567
    %v2569 = vand.u32 %v1570, 4294901760
    %v2570 = vsub.f32 %v1570, %v2569
    %2571 = vmatpush1.msra.mxu0 %v2570
    %v2572 = vand.u32 %v1575, 4294901760
    %v2573 = vsub.f32 %v1575, %v2572
    %2574 = vmatprep.subr.mxu0 %v2573
    %v2575 = vand.u32 %v1574, 4294901760
    %v2576 = vsub.f32 %v1574, %v2575
    %2577 = vmatpush1.msra.mxu0 %v2576
    %v2578 = vand.u32 %v1579, 4294901760
    %v2579 = vsub.f32 %v1579, %v2578
    %2580 = vmatprep.subr.mxu0 %v2579
    %v2581 = vand.u32 %v1578, 4294901760
    %v2582 = vsub.f32 %v1578, %v2581
    %2583 = vmatpush1.msra.mxu0 %v2582
    %v2584 = vand.u32 %v1583, 4294901760
    %v2585 = vsub.f32 %v1583, %v2584
    %2586 = vmatprep.subr.mxu0 %v2585
    %v2587 = vand.u32 %v1582, 4294901760
    %v2588 = vsub.f32 %v1582, %v2587
    %2589 = vmatpush1.msra.mxu0 %v2588
    %2590 = vmatprep.subr.mxu0 0.0
    %2591 = vmatpush1.msra.mxu0 0.0
    %2592 = vmatprep.subr.mxu0 0.0
    %2593 = vmatpush1.msra.mxu0 0.0
    %2594 = vmatprep.subr.mxu0 0.0
    %2595 = vmatpush1.msra.mxu0 0.0
    %2596 = vmatprep.subr.mxu0 0.0
    %2597 = vmatpush1.msra.mxu0 0.0
    %2598 = vmatprep.subr.mxu0 0.0
    %2599 = vmatpush1.msra.mxu0 0.0
    %2600 = vmatprep.subr.mxu0 0.0
    %2601 = vmatpush1.msra.mxu0 0.0
    %2602 = vmatprep.subr.mxu0 0.0
    %2603 = vmatpush1.msra.mxu0 0.0
    %2604 = vmatprep.subr.mxu0 0.0
    %2605 = vmatpush1.msra.mxu0 0.0
    %2606 = vmatprep.subr.mxu0 0.0
    %2607 = vmatpush1.msra.mxu0 0.0
    %2608 = vmatprep.subr.mxu0 0.0
    %2609 = vmatpush1.msra.mxu0 0.0
    %2610 = vmatprep.subr.mxu0 0.0
    %2611 = vmatpush1.msra.mxu0 0.0
    %2612 = vmatprep.subr.mxu0 0.0
    %2613 = vmatpush1.msra.mxu0 0.0
    %2614 = vmatprep.subr.mxu0 0.0
    %2615 = vmatpush1.msra.mxu0 0.0
    %2616 = vmatprep.subr.mxu0 0.0
    %2617 = vmatpush1.msra.mxu0 0.0
    %2618 = vmatprep.subr.mxu0 0.0
    %2619 = vmatpush1.msra.mxu0 0.0
    %2620 = vmatprep.subr.mxu0 0.0
    %2621 = vmatpush1.msra.mxu0 0.0
    %2622 = vmatprep.subr.mxu0 0.0
    %2623 = vmatpush1.msra.mxu0 0.0
    %2624 = vmatprep.subr.mxu0 0.0
    %2625 = vmatpush1.msra.mxu0 0.0
    %2626 = vmatprep.subr.mxu0 0.0
    %2627 = vmatpush1.msra.mxu0 0.0
    %2628 = vmatprep.subr.mxu0 0.0
    %2629 = vmatpush1.msra.mxu0 0.0
    %2630 = vmatprep.subr.mxu0 0.0
    %2631 = vmatpush1.msra.mxu0 0.0
    %2632 = vmatprep.subr.mxu0 0.0
    %2633 = vmatpush1.msra.mxu0 0.0
    %2634 = vmatprep.subr.mxu0 0.0
    %2635 = vmatpush1.msra.mxu0 0.0
    %2636 = vmatprep.subr.mxu0 0.0
    %2637 = vmatpush1.msra.mxu0 0.0
    %2638 = vmatprep.subr.mxu0 0.0
    %2639 = vmatpush1.msra.mxu0 0.0
    %2640 = vmatprep.subr.mxu0 0.0
    %2641 = vmatpush1.msra.mxu0 0.0
    %2642 = vmatprep.subr.mxu0 0.0
    %2643 = vmatpush1.msra.mxu0 0.0
    %2644 = vmatprep.subr.mxu0 0.0
    %2645 = vmatpush1.msra.mxu0 0.0
    %2646 = vmatprep.mubr.f32.mxu0 0.0
    %v2647 = vand.u32 %v1615, 4294901760
    %v2648 = vsub.f32 %v1615, %v2647
    %2649 = vmatmul.mubr.f32.gmra.mrb[0].mxu0 %v2648
    %v2650 = vpop.f32.mrb[0].mxu0
    %v2651 = vadd.f32 %v2541, %v2650
    %v2652 = vpop.f32.mrb[0].mxu0
    %v2653 = vadd.f32 %v2543, %v2652
    %2654 = vmatprep.mubr.f32.mxu0 0.0
    %v2655 = vand.u32 %v1618, 4294901760
    %v2656 = vsub.f32 %v1618, %v2655
    %2657 = vmatmul.mubr.f32.gmra.mrb[0].mxu0 %v2656
    %v2658 = vpop.f32.mrb[0].mxu0
    %v2659 = vadd.f32 %v2548, %v2658
    %v2660 = vpop.f32.mrb[0].mxu0
    %v2661 = vadd.f32 %v2550, %v2660
    %2662 = vmatprep.mubr.f32.mxu0 0.0
    %v2663 = vand.u32 %v1621, 4294901760
    %v2664 = vsub.f32 %v1621, %v2663
    %2665 = vmatmul.mubr.f32.gmra.mrb[0].mxu0 %v2664
    %v2666 = vpop.f32.mrb[0].mxu0
    %v2667 = vadd.f32 %v2555, %v2666
    %v2668 = vpop.f32.mrb[0].mxu0
    %v2669 = vadd.f32 %v2557, %v2668
    %2670 = vmatprep.mubr.f32.mxu0 0.0
    %v2671 = vand.u32 %v1624, 4294901760
    %v2672 = vsub.f32 %v1624, %v2671
    %2673 = vmatmul.mubr.f32.gmra.mrb[0].mxu0 %v2672
    %v2674 = vpop.f32.mrb[0].mxu0
    %v2675 = vadd.f32 %v2562, %v2674
    %v2676 = vpop.f32.mrb[0].mxu0
    %v2677 = vadd.f32 %v2564, %v2676
    %2678 = vdwg.mxu0
    %v2679 = vand.u32 %v1571, 4294901760
    %2680 = vmatprep.subr.mxu0 %v2679
    %v2681 = vand.u32 %v1570, 4294901760
    %2682 = vmatpush1.msra.mxu0 %v2681
    %v2683 = vand.u32 %v1575, 4294901760
    %2684 = vmatprep.subr.mxu0 %v2683
    %v2685 = vand.u32 %v1574, 4294901760
    %2686 = vmatpush1.msra.mxu0 %v2685
    %v2687 = vand.u32 %v1579, 4294901760
    %2688 = vmatprep.subr.mxu0 %v2687
    %v2689 = vand.u32 %v1578, 4294901760
    %2690 = vmatpush1.msra.mxu0 %v2689
    %v2691 = vand.u32 %v1583, 4294901760
    %2692 = vmatprep.subr.mxu0 %v2691
    %v2693 = vand.u32 %v1582, 4294901760
    %2694 = vmatpush1.msra.mxu0 %v2693
    %2695 = vmatprep.subr.mxu0 0.0
    %2696 = vmatpush1.msra.mxu0 0.0
    %2697 = vmatprep.subr.mxu0 0.0
    %2698 = vmatpush1.msra.mxu0 0.0
    %2699 = vmatprep.subr.mxu0 0.0
    %2700 = vmatpush1.msra.mxu0 0.0
    %2701 = vmatprep.subr.mxu0 0.0
    %2702 = vmatpush1.msra.mxu0 0.0
    %2703 = vmatprep.subr.mxu0 0.0
    %2704 = vmatpush1.msra.mxu0 0.0
    %2705 = vmatprep.subr.mxu0 0.0
    %2706 = vmatpush1.msra.mxu0 0.0
    %2707 = vmatprep.subr.mxu0 0.0
    %2708 = vmatpush1.msra.mxu0 0.0
    %2709 = vmatprep.subr.mxu0 0.0
    %2710 = vmatpush1.msra.mxu0 0.0
    %2711 = vmatprep.subr.mxu0 0.0
    %2712 = vmatpush1.msra.mxu0 0.0
    %2713 = vmatprep.subr.mxu0 0.0
    %2714 = vmatpush1.msra.mxu0 0.0
    %2715 = vmatprep.subr.mxu0 0.0
    %2716 = vmatpush1.msra.mxu0 0.0
    %2717 = vmatprep.subr.mxu0 0.0
    %2718 = vmatpush1.msra.mxu0 0.0
    %2719 = vmatprep.subr.mxu0 0.0
    %2720 = vmatpush1.msra.mxu0 0.0
    %2721 = vmatprep.subr.mxu0 0.0
    %2722 = vmatpush1.msra.mxu0 0.0
    %2723 = vmatprep.subr.mxu0 0.0
    %2724 = vmatpush1.msra.mxu0 0.0
    %2725 = vmatprep.subr.mxu0 0.0
    %2726 = vmatpush1.msra.mxu0 0.0
    %2727 = vmatprep.subr.mxu0 0.0
    %2728 = vmatpush1.msra.mxu0 0.0
    %2729 = vmatprep.subr.mxu0 0.0
    %2730 = vmatpush1.msra.mxu0 0.0
    %2731 = vmatprep.subr.mxu0 0.0
    %2732 = vmatpush1.msra.mxu0 0.0
    %2733 = vmatprep.subr.mxu0 0.0
    %2734 = vmatpush1.msra.mxu0 0.0
    %2735 = vmatprep.subr.mxu0 0.0
    %2736 = vmatpush1.msra.mxu0 0.0
    %2737 = vmatprep.subr.mxu0 0.0
    %2738 = vmatpush1.msra.mxu0 0.0
    %2739 = vmatprep.subr.mxu0 0.0
    %2740 = vmatpush1.msra.mxu0 0.0
    %2741 = vmatprep.subr.mxu0 0.0
    %2742 = vmatpush1.msra.mxu0 0.0
    %2743 = vmatprep.subr.mxu0 0.0
    %2744 = vmatpush1.msra.mxu0 0.0
    %2745 = vmatprep.subr.mxu0 0.0
    %2746 = vmatpush1.msra.mxu0 0.0
    %2747 = vmatprep.subr.mxu0 0.0
    %2748 = vmatpush1.msra.mxu0 0.0
    %2749 = vmatprep.subr.mxu0 0.0
    %2750 = vmatpush1.msra.mxu0 0.0
    %2751 = vmatprep.mubr.f32.mxu0 0.0
    %v2752 = vand.u32 %v1615, 4294901760
    %v2753 = vsub.f32 %v1615, %v2752
    %v2754 = vand.u32 %v2753, 4294901760
    %2755 = vmatmul.mubr.f32.gmra.mrb[0].mxu0 %v2754
    %v2756 = vpop.f32.mrb[0].mxu0
    %v2757 = vadd.f32 %v2651, %v2756
    %v2758 = vpop.f32.mrb[0].mxu0
    %v2759 = vadd.f32 %v2653, %v2758
    %2760 = vmatprep.mubr.f32.mxu0 0.0
    %v2761 = vand.u32 %v1618, 4294901760
    %v2762 = vsub.f32 %v1618, %v2761
    %v2763 = vand.u32 %v2762, 4294901760
    %2764 = vmatmul.mubr.f32.gmra.mrb[0].mxu0 %v2763
    %v2765 = vpop.f32.mrb[0].mxu0
    %v2766 = vadd.f32 %v2659, %v2765
    %v2767 = vpop.f32.mrb[0].mxu0
    %v2768 = vadd.f32 %v2661, %v2767
    %2769 = vmatprep.mubr.f32.mxu0 0.0
    %v2770 = vand.u32 %v1621, 4294901760
    %v2771 = vsub.f32 %v1621, %v2770
    %v2772 = vand.u32 %v2771, 4294901760
    %2773 = vmatmul.mubr.f32.gmra.mrb[0].mxu0 %v2772
    %v2774 = vpop.f32.mrb[0].mxu0
    %v2775 = vadd.f32 %v2667, %v2774
    %v2776 = vpop.f32.mrb[0].mxu0
    %v2777 = vadd.f32 %v2669, %v2776
    %2778 = vmatprep.mubr.f32.mxu0 0.0
    %v2779 = vand.u32 %v1624, 4294901760
    %v2780 = vsub.f32 %v1624, %v2779
    %v2781 = vand.u32 %v2780, 4294901760
    %2782 = vmatmul.mubr.f32.gmra.mrb[0].mxu0 %v2781
    %v2783 = vpop.f32.mrb[0].mxu0
    %v2784 = vadd.f32 %v2675, %v2783
    %v2785 = vpop.f32.mrb[0].mxu0
    %v2786 = vadd.f32 %v2677, %v2785
    %2787 = vdwg.mxu0
    %v2788 = vand.u32 %v1571, 4294901760
    %v2789 = vsub.f32 %v1571, %v2788
    %v2790 = vand.u32 %v2789, 4294901760
    %2791 = vmatprep.subr.mxu0 %v2790
    %v2792 = vand.u32 %v1570, 4294901760
    %v2793 = vsub.f32 %v1570, %v2792
    %v2794 = vand.u32 %v2793, 4294901760
    %2795 = vmatpush1.msra.mxu0 %v2794
    %v2796 = vand.u32 %v1575, 4294901760
    %v2797 = vsub.f32 %v1575, %v2796
    %v2798 = vand.u32 %v2797, 4294901760
    %2799 = vmatprep.subr.mxu0 %v2798
    %v2800 = vand.u32 %v1574, 4294901760
    %v2801 = vsub.f32 %v1574, %v2800
    %v2802 = vand.u32 %v2801, 4294901760
    %2803 = vmatpush1.msra.mxu0 %v2802
    %v2804 = vand.u32 %v1579, 4294901760
    %v2805 = vsub.f32 %v1579, %v2804
    %v2806 = vand.u32 %v2805, 4294901760
    %2807 = vmatprep.subr.mxu0 %v2806
    %v2808 = vand.u32 %v1578, 4294901760
    %v2809 = vsub.f32 %v1578, %v2808
    %v2810 = vand.u32 %v2809, 4294901760
    %2811 = vmatpush1.msra.mxu0 %v2810
    %v2812 = vand.u32 %v1583, 4294901760
    %v2813 = vsub.f32 %v1583, %v2812
    %v2814 = vand.u32 %v2813, 4294901760
    %2815 = vmatprep.subr.mxu0 %v2814
    %v2816 = vand.u32 %v1582, 4294901760
    %v2817 = vsub.f32 %v1582, %v2816
    %v2818 = vand.u32 %v2817, 4294901760
    %2819 = vmatpush1.msra.mxu0 %v2818
    %2820 = vmatprep.subr.mxu0 0.0
    %2821 = vmatpush1.msra.mxu0 0.0
    %2822 = vmatprep.subr.mxu0 0.0
    %2823 = vmatpush1.msra.mxu0 0.0
    %2824 = vmatprep.subr.mxu0 0.0
    %2825 = vmatpush1.msra.mxu0 0.0
    %2826 = vmatprep.subr.mxu0 0.0
    %2827 = vmatpush1.msra.mxu0 0.0
    %2828 = vmatprep.subr.mxu0 0.0
    %2829 = vmatpush1.msra.mxu0 0.0
    %2830 = vmatprep.subr.mxu0 0.0
    %2831 = vmatpush1.msra.mxu0 0.0
    %2832 = vmatprep.subr.mxu0 0.0
    %2833 = vmatpush1.msra.mxu0 0.0
    %2834 = vmatprep.subr.mxu0 0.0
    %2835 = vmatpush1.msra.mxu0 0.0
    %2836 = vmatprep.subr.mxu0 0.0
    %2837 = vmatpush1.msra.mxu0 0.0
    %2838 = vmatprep.subr.mxu0 0.0
    %2839 = vmatpush1.msra.mxu0 0.0
    %2840 = vmatprep.subr.mxu0 0.0
    %2841 = vmatpush1.msra.mxu0 0.0
    %2842 = vmatprep.subr.mxu0 0.0
    %2843 = vmatpush1.msra.mxu0 0.0
    %2844 = vmatprep.subr.mxu0 0.0
    %2845 = vmatpush1.msra.mxu0 0.0
    %2846 = vmatprep.subr.mxu0 0.0
    %2847 = vmatpush1.msra.mxu0 0.0
    %2848 = vmatprep.subr.mxu0 0.0
    %2849 = vmatpush1.msra.mxu0 0.0
    %2850 = vmatprep.subr.mxu0 0.0
    %2851 = vmatpush1.msra.mxu0 0.0
    %2852 = vmatprep.subr.mxu0 0.0
    %2853 = vmatpush1.msra.mxu0 0.0
    %2854 = vmatprep.subr.mxu0 0.0
    %2855 = vmatpush1.msra.mxu0 0.0
    %2856 = vmatprep.subr.mxu0 0.0
    %2857 = vmatpush1.msra.mxu0 0.0
    %2858 = vmatprep.subr.mxu0 0.0
    %2859 = vmatpush1.msra.mxu0 0.0
    %2860 = vmatprep.subr.mxu0 0.0
    %2861 = vmatpush1.msra.mxu0 0.0
    %2862 = vmatprep.subr.mxu0 0.0
    %2863 = vmatpush1.msra.mxu0 0.0
    %2864 = vmatprep.subr.mxu0 0.0
    %2865 = vmatpush1.msra.mxu0 0.0
    %2866 = vmatprep.subr.mxu0 0.0
    %2867 = vmatpush1.msra.mxu0 0.0
    %2868 = vmatprep.subr.mxu0 0.0
    %2869 = vmatpush1.msra.mxu0 0.0
    %2870 = vmatprep.subr.mxu0 0.0
    %2871 = vmatpush1.msra.mxu0 0.0
    %2872 = vmatprep.subr.mxu0 0.0
    %2873 = vmatpush1.msra.mxu0 0.0
    %2874 = vmatprep.subr.mxu0 0.0
    %2875 = vmatpush1.msra.mxu0 0.0
    %2876 = vmatprep.mubr.f32.mxu0 0.0
    %v2877 = vand.u32 %v1615, 4294901760
    %2878 = vmatmul.mubr.f32.gmra.mrb[0].mxu0 %v2877
    %v2879 = vpop.f32.mrb[0].mxu0
    %v2880 = vadd.f32 %v2757, %v2879
    %v2881 = vpop.f32.mrb[0].mxu0
    %v2882 = vadd.f32 %v2759, %v2881
    %2883 = vmatprep.mubr.f32.mxu0 0.0
    %v2884 = vand.u32 %v1618, 4294901760
    %2885 = vmatmul.mubr.f32.gmra.mrb[0].mxu0 %v2884
    %v2886 = vpop.f32.mrb[0].mxu0
    %v2887 = vadd.f32 %v2766, %v2886
    %v2888 = vpop.f32.mrb[0].mxu0
    %v2889 = vadd.f32 %v2768, %v2888
    %2890 = vmatprep.mubr.f32.mxu0 0.0
    %v2891 = vand.u32 %v1621, 4294901760
    %2892 = vmatmul.mubr.f32.gmra.mrb[0].mxu0 %v2891
    %v2893 = vpop.f32.mrb[0].mxu0
    %v2894 = vadd.f32 %v2775, %v2893
    %v2895 = vpop.f32.mrb[0].mxu0
    %v2896 = vadd.f32 %v2777, %v2895
    %2897 = vmatprep.mubr.f32.mxu0 0.0
    %v2898 = vand.u32 %v1624, 4294901760
    %2899 = vmatmul.mubr.f32.gmra.mrb[0].mxu0 %v2898
    %v2900 = vpop.f32.mrb[0].mxu0
    %v2901 = vadd.f32 %v2784, %v2900
    %v2902 = vpop.f32.mrb[0].mxu0
    %v2903 = vadd.f32 %v2786, %v2902
    %2904 = vdwg.mxu0
    %v2905 = vand.u32 %v1571, 4294901760
    %2906 = vmatprep.subr.mxu0 %v2905
    %v2907 = vand.u32 %v1570, 4294901760
    %2908 = vmatpush1.msra.mxu0 %v2907
    %v2909 = vand.u32 %v1575, 4294901760
    %2910 = vmatprep.subr.mxu0 %v2909
    %v2911 = vand.u32 %v1574, 4294901760
    %2912 = vmatpush1.msra.mxu0 %v2911
    %v2913 = vand.u32 %v1579, 4294901760
    %2914 = vmatprep.subr.mxu0 %v2913
    %v2915 = vand.u32 %v1578, 4294901760
    %2916 = vmatpush1.msra.mxu0 %v2915
    %v2917 = vand.u32 %v1583, 4294901760
    %2918 = vmatprep.subr.mxu0 %v2917
    %v2919 = vand.u32 %v1582, 4294901760
    %2920 = vmatpush1.msra.mxu0 %v2919
    %2921 = vmatprep.subr.mxu0 0.0
    %2922 = vmatpush1.msra.mxu0 0.0
    %2923 = vmatprep.subr.mxu0 0.0
    %2924 = vmatpush1.msra.mxu0 0.0
    %2925 = vmatprep.subr.mxu0 0.0
    %2926 = vmatpush1.msra.mxu0 0.0
    %2927 = vmatprep.subr.mxu0 0.0
    %2928 = vmatpush1.msra.mxu0 0.0
    %2929 = vmatprep.subr.mxu0 0.0
    %2930 = vmatpush1.msra.mxu0 0.0
    %2931 = vmatprep.subr.mxu0 0.0
    %2932 = vmatpush1.msra.mxu0 0.0
    %2933 = vmatprep.subr.mxu0 0.0
    %2934 = vmatpush1.msra.mxu0 0.0
    %2935 = vmatprep.subr.mxu0 0.0
    %2936 = vmatpush1.msra.mxu0 0.0
    %2937 = vmatprep.subr.mxu0 0.0
    %2938 = vmatpush1.msra.mxu0 0.0
    %2939 = vmatprep.subr.mxu0 0.0
    %2940 = vmatpush1.msra.mxu0 0.0
    %2941 = vmatprep.subr.mxu0 0.0
    %2942 = vmatpush1.msra.mxu0 0.0
    %2943 = vmatprep.subr.mxu0 0.0
    %2944 = vmatpush1.msra.mxu0 0.0
    %2945 = vmatprep.subr.mxu0 0.0
    %2946 = vmatpush1.msra.mxu0 0.0
    %2947 = vmatprep.subr.mxu0 0.0
    %2948 = vmatpush1.msra.mxu0 0.0
    %2949 = vmatprep.subr.mxu0 0.0
    %2950 = vmatpush1.msra.mxu0 0.0
    %2951 = vmatprep.subr.mxu0 0.0
    %2952 = vmatpush1.msra.mxu0 0.0
    %2953 = vmatprep.subr.mxu0 0.0
    %2954 = vmatpush1.msra.mxu0 0.0
    %2955 = vmatprep.subr.mxu0 0.0
    %2956 = vmatpush1.msra.mxu0 0.0
    %2957 = vmatprep.subr.mxu0 0.0
    %2958 = vmatpush1.msra.mxu0 0.0
    %2959 = vmatprep.subr.mxu0 0.0
    %2960 = vmatpush1.msra.mxu0 0.0
    %2961 = vmatprep.subr.mxu0 0.0
    %2962 = vmatpush1.msra.mxu0 0.0
    %2963 = vmatprep.subr.mxu0 0.0
    %2964 = vmatpush1.msra.mxu0 0.0
    %2965 = vmatprep.subr.mxu0 0.0
    %2966 = vmatpush1.msra.mxu0 0.0
    %2967 = vmatprep.subr.mxu0 0.0
    %2968 = vmatpush1.msra.mxu0 0.0
    %2969 = vmatprep.subr.mxu0 0.0
    %2970 = vmatpush1.msra.mxu0 0.0
    %2971 = vmatprep.subr.mxu0 0.0
    %2972 = vmatpush1.msra.mxu0 0.0
    %2973 = vmatprep.subr.mxu0 0.0
    %2974 = vmatpush1.msra.mxu0 0.0
    %2975 = vmatprep.subr.mxu0 0.0
    %2976 = vmatpush1.msra.mxu0 0.0
    %2977 = vmatprep.mubr.f32.mxu0 0.0
    %v2978 = vand.u32 %v1615, 4294901760
    %2979 = vmatmul.mubr.f32.gmra.mrb[0].mxu0 %v2978
    %v2980 = vpop.f32.mrb[0].mxu0
    %v2981 = vadd.f32 %v2880, %v2980
    %v2982 = vpop.f32.mrb[0].mxu0
    %v2983 = vadd.f32 %v2882, %v2982
    %2984 = vmatprep.mubr.f32.mxu0 0.0
    %v2985 = vand.u32 %v1618, 4294901760
    %2986 = vmatmul.mubr.f32.gmra.mrb[0].mxu0 %v2985
    %v2987 = vpop.f32.mrb[0].mxu0
    %v2988 = vadd.f32 %v2887, %v2987
    %v2989 = vpop.f32.mrb[0].mxu0
    %v2990 = vadd.f32 %v2889, %v2989
    %2991 = vmatprep.mubr.f32.mxu0 0.0
    %v2992 = vand.u32 %v1621, 4294901760
    %2993 = vmatmul.mubr.f32.gmra.mrb[0].mxu0 %v2992
    %v2994 = vpop.f32.mrb[0].mxu0
    %v2995 = vadd.f32 %v2894, %v2994
    %v2996 = vpop.f32.mrb[0].mxu0
    %v2997 = vadd.f32 %v2896, %v2996
    %2998 = vmatprep.mubr.f32.mxu0 0.0
    %v2999 = vand.u32 %v1624, 4294901760
    %3000 = vmatmul.mubr.f32.gmra.mrb[0].mxu0 %v2999
    %v3001 = vpop.f32.mrb[0].mxu0
    %v3002 = vadd.f32 %v2901, %v3001
    %v3003 = vpop.f32.mrb[0].mxu0
    %v3004 = vadd.f32 %v2903, %v3003
    %3005 = vdwg.mxu0
    %v3006 = vtanh.pop %v2291
    %v3007 = vtanh.pop %v2293
    %v3008 = vtanh.pop %v2981
    %v3009 = vtanh.pop %v2983
    %v3010 = vtanh.pop %v2298
    %v3011 = vtanh.pop %v2300
    %v3012 = vtanh.pop %v2988
    %v3013 = vtanh.pop %v2990
    %v3014 = vtanh.pop %v2305
    %v3015 = vtanh.pop %v2307
    %v3016 = vtanh.pop %v2995
    %v3017 = vtanh.pop %v2997
    %v3018 = vtanh.pop %v2312
    %v3019 = vtanh.pop %v2314
    %v3020 = vtanh.pop %v3002
    %v3021 = vtanh.pop %v3004
    %s3022 = scalar_lea.vmem %s3, 64
    %v3023 = vld [vmem:[%s3022] sm:$0xff]
    %v3024 = vld [vmem:[%s3022 + $0x8] sm:$0xff]
    %v3025 = vld [vmem:[%s3022 + $0x10] sm:$0xff]
    %v3026 = vld [vmem:[%s3022 + $0x18] sm:$0xff]
    %s3027 = scalar_lea.vmem %s4, 64
    %v3028 = vld [vmem:[%s3027] sm:$0xff]
    %v3029 = vld [vmem:[%s3027 + $0x8] sm:$0xff]
    %v3030 = vld [vmem:[%s3027 + $0x10] sm:$0xff]
    %v3031 = vld [vmem:[%s3027 + $0x18] sm:$0xff]
    %3033 = vset.pattern.permute.xlu0 0
    %3034 = vperm.xlu0 %3033, %v3028
    %v3035 = vpop.permute.xlu0 %3034
    %3038 = vset.pattern.permute.xlu0 0
    %3039 = vperm.xlu0 %3038, %v3029
    %v3040 = vpop.permute.xlu0 %3039
    %3043 = vset.pattern.permute.xlu0 0
    %3044 = vperm.xlu0 %3043, %v3030
    %v3045 = vpop.permute.xlu0 %3044
    %3048 = vset.pattern.permute.xlu0 0
    %3049 = vperm.xlu0 %3048, %v3031
    %v3050 = vpop.permute.xlu0 %3049
    %v3053 = vsel %vm175, %v3023, 0
    %v3056 = vsel %vm175, %v3024, 0
    %v3059 = vsel %vm175, %v3025, 0
    %v3062 = vsel %vm175, %v3026, 0
    %v3064 = vand.u32 %v3007, 4294901760
    %3065 = vmatprep.subr.mxu0 %v3064
    %v3066 = vand.u32 %v3006, 4294901760
    %3067 = vmatpush1.msra.mxu0 %v3066
    %v3068 = vand.u32 %v3011, 4294901760
    %3069 = vmatprep.subr.mxu0 %v3068
    %v3070 = vand.u32 %v3010, 4294901760
    %3071 = vmatpush1.msra.mxu0 %v3070
    %v3072 = vand.u32 %v3015, 4294901760
    %3073 = vmatprep.subr.mxu0 %v3072
    %v3074 = vand.u32 %v3014, 4294901760
    %3075 = vmatpush1.msra.mxu0 %v3074
    %v3076 = vand.u32 %v3019, 4294901760
    %3077 = vmatprep.subr.mxu0 %v3076
    %v3078 = vand.u32 %v3018, 4294901760
    %3079 = vmatpush1.msra.mxu0 %v3078
    %3080 = vmatprep.subr.mxu0 0.0
    %3081 = vmatpush1.msra.mxu0 0.0
    %3082 = vmatprep.subr.mxu0 0.0
    %3083 = vmatpush1.msra.mxu0 0.0
    %3084 = vmatprep.subr.mxu0 0.0
    %3085 = vmatpush1.msra.mxu0 0.0
    %3086 = vmatprep.subr.mxu0 0.0
    %3087 = vmatpush1.msra.mxu0 0.0
    %3088 = vmatprep.subr.mxu0 0.0
    %3089 = vmatpush1.msra.mxu0 0.0
    %3090 = vmatprep.subr.mxu0 0.0
    %3091 = vmatpush1.msra.mxu0 0.0
    %3092 = vmatprep.subr.mxu0 0.0
    %3093 = vmatpush1.msra.mxu0 0.0
    %3094 = vmatprep.subr.mxu0 0.0
    %3095 = vmatpush1.msra.mxu0 0.0
    %3096 = vmatprep.subr.mxu0 0.0
    %3097 = vmatpush1.msra.mxu0 0.0
    %3098 = vmatprep.subr.mxu0 0.0
    %3099 = vmatpush1.msra.mxu0 0.0
    %3100 = vmatprep.subr.mxu0 0.0
    %3101 = vmatpush1.msra.mxu0 0.0
    %3102 = vmatprep.subr.mxu0 0.0
    %3103 = vmatpush1.msra.mxu0 0.0
    %3104 = vmatprep.subr.mxu0 0.0
    %3105 = vmatpush1.msra.mxu0 0.0
    %3106 = vmatprep.subr.mxu0 0.0
    %3107 = vmatpush1.msra.mxu0 0.0
    %3108 = vmatprep.subr.mxu0 0.0
    %3109 = vmatpush1.msra.mxu0 0.0
    %3110 = vmatprep.subr.mxu0 0.0
    %3111 = vmatpush1.msra.mxu0 0.0
    %3112 = vmatprep.subr.mxu0 0.0
    %3113 = vmatpush1.msra.mxu0 0.0
    %3114 = vmatprep.subr.mxu0 0.0
    %3115 = vmatpush1.msra.mxu0 0.0
    %3116 = vmatprep.subr.mxu0 0.0
    %3117 = vmatpush1.msra.mxu0 0.0
    %3118 = vmatprep.subr.mxu0 0.0
    %3119 = vmatpush1.msra.mxu0 0.0
    %3120 = vmatprep.subr.mxu0 0.0
    %3121 = vmatpush1.msra.mxu0 0.0
    %3122 = vmatprep.subr.mxu0 0.0
    %3123 = vmatpush1.msra.mxu0 0.0
    %3124 = vmatprep.subr.mxu0 0.0
    %3125 = vmatpush1.msra.mxu0 0.0
    %3126 = vmatprep.subr.mxu0 0.0
    %3127 = vmatpush1.msra.mxu0 0.0
    %3128 = vmatprep.subr.mxu0 0.0
    %3129 = vmatpush1.msra.mxu0 0.0
    %3130 = vmatprep.subr.mxu0 0.0
    %3131 = vmatpush1.msra.mxu0 0.0
    %3132 = vmatprep.subr.mxu0 0.0
    %3133 = vmatpush1.msra.mxu0 0.0
    %3134 = vmatprep.subr.mxu0 0.0
    %3135 = vmatpush1.msra.mxu0 0.0
    %3136 = vmatprep.mubr.f32.mxu0 0.0
    %v3137 = vand.u32 %v3053, 4294901760
    %v3138 = vsub.f32 %v3053, %v3137
    %v3139 = vand.u32 %v3138, 4294901760
    %v3140 = vsub.f32 %v3138, %v3139
    %v3141 = vand.u32 %v3140, 4294901760
    %3142 = vmatmul.mubr.f32.gmra.mrb[0].mxu0 %v3141
    %v3143 = vpop.f32.mrb[0].mxu0
    %v3144 = vadd.f32 %v3035, %v3143
    %v3145 = vpop.f32.mrb[0].mxu0
    %v3146 = vadd.f32 %v3035, %v3145
    %3147 = vmatprep.mubr.f32.mxu0 0.0
    %v3148 = vand.u32 %v3056, 4294901760
    %v3149 = vsub.f32 %v3056, %v3148
    %v3150 = vand.u32 %v3149, 4294901760
    %v3151 = vsub.f32 %v3149, %v3150
    %v3152 = vand.u32 %v3151, 4294901760
    %3153 = vmatmul.mubr.f32.gmra.mrb[0].mxu0 %v3152
    %v3154 = vpop.f32.mrb[0].mxu0
    %v3155 = vadd.f32 %v3040, %v3154
    %v3156 = vpop.f32.mrb[0].mxu0
    %v3157 = vadd.f32 %v3040, %v3156
    %3158 = vmatprep.mubr.f32.mxu0 0.0
    %v3159 = vand.u32 %v3059, 4294901760
    %v3160 = vsub.f32 %v3059, %v3159
    %v3161 = vand.u32 %v3160, 4294901760
    %v3162 = vsub.f32 %v3160, %v3161
    %v3163 = vand.u32 %v3162, 4294901760
    %3164 = vmatmul.mubr.f32.gmra.mrb[0].mxu0 %v3163
    %v3165 = vpop.f32.mrb[0].mxu0
    %v3166 = vadd.f32 %v3045, %v3165
    %v3167 = vpop.f32.mrb[0].mxu0
    %v3168 = vadd.f32 %v3045, %v3167
    %3169 = vmatprep.mubr.f32.mxu0 0.0
    %v3170 = vand.u32 %v3062, 4294901760
    %v3171 = vsub.f32 %v3062, %v3170
    %v3172 = vand.u32 %v3171, 4294901760
    %v3173 = vsub.f32 %v3171, %v3172
    %v3174 = vand.u32 %v3173, 4294901760
    %3175 = vmatmul.mubr.f32.gmra.mrb[0].mxu0 %v3174
    %v3176 = vpop.f32.mrb[0].mxu0
    %v3177 = vadd.f32 %v3050, %v3176
    %v3178 = vpop.f32.mrb[0].mxu0
    %v3179 = vadd.f32 %v3050, %v3178
    %3180 = vdwg.mxu0
    %v3181 = vand.u32 %v3007, 4294901760
    %v3182 = vsub.f32 %v3007, %v3181
    %v3183 = vand.u32 %v3182, 4294901760
    %v3184 = vsub.f32 %v3182, %v3183
    %v3185 = vand.u32 %v3184, 4294901760
    %3186 = vmatprep.subr.mxu0 %v3185
    %v3187 = vand.u32 %v3006, 4294901760
    %v3188 = vsub.f32 %v3006, %v3187
    %v3189 = vand.u32 %v3188, 4294901760
    %v3190 = vsub.f32 %v3188, %v3189
    %v3191 = vand.u32 %v3190, 4294901760
    %3192 = vmatpush1.msra.mxu0 %v3191
    %v3193 = vand.u32 %v3011, 4294901760
    %v3194 = vsub.f32 %v3011, %v3193
    %v3195 = vand.u32 %v3194, 4294901760
    %v3196 = vsub.f32 %v3194, %v3195
    %v3197 = vand.u32 %v3196, 4294901760
    %3198 = vmatprep.subr.mxu0 %v3197
    %v3199 = vand.u32 %v3010, 4294901760
    %v3200 = vsub.f32 %v3010, %v3199
    %v3201 = vand.u32 %v3200, 4294901760
    %v3202 = vsub.f32 %v3200, %v3201
    %v3203 = vand.u32 %v3202, 4294901760
    %3204 = vmatpush1.msra.mxu0 %v3203
    %v3205 = vand.u32 %v3015, 4294901760
    %v3206 = vsub.f32 %v3015, %v3205
    %v3207 = vand.u32 %v3206, 4294901760
    %v3208 = vsub.f32 %v3206, %v3207
    %v3209 = vand.u32 %v3208, 4294901760
    %3210 = vmatprep.subr.mxu0 %v3209
    %v3211 = vand.u32 %v3014, 4294901760
    %v3212 = vsub.f32 %v3014, %v3211
    %v3213 = vand.u32 %v3212, 4294901760
    %v3214 = vsub.f32 %v3212, %v3213
    %v3215 = vand.u32 %v3214, 4294901760
    %3216 = vmatpush1.msra.mxu0 %v3215
    %v3217 = vand.u32 %v3019, 4294901760
    %v3218 = vsub.f32 %v3019, %v3217
    %v3219 = vand.u32 %v3218, 4294901760
    %v3220 = vsub.f32 %v3218, %v3219
    %v3221 = vand.u32 %v3220, 4294901760
    %3222 = vmatprep.subr.mxu0 %v3221
    %v3223 = vand.u32 %v3018, 4294901760
    %v3224 = vsub.f32 %v3018, %v3223
    %v3225 = vand.u32 %v3224, 4294901760
    %v3226 = vsub.f32 %v3224, %v3225
    %v3227 = vand.u32 %v3226, 4294901760
    %3228 = vmatpush1.msra.mxu0 %v3227
    %3229 = vmatprep.subr.mxu0 0.0
    %3230 = vmatpush1.msra.mxu0 0.0
    %3231 = vmatprep.subr.mxu0 0.0
    %3232 = vmatpush1.msra.mxu0 0.0
    %3233 = vmatprep.subr.mxu0 0.0
    %3234 = vmatpush1.msra.mxu0 0.0
    %3235 = vmatprep.subr.mxu0 0.0
    %3236 = vmatpush1.msra.mxu0 0.0
    %3237 = vmatprep.subr.mxu0 0.0
    %3238 = vmatpush1.msra.mxu0 0.0
    %3239 = vmatprep.subr.mxu0 0.0
    %3240 = vmatpush1.msra.mxu0 0.0
    %3241 = vmatprep.subr.mxu0 0.0
    %3242 = vmatpush1.msra.mxu0 0.0
    %3243 = vmatprep.subr.mxu0 0.0
    %3244 = vmatpush1.msra.mxu0 0.0
    %3245 = vmatprep.subr.mxu0 0.0
    %3246 = vmatpush1.msra.mxu0 0.0
    %3247 = vmatprep.subr.mxu0 0.0
    %3248 = vmatpush1.msra.mxu0 0.0
    %3249 = vmatprep.subr.mxu0 0.0
    %3250 = vmatpush1.msra.mxu0 0.0
    %3251 = vmatprep.subr.mxu0 0.0
    %3252 = vmatpush1.msra.mxu0 0.0
    %3253 = vmatprep.subr.mxu0 0.0
    %3254 = vmatpush1.msra.mxu0 0.0
    %3255 = vmatprep.subr.mxu0 0.0
    %3256 = vmatpush1.msra.mxu0 0.0
    %3257 = vmatprep.subr.mxu0 0.0
    %3258 = vmatpush1.msra.mxu0 0.0
    %3259 = vmatprep.subr.mxu0 0.0
    %3260 = vmatpush1.msra.mxu0 0.0
    %3261 = vmatprep.subr.mxu0 0.0
    %3262 = vmatpush1.msra.mxu0 0.0
    %3263 = vmatprep.subr.mxu0 0.0
    %3264 = vmatpush1.msra.mxu0 0.0
    %3265 = vmatprep.subr.mxu0 0.0
    %3266 = vmatpush1.msra.mxu0 0.0
    %3267 = vmatprep.subr.mxu0 0.0
    %3268 = vmatpush1.msra.mxu0 0.0
    %3269 = vmatprep.subr.mxu0 0.0
    %3270 = vmatpush1.msra.mxu0 0.0
    %3271 = vmatprep.subr.mxu0 0.0
    %3272 = vmatpush1.msra.mxu0 0.0
    %3273 = vmatprep.subr.mxu0 0.0
    %3274 = vmatpush1.msra.mxu0 0.0
    %3275 = vmatprep.subr.mxu0 0.0
    %3276 = vmatpush1.msra.mxu0 0.0
    %3277 = vmatprep.subr.mxu0 0.0
    %3278 = vmatpush1.msra.mxu0 0.0
    %3279 = vmatprep.subr.mxu0 0.0
    %3280 = vmatpush1.msra.mxu0 0.0
    %3281 = vmatprep.subr.mxu0 0.0
    %3282 = vmatpush1.msra.mxu0 0.0
    %3283 = vmatprep.subr.mxu0 0.0
    %3284 = vmatpush1.msra.mxu0 0.0
    %3285 = vmatprep.mubr.f32.mxu0 0.0
    %v3286 = vand.u32 %v3053, 4294901760
    %3287 = vmatmul.mubr.f32.gmra.mrb[0].mxu0 %v3286
    %v3288 = vpop.f32.mrb[0].mxu0
    %v3289 = vadd.f32 %v3144, %v3288
    %v3290 = vpop.f32.mrb[0].mxu0
    %v3291 = vadd.f32 %v3146, %v3290
    %3292 = vmatprep.mubr.f32.mxu0 0.0
    %v3293 = vand.u32 %v3056, 4294901760
    %3294 = vmatmul.mubr.f32.gmra.mrb[0].mxu0 %v3293
    %v3295 = vpop.f32.mrb[0].mxu0
    %v3296 = vadd.f32 %v3155, %v3295
    %v3297 = vpop.f32.mrb[0].mxu0
    %v3298 = vadd.f32 %v3157, %v3297
    %3299 = vmatprep.mubr.f32.mxu0 0.0
    %v3300 = vand.u32 %v3059, 4294901760
    %3301 = vmatmul.mubr.f32.gmra.mrb[0].mxu0 %v3300
    %v3302 = vpop.f32.mrb[0].mxu0
    %v3303 = vadd.f32 %v3166, %v3302
    %v3304 = vpop.f32.mrb[0].mxu0
    %v3305 = vadd.f32 %v3168, %v3304
    %3306 = vmatprep.mubr.f32.mxu0 0.0
    %v3307 = vand.u32 %v3062, 4294901760
    %3308 = vmatmul.mubr.f32.gmra.mrb[0].mxu0 %v3307
    %v3309 = vpop.f32.mrb[0].mxu0
    %v3310 = vadd.f32 %v3177, %v3309
    %v3311 = vpop.f32.mrb[0].mxu0
    %v3312 = vadd.f32 %v3179, %v3311
    %3313 = vdwg.mxu0
    %v3314 = vand.u32 %v3007, 4294901760
    %v3315 = vsub.f32 %v3007, %v3314
    %3316 = vmatprep.subr.mxu0 %v3315
    %v3317 = vand.u32 %v3006, 4294901760
    %v3318 = vsub.f32 %v3006, %v3317
    %3319 = vmatpush1.msra.mxu0 %v3318
    %v3320 = vand.u32 %v3011, 4294901760
    %v3321 = vsub.f32 %v3011, %v3320
    %3322 = vmatprep.subr.mxu0 %v3321
    %v3323 = vand.u32 %v3010, 4294901760
    %v3324 = vsub.f32 %v3010, %v3323
    %3325 = vmatpush1.msra.mxu0 %v3324
    %v3326 = vand.u32 %v3015, 4294901760
    %v3327 = vsub.f32 %v3015, %v3326
    %3328 = vmatprep.subr.mxu0 %v3327
    %v3329 = vand.u32 %v3014, 4294901760
    %v3330 = vsub.f32 %v3014, %v3329
    %3331 = vmatpush1.msra.mxu0 %v3330
    %v3332 = vand.u32 %v3019, 4294901760
    %v3333 = vsub.f32 %v3019, %v3332
    %3334 = vmatprep.subr.mxu0 %v3333
    %v3335 = vand.u32 %v3018, 4294901760
    %v3336 = vsub.f32 %v3018, %v3335
    %3337 = vmatpush1.msra.mxu0 %v3336
    %3338 = vmatprep.subr.mxu0 0.0
    %3339 = vmatpush1.msra.mxu0 0.0
    %3340 = vmatprep.subr.mxu0 0.0
    %3341 = vmatpush1.msra.mxu0 0.0
    %3342 = vmatprep.subr.mxu0 0.0
    %3343 = vmatpush1.msra.mxu0 0.0
    %3344 = vmatprep.subr.mxu0 0.0
    %3345 = vmatpush1.msra.mxu0 0.0
    %3346 = vmatprep.subr.mxu0 0.0
    %3347 = vmatpush1.msra.mxu0 0.0
    %3348 = vmatprep.subr.mxu0 0.0
    %3349 = vmatpush1.msra.mxu0 0.0
    %3350 = vmatprep.subr.mxu0 0.0
    %3351 = vmatpush1.msra.mxu0 0.0
    %3352 = vmatprep.subr.mxu0 0.0
    %3353 = vmatpush1.msra.mxu0 0.0
    %3354 = vmatprep.subr.mxu0 0.0
    %3355 = vmatpush1.msra.mxu0 0.0
    %3356 = vmatprep.subr.mxu0 0.0
    %3357 = vmatpush1.msra.mxu0 0.0
    %3358 = vmatprep.subr.mxu0 0.0
    %3359 = vmatpush1.msra.mxu0 0.0
    %3360 = vmatprep.subr.mxu0 0.0
    %3361 = vmatpush1.msra.mxu0 0.0
    %3362 = vmatprep.subr.mxu0 0.0
    %3363 = vmatpush1.msra.mxu0 0.0
    %3364 = vmatprep.subr.mxu0 0.0
    %3365 = vmatpush1.msra.mxu0 0.0
    %3366 = vmatprep.subr.mxu0 0.0
    %3367 = vmatpush1.msra.mxu0 0.0
    %3368 = vmatprep.subr.mxu0 0.0
    %3369 = vmatpush1.msra.mxu0 0.0
    %3370 = vmatprep.subr.mxu0 0.0
    %3371 = vmatpush1.msra.mxu0 0.0
    %3372 = vmatprep.subr.mxu0 0.0
    %3373 = vmatpush1.msra.mxu0 0.0
    %3374 = vmatprep.subr.mxu0 0.0
    %3375 = vmatpush1.msra.mxu0 0.0
    %3376 = vmatprep.subr.mxu0 0.0
    %3377 = vmatpush1.msra.mxu0 0.0
    %3378 = vmatprep.subr.mxu0 0.0
    %3379 = vmatpush1.msra.mxu0 0.0
    %3380 = vmatprep.subr.mxu0 0.0
    %3381 = vmatpush1.msra.mxu0 0.0
    %3382 = vmatprep.subr.mxu0 0.0
    %3383 = vmatpush1.msra.mxu0 0.0
    %3384 = vmatprep.subr.mxu0 0.0
    %3385 = vmatpush1.msra.mxu0 0.0
    %3386 = vmatprep.subr.mxu0 0.0
    %3387 = vmatpush1.msra.mxu0 0.0
    %3388 = vmatprep.subr.mxu0 0.0
    %3389 = vmatpush1.msra.mxu0 0.0
    %3390 = vmatprep.subr.mxu0 0.0
    %3391 = vmatpush1.msra.mxu0 0.0
    %3392 = vmatprep.subr.mxu0 0.0
    %3393 = vmatpush1.msra.mxu0 0.0
    %3394 = vmatprep.mubr.f32.mxu0 0.0
    %v3395 = vand.u32 %v3053, 4294901760
    %v3396 = vsub.f32 %v3053, %v3395
    %3397 = vmatmul.mubr.f32.gmra.mrb[0].mxu0 %v3396
    %v3398 = vpop.f32.mrb[0].mxu0
    %v3399 = vadd.f32 %v3289, %v3398
    %v3400 = vpop.f32.mrb[0].mxu0
    %v3401 = vadd.f32 %v3291, %v3400
    %3402 = vmatprep.mubr.f32.mxu0 0.0
    %v3403 = vand.u32 %v3056, 4294901760
    %v3404 = vsub.f32 %v3056, %v3403
    %3405 = vmatmul.mubr.f32.gmra.mrb[0].mxu0 %v3404
    %v3406 = vpop.f32.mrb[0].mxu0
    %v3407 = vadd.f32 %v3296, %v3406
    %v3408 = vpop.f32.mrb[0].mxu0
    %v3409 = vadd.f32 %v3298, %v3408
    %3410 = vmatprep.mubr.f32.mxu0 0.0
    %v3411 = vand.u32 %v3059, 4294901760
    %v3412 = vsub.f32 %v3059, %v3411
    %3413 = vmatmul.mubr.f32.gmra.mrb[0].mxu0 %v3412
    %v3414 = vpop.f32.mrb[0].mxu0
    %v3415 = vadd.f32 %v3303, %v3414
    %v3416 = vpop.f32.mrb[0].mxu0
    %v3417 = vadd.f32 %v3305, %v3416
    %3418 = vmatprep.mubr.f32.mxu0 0.0
    %v3419 = vand.u32 %v3062, 4294901760
    %v3420 = vsub.f32 %v3062, %v3419
    %3421 = vmatmul.mubr.f32.gmra.mrb[0].mxu0 %v3420
    %v3422 = vpop.f32.mrb[0].mxu0
    %v3423 = vadd.f32 %v3310, %v3422
    %v3424 = vpop.f32.mrb[0].mxu0
    %v3425 = vadd.f32 %v3312, %v3424
    %3426 = vdwg.mxu0
    %v3427 = vand.u32 %v3007, 4294901760
    %3428 = vmatprep.subr.mxu0 %v3427
    %v3429 = vand.u32 %v3006, 4294901760
    %3430 = vmatpush1.msra.mxu0 %v3429
    %v3431 = vand.u32 %v3011, 4294901760
    %3432 = vmatprep.subr.mxu0 %v3431
    %v3433 = vand.u32 %v3010, 4294901760
    %3434 = vmatpush1.msra.mxu0 %v3433
    %v3435 = vand.u32 %v3015, 4294901760
    %3436 = vmatprep.subr.mxu0 %v3435
    %v3437 = vand.u32 %v3014, 4294901760
    %3438 = vmatpush1.msra.mxu0 %v3437
    %v3439 = vand.u32 %v3019, 4294901760
    %3440 = vmatprep.subr.mxu0 %v3439
    %v3441 = vand.u32 %v3018, 4294901760
    %3442 = vmatpush1.msra.mxu0 %v3441
    %3443 = vmatprep.subr.mxu0 0.0
    %3444 = vmatpush1.msra.mxu0 0.0
    %3445 = vmatprep.subr.mxu0 0.0
    %3446 = vmatpush1.msra.mxu0 0.0
    %3447 = vmatprep.subr.mxu0 0.0
    %3448 = vmatpush1.msra.mxu0 0.0
    %3449 = vmatprep.subr.mxu0 0.0
    %3450 = vmatpush1.msra.mxu0 0.0
    %3451 = vmatprep.subr.mxu0 0.0
    %3452 = vmatpush1.msra.mxu0 0.0
    %3453 = vmatprep.subr.mxu0 0.0
    %3454 = vmatpush1.msra.mxu0 0.0
    %3455 = vmatprep.subr.mxu0 0.0
    %3456 = vmatpush1.msra.mxu0 0.0
    %3457 = vmatprep.subr.mxu0 0.0
    %3458 = vmatpush1.msra.mxu0 0.0
    %3459 = vmatprep.subr.mxu0 0.0
    %3460 = vmatpush1.msra.mxu0 0.0
    %3461 = vmatprep.subr.mxu0 0.0
    %3462 = vmatpush1.msra.mxu0 0.0
    %3463 = vmatprep.subr.mxu0 0.0
    %3464 = vmatpush1.msra.mxu0 0.0
    %3465 = vmatprep.subr.mxu0 0.0
    %3466 = vmatpush1.msra.mxu0 0.0
    %3467 = vmatprep.subr.mxu0 0.0
    %3468 = vmatpush1.msra.mxu0 0.0
    %3469 = vmatprep.subr.mxu0 0.0
    %3470 = vmatpush1.msra.mxu0 0.0
    %3471 = vmatprep.subr.mxu0 0.0
    %3472 = vmatpush1.msra.mxu0 0.0
    %3473 = vmatprep.subr.mxu0 0.0
    %3474 = vmatpush1.msra.mxu0 0.0
    %3475 = vmatprep.subr.mxu0 0.0
    %3476 = vmatpush1.msra.mxu0 0.0
    %3477 = vmatprep.subr.mxu0 0.0
    %3478 = vmatpush1.msra.mxu0 0.0
    %3479 = vmatprep.subr.mxu0 0.0
    %3480 = vmatpush1.msra.mxu0 0.0
    %3481 = vmatprep.subr.mxu0 0.0
    %3482 = vmatpush1.msra.mxu0 0.0
    %3483 = vmatprep.subr.mxu0 0.0
    %3484 = vmatpush1.msra.mxu0 0.0
    %3485 = vmatprep.subr.mxu0 0.0
    %3486 = vmatpush1.msra.mxu0 0.0
    %3487 = vmatprep.subr.mxu0 0.0
    %3488 = vmatpush1.msra.mxu0 0.0
    %3489 = vmatprep.subr.mxu0 0.0
    %3490 = vmatpush1.msra.mxu0 0.0
    %3491 = vmatprep.subr.mxu0 0.0
    %3492 = vmatpush1.msra.mxu0 0.0
    %3493 = vmatprep.subr.mxu0 0.0
    %3494 = vmatpush1.msra.mxu0 0.0
    %3495 = vmatprep.subr.mxu0 0.0
    %3496 = vmatpush1.msra.mxu0 0.0
    %3497 = vmatprep.subr.mxu0 0.0
    %3498 = vmatpush1.msra.mxu0 0.0
    %3499 = vmatprep.mubr.f32.mxu0 0.0
    %v3500 = vand.u32 %v3053, 4294901760
    %v3501 = vsub.f32 %v3053, %v3500
    %v3502 = vand.u32 %v3501, 4294901760
    %3503 = vmatmul.mubr.f32.gmra.mrb[0].mxu0 %v3502
    %v3504 = vpop.f32.mrb[0].mxu0
    %v3505 = vadd.f32 %v3399, %v3504
    %v3506 = vpop.f32.mrb[0].mxu0
    %v3507 = vadd.f32 %v3401, %v3506
    %3508 = vmatprep.mubr.f32.mxu0 0.0
    %v3509 = vand.u32 %v3056, 4294901760
    %v3510 = vsub.f32 %v3056, %v3509
    %v3511 = vand.u32 %v3510, 4294901760
    %3512 = vmatmul.mubr.f32.gmra.mrb[0].mxu0 %v3511
    %v3513 = vpop.f32.mrb[0].mxu0
    %v3514 = vadd.f32 %v3407, %v3513
    %v3515 = vpop.f32.mrb[0].mxu0
    %v3516 = vadd.f32 %v3409, %v3515
    %3517 = vmatprep.mubr.f32.mxu0 0.0
    %v3518 = vand.u32 %v3059, 4294901760
    %v3519 = vsub.f32 %v3059, %v3518
    %v3520 = vand.u32 %v3519, 4294901760
    %3521 = vmatmul.mubr.f32.gmra.mrb[0].mxu0 %v3520
    %v3522 = vpop.f32.mrb[0].mxu0
    %v3523 = vadd.f32 %v3415, %v3522
    %v3524 = vpop.f32.mrb[0].mxu0
    %v3525 = vadd.f32 %v3417, %v3524
    %3526 = vmatprep.mubr.f32.mxu0 0.0
    %v3527 = vand.u32 %v3062, 4294901760
    %v3528 = vsub.f32 %v3062, %v3527
    %v3529 = vand.u32 %v3528, 4294901760
    %3530 = vmatmul.mubr.f32.gmra.mrb[0].mxu0 %v3529
    %v3531 = vpop.f32.mrb[0].mxu0
    %v3532 = vadd.f32 %v3423, %v3531
    %v3533 = vpop.f32.mrb[0].mxu0
    %v3534 = vadd.f32 %v3425, %v3533
    %3535 = vdwg.mxu0
    %v3536 = vand.u32 %v3007, 4294901760
    %v3537 = vsub.f32 %v3007, %v3536
    %v3538 = vand.u32 %v3537, 4294901760
    %3539 = vmatprep.subr.mxu0 %v3538
    %v3540 = vand.u32 %v3006, 4294901760
    %v3541 = vsub.f32 %v3006, %v3540
    %v3542 = vand.u32 %v3541, 4294901760
    %3543 = vmatpush1.msra.mxu0 %v3542
    %v3544 = vand.u32 %v3011, 4294901760
    %v3545 = vsub.f32 %v3011, %v3544
    %v3546 = vand.u32 %v3545, 4294901760
    %3547 = vmatprep.subr.mxu0 %v3546
    %v3548 = vand.u32 %v3010, 4294901760
    %v3549 = vsub.f32 %v3010, %v3548
    %v3550 = vand.u32 %v3549, 4294901760
    %3551 = vmatpush1.msra.mxu0 %v3550
    %v3552 = vand.u32 %v3015, 4294901760
    %v3553 = vsub.f32 %v3015, %v3552
    %v3554 = vand.u32 %v3553, 4294901760
    %3555 = vmatprep.subr.mxu0 %v3554
    %v3556 = vand.u32 %v3014, 4294901760
    %v3557 = vsub.f32 %v3014, %v3556
    %v3558 = vand.u32 %v3557, 4294901760
    %3559 = vmatpush1.msra.mxu0 %v3558
    %v3560 = vand.u32 %v3019, 4294901760
    %v3561 = vsub.f32 %v3019, %v3560
    %v3562 = vand.u32 %v3561, 4294901760
    %3563 = vmatprep.subr.mxu0 %v3562
    %v3564 = vand.u32 %v3018, 4294901760
    %v3565 = vsub.f32 %v3018, %v3564
    %v3566 = vand.u32 %v3565, 4294901760
    %3567 = vmatpush1.msra.mxu0 %v3566
    %3568 = vmatprep.subr.mxu0 0.0
    %3569 = vmatpush1.msra.mxu0 0.0
    %3570 = vmatprep.subr.mxu0 0.0
    %3571 = vmatpush1.msra.mxu0 0.0
    %3572 = vmatprep.subr.mxu0 0.0
    %3573 = vmatpush1.msra.mxu0 0.0
    %3574 = vmatprep.subr.mxu0 0.0
    %3575 = vmatpush1.msra.mxu0 0.0
    %3576 = vmatprep.subr.mxu0 0.0
    %3577 = vmatpush1.msra.mxu0 0.0
    %3578 = vmatprep.subr.mxu0 0.0
    %3579 = vmatpush1.msra.mxu0 0.0
    %3580 = vmatprep.subr.mxu0 0.0
    %3581 = vmatpush1.msra.mxu0 0.0
    %3582 = vmatprep.subr.mxu0 0.0
    %3583 = vmatpush1.msra.mxu0 0.0
    %3584 = vmatprep.subr.mxu0 0.0
    %3585 = vmatpush1.msra.mxu0 0.0
    %3586 = vmatprep.subr.mxu0 0.0
    %3587 = vmatpush1.msra.mxu0 0.0
    %3588 = vmatprep.subr.mxu0 0.0
    %3589 = vmatpush1.msra.mxu0 0.0
    %3590 = vmatprep.subr.mxu0 0.0
    %3591 = vmatpush1.msra.mxu0 0.0
    %3592 = vmatprep.subr.mxu0 0.0
    %3593 = vmatpush1.msra.mxu0 0.0
    %3594 = vmatprep.subr.mxu0 0.0
    %3595 = vmatpush1.msra.mxu0 0.0
    %3596 = vmatprep.subr.mxu0 0.0
    %3597 = vmatpush1.msra.mxu0 0.0
    %3598 = vmatprep.subr.mxu0 0.0
    %3599 = vmatpush1.msra.mxu0 0.0
    %3600 = vmatprep.subr.mxu0 0.0
    %3601 = vmatpush1.msra.mxu0 0.0
    %3602 = vmatprep.subr.mxu0 0.0
    %3603 = vmatpush1.msra.mxu0 0.0
    %3604 = vmatprep.subr.mxu0 0.0
    %3605 = vmatpush1.msra.mxu0 0.0
    %3606 = vmatprep.subr.mxu0 0.0
    %3607 = vmatpush1.msra.mxu0 0.0
    %3608 = vmatprep.subr.mxu0 0.0
    %3609 = vmatpush1.msra.mxu0 0.0
    %3610 = vmatprep.subr.mxu0 0.0
    %3611 = vmatpush1.msra.mxu0 0.0
    %3612 = vmatprep.subr.mxu0 0.0
    %3613 = vmatpush1.msra.mxu0 0.0
    %3614 = vmatprep.subr.mxu0 0.0
    %3615 = vmatpush1.msra.mxu0 0.0
    %3616 = vmatprep.subr.mxu0 0.0
    %3617 = vmatpush1.msra.mxu0 0.0
    %3618 = vmatprep.subr.mxu0 0.0
    %3619 = vmatpush1.msra.mxu0 0.0
    %3620 = vmatprep.subr.mxu0 0.0
    %3621 = vmatpush1.msra.mxu0 0.0
    %3622 = vmatprep.subr.mxu0 0.0
    %3623 = vmatpush1.msra.mxu0 0.0
    %3624 = vmatprep.mubr.f32.mxu0 0.0
    %v3625 = vand.u32 %v3053, 4294901760
    %3626 = vmatmul.mubr.f32.gmra.mrb[0].mxu0 %v3625
    %v3627 = vpop.f32.mrb[0].mxu0
    %v3628 = vadd.f32 %v3505, %v3627
    %v3629 = vpop.f32.mrb[0].mxu0
    %v3630 = vadd.f32 %v3507, %v3629
    %3631 = vmatprep.mubr.f32.mxu0 0.0
    %v3632 = vand.u32 %v3056, 4294901760
    %3633 = vmatmul.mubr.f32.gmra.mrb[0].mxu0 %v3632
    %v3634 = vpop.f32.mrb[0].mxu0
    %v3635 = vadd.f32 %v3514, %v3634
    %v3636 = vpop.f32.mrb[0].mxu0
    %v3637 = vadd.f32 %v3516, %v3636
    %3638 = vmatprep.mubr.f32.mxu0 0.0
    %v3639 = vand.u32 %v3059, 4294901760
    %3640 = vmatmul.mubr.f32.gmra.mrb[0].mxu0 %v3639
    %v3641 = vpop.f32.mrb[0].mxu0
    %v3642 = vadd.f32 %v3523, %v3641
    %v3643 = vpop.f32.mrb[0].mxu0
    %v3644 = vadd.f32 %v3525, %v3643
    %3645 = vmatprep.mubr.f32.mxu0 0.0
    %v3646 = vand.u32 %v3062, 4294901760
    %3647 = vmatmul.mubr.f32.gmra.mrb[0].mxu0 %v3646
    %v3648 = vpop.f32.mrb[0].mxu0
    %v3649 = vadd.f32 %v3532, %v3648
    %v3650 = vpop.f32.mrb[0].mxu0
    %v3651 = vadd.f32 %v3534, %v3650
    %3652 = vdwg.mxu0
    %v3653 = vand.u32 %v3007, 4294901760
    %3654 = vmatprep.subr.mxu0 %v3653
    %v3655 = vand.u32 %v3006, 4294901760
    %3656 = vmatpush1.msra.mxu0 %v3655
    %v3657 = vand.u32 %v3011, 4294901760
    %3658 = vmatprep.subr.mxu0 %v3657
    %v3659 = vand.u32 %v3010, 4294901760
    %3660 = vmatpush1.msra.mxu0 %v3659
    %v3661 = vand.u32 %v3015, 4294901760
    %3662 = vmatprep.subr.mxu0 %v3661
    %v3663 = vand.u32 %v3014, 4294901760
    %3664 = vmatpush1.msra.mxu0 %v3663
    %v3665 = vand.u32 %v3019, 4294901760
    %3666 = vmatprep.subr.mxu0 %v3665
    %v3667 = vand.u32 %v3018, 4294901760
    %3668 = vmatpush1.msra.mxu0 %v3667
    %3669 = vmatprep.subr.mxu0 0.0
    %3670 = vmatpush1.msra.mxu0 0.0
    %3671 = vmatprep.subr.mxu0 0.0
    %3672 = vmatpush1.msra.mxu0 0.0
    %3673 = vmatprep.subr.mxu0 0.0
    %3674 = vmatpush1.msra.mxu0 0.0
    %3675 = vmatprep.subr.mxu0 0.0
    %3676 = vmatpush1.msra.mxu0 0.0
    %3677 = vmatprep.subr.mxu0 0.0
    %3678 = vmatpush1.msra.mxu0 0.0
    %3679 = vmatprep.subr.mxu0 0.0
    %3680 = vmatpush1.msra.mxu0 0.0
    %3681 = vmatprep.subr.mxu0 0.0
    %3682 = vmatpush1.msra.mxu0 0.0
    %3683 = vmatprep.subr.mxu0 0.0
    %3684 = vmatpush1.msra.mxu0 0.0
    %3685 = vmatprep.subr.mxu0 0.0
    %3686 = vmatpush1.msra.mxu0 0.0
    %3687 = vmatprep.subr.mxu0 0.0
    %3688 = vmatpush1.msra.mxu0 0.0
    %3689 = vmatprep.subr.mxu0 0.0
    %3690 = vmatpush1.msra.mxu0 0.0
    %3691 = vmatprep.subr.mxu0 0.0
    %3692 = vmatpush1.msra.mxu0 0.0
    %3693 = vmatprep.subr.mxu0 0.0
    %3694 = vmatpush1.msra.mxu0 0.0
    %3695 = vmatprep.subr.mxu0 0.0
    %3696 = vmatpush1.msra.mxu0 0.0
    %3697 = vmatprep.subr.mxu0 0.0
    %3698 = vmatpush1.msra.mxu0 0.0
    %3699 = vmatprep.subr.mxu0 0.0
    %3700 = vmatpush1.msra.mxu0 0.0
    %3701 = vmatprep.subr.mxu0 0.0
    %3702 = vmatpush1.msra.mxu0 0.0
    %3703 = vmatprep.subr.mxu0 0.0
    %3704 = vmatpush1.msra.mxu0 0.0
    %3705 = vmatprep.subr.mxu0 0.0
    %3706 = vmatpush1.msra.mxu0 0.0
    %3707 = vmatprep.subr.mxu0 0.0
    %3708 = vmatpush1.msra.mxu0 0.0
    %3709 = vmatprep.subr.mxu0 0.0
    %3710 = vmatpush1.msra.mxu0 0.0
    %3711 = vmatprep.subr.mxu0 0.0
    %3712 = vmatpush1.msra.mxu0 0.0
    %3713 = vmatprep.subr.mxu0 0.0
    %3714 = vmatpush1.msra.mxu0 0.0
    %3715 = vmatprep.subr.mxu0 0.0
    %3716 = vmatpush1.msra.mxu0 0.0
    %3717 = vmatprep.subr.mxu0 0.0
    %3718 = vmatpush1.msra.mxu0 0.0
    %3719 = vmatprep.subr.mxu0 0.0
    %3720 = vmatpush1.msra.mxu0 0.0
    %3721 = vmatprep.subr.mxu0 0.0
    %3722 = vmatpush1.msra.mxu0 0.0
    %3723 = vmatprep.subr.mxu0 0.0
    %3724 = vmatpush1.msra.mxu0 0.0
    %3725 = vmatprep.mubr.f32.mxu0 0.0
    %v3726 = vand.u32 %v3053, 4294901760
    %3727 = vmatmul.mubr.f32.gmra.mrb[0].mxu0 %v3726
    %v3728 = vpop.f32.mrb[0].mxu0
    %v3729 = vadd.f32 %v3628, %v3728
    %v3730 = vpop.f32.mrb[0].mxu0
    %v3731 = vadd.f32 %v3630, %v3730
    %3732 = vmatprep.mubr.f32.mxu0 0.0
    %v3733 = vand.u32 %v3056, 4294901760
    %3734 = vmatmul.mubr.f32.gmra.mrb[0].mxu0 %v3733
    %v3735 = vpop.f32.mrb[0].mxu0
    %v3736 = vadd.f32 %v3635, %v3735
    %v3737 = vpop.f32.mrb[0].mxu0
    %v3738 = vadd.f32 %v3637, %v3737
    %3739 = vmatprep.mubr.f32.mxu0 0.0
    %v3740 = vand.u32 %v3059, 4294901760
    %3741 = vmatmul.mubr.f32.gmra.mrb[0].mxu0 %v3740
    %v3742 = vpop.f32.mrb[0].mxu0
    %v3743 = vadd.f32 %v3642, %v3742
    %v3744 = vpop.f32.mrb[0].mxu0
    %v3745 = vadd.f32 %v3644, %v3744
    %3746 = vmatprep.mubr.f32.mxu0 0.0
    %v3747 = vand.u32 %v3062, 4294901760
    %3748 = vmatmul.mubr.f32.gmra.mrb[0].mxu0 %v3747
    %v3749 = vpop.f32.mrb[0].mxu0
    %v3750 = vadd.f32 %v3649, %v3749
    %v3751 = vpop.f32.mrb[0].mxu0
    %v3752 = vadd.f32 %v3651, %v3751
    %3753 = vdwg.mxu0
    %v3754 = vand.u32 %v3009, 4294901760
    %3755 = vmatprep.subr.mxu0 %v3754
    %v3756 = vand.u32 %v3008, 4294901760
    %3757 = vmatpush1.msra.mxu0 %v3756
    %v3758 = vand.u32 %v3013, 4294901760
    %3759 = vmatprep.subr.mxu0 %v3758
    %v3760 = vand.u32 %v3012, 4294901760
    %3761 = vmatpush1.msra.mxu0 %v3760
    %v3762 = vand.u32 %v3017, 4294901760
    %3763 = vmatprep.subr.mxu0 %v3762
    %v3764 = vand.u32 %v3016, 4294901760
    %3765 = vmatpush1.msra.mxu0 %v3764
    %v3766 = vand.u32 %v3021, 4294901760
    %3767 = vmatprep.subr.mxu0 %v3766
    %v3768 = vand.u32 %v3020, 4294901760
    %3769 = vmatpush1.msra.mxu0 %v3768
    %3770 = vmatprep.subr.mxu0 0.0
    %3771 = vmatpush1.msra.mxu0 0.0
    %3772 = vmatprep.subr.mxu0 0.0
    %3773 = vmatpush1.msra.mxu0 0.0
    %3774 = vmatprep.subr.mxu0 0.0
    %3775 = vmatpush1.msra.mxu0 0.0
    %3776 = vmatprep.subr.mxu0 0.0
    %3777 = vmatpush1.msra.mxu0 0.0
    %3778 = vmatprep.subr.mxu0 0.0
    %3779 = vmatpush1.msra.mxu0 0.0
    %3780 = vmatprep.subr.mxu0 0.0
    %3781 = vmatpush1.msra.mxu0 0.0
    %3782 = vmatprep.subr.mxu0 0.0
    %3783 = vmatpush1.msra.mxu0 0.0
    %3784 = vmatprep.subr.mxu0 0.0
    %3785 = vmatpush1.msra.mxu0 0.0
    %3786 = vmatprep.subr.mxu0 0.0
    %3787 = vmatpush1.msra.mxu0 0.0
    %3788 = vmatprep.subr.mxu0 0.0
    %3789 = vmatpush1.msra.mxu0 0.0
    %3790 = vmatprep.subr.mxu0 0.0
    %3791 = vmatpush1.msra.mxu0 0.0
    %3792 = vmatprep.subr.mxu0 0.0
    %3793 = vmatpush1.msra.mxu0 0.0
    %3794 = vmatprep.subr.mxu0 0.0
    %3795 = vmatpush1.msra.mxu0 0.0
    %3796 = vmatprep.subr.mxu0 0.0
    %3797 = vmatpush1.msra.mxu0 0.0
    %3798 = vmatprep.subr.mxu0 0.0
    %3799 = vmatpush1.msra.mxu0 0.0
    %3800 = vmatprep.subr.mxu0 0.0
    %3801 = vmatpush1.msra.mxu0 0.0
    %3802 = vmatprep.subr.mxu0 0.0
    %3803 = vmatpush1.msra.mxu0 0.0
    %3804 = vmatprep.subr.mxu0 0.0
    %3805 = vmatpush1.msra.mxu0 0.0
    %3806 = vmatprep.subr.mxu0 0.0
    %3807 = vmatpush1.msra.mxu0 0.0
    %3808 = vmatprep.subr.mxu0 0.0
    %3809 = vmatpush1.msra.mxu0 0.0
    %3810 = vmatprep.subr.mxu0 0.0
    %3811 = vmatpush1.msra.mxu0 0.0
    %3812 = vmatprep.subr.mxu0 0.0
    %3813 = vmatpush1.msra.mxu0 0.0
    %3814 = vmatprep.subr.mxu0 0.0
    %3815 = vmatpush1.msra.mxu0 0.0
    %3816 = vmatprep.subr.mxu0 0.0
    %3817 = vmatpush1.msra.mxu0 0.0
    %3818 = vmatprep.subr.mxu0 0.0
    %3819 = vmatpush1.msra.mxu0 0.0
    %3820 = vmatprep.subr.mxu0 0.0
    %3821 = vmatpush1.msra.mxu0 0.0
    %3822 = vmatprep.subr.mxu0 0.0
    %3823 = vmatpush1.msra.mxu0 0.0
    %3824 = vmatprep.subr.mxu0 0.0
    %3825 = vmatpush1.msra.mxu0 0.0
    %3826 = vmatprep.mubr.f32.mxu0 0.0
    %v3827 = vand.u32 %v3053, 4294901760
    %v3828 = vsub.f32 %v3053, %v3827
    %v3829 = vand.u32 %v3828, 4294901760
    %v3830 = vsub.f32 %v3828, %v3829
    %v3831 = vand.u32 %v3830, 4294901760
    %3832 = vmatmul.mubr.f32.gmra.mrb[0].mxu0 %v3831
    %v3833 = vpop.f32.mrb[0].mxu0
    %v3834 = vadd.f32 %v3035, %v3833
    %v3835 = vpop.f32.mrb[0].mxu0
    %v3836 = vadd.f32 %v3035, %v3835
    %3837 = vmatprep.mubr.f32.mxu0 0.0
    %v3838 = vand.u32 %v3056, 4294901760
    %v3839 = vsub.f32 %v3056, %v3838
    %v3840 = vand.u32 %v3839, 4294901760
    %v3841 = vsub.f32 %v3839, %v3840
    %v3842 = vand.u32 %v3841, 4294901760
    %3843 = vmatmul.mubr.f32.gmra.mrb[0].mxu0 %v3842
    %v3844 = vpop.f32.mrb[0].mxu0
    %v3845 = vadd.f32 %v3040, %v3844
    %v3846 = vpop.f32.mrb[0].mxu0
    %v3847 = vadd.f32 %v3040, %v3846
    %3848 = vmatprep.mubr.f32.mxu0 0.0
    %v3849 = vand.u32 %v3059, 4294901760
    %v3850 = vsub.f32 %v3059, %v3849
    %v3851 = vand.u32 %v3850, 4294901760
    %v3852 = vsub.f32 %v3850, %v3851
    %v3853 = vand.u32 %v3852, 4294901760
    %3854 = vmatmul.mubr.f32.gmra.mrb[0].mxu0 %v3853
    %v3855 = vpop.f32.mrb[0].mxu0
    %v3856 = vadd.f32 %v3045, %v3855
    %v3857 = vpop.f32.mrb[0].mxu0
    %v3858 = vadd.f32 %v3045, %v3857
    %3859 = vmatprep.mubr.f32.mxu0 0.0
    %v3860 = vand.u32 %v3062, 4294901760
    %v3861 = vsub.f32 %v3062, %v3860
    %v3862 = vand.u32 %v3861, 4294901760
    %v3863 = vsub.f32 %v3861, %v3862
    %v3864 = vand.u32 %v3863, 4294901760
    %3865 = vmatmul.mubr.f32.gmra.mrb[0].mxu0 %v3864
    %v3866 = vpop.f32.mrb[0].mxu0
    %v3867 = vadd.f32 %v3050, %v3866
    %v3868 = vpop.f32.mrb[0].mxu0
    %v3869 = vadd.f32 %v3050, %v3868
    %3870 = vdwg.mxu0
    %v3871 = vand.u32 %v3009, 4294901760
    %v3872 = vsub.f32 %v3009, %v3871
    %v3873 = vand.u32 %v3872, 4294901760
    %v3874 = vsub.f32 %v3872, %v3873
    %v3875 = vand.u32 %v3874, 4294901760
    %3876 = vmatprep.subr.mxu0 %v3875
    %v3877 = vand.u32 %v3008, 4294901760
    %v3878 = vsub.f32 %v3008, %v3877
    %v3879 = vand.u32 %v3878, 4294901760
    %v3880 = vsub.f32 %v3878, %v3879
    %v3881 = vand.u32 %v3880, 4294901760
    %3882 = vmatpush1.msra.mxu0 %v3881
    %v3883 = vand.u32 %v3013, 4294901760
    %v3884 = vsub.f32 %v3013, %v3883
    %v3885 = vand.u32 %v3884, 4294901760
    %v3886 = vsub.f32 %v3884, %v3885
    %v3887 = vand.u32 %v3886, 4294901760
    %3888 = vmatprep.subr.mxu0 %v3887
    %v3889 = vand.u32 %v3012, 4294901760
    %v3890 = vsub.f32 %v3012, %v3889
    %v3891 = vand.u32 %v3890, 4294901760
    %v3892 = vsub.f32 %v3890, %v3891
    %v3893 = vand.u32 %v3892, 4294901760
    %3894 = vmatpush1.msra.mxu0 %v3893
    %v3895 = vand.u32 %v3017, 4294901760
    %v3896 = vsub.f32 %v3017, %v3895
    %v3897 = vand.u32 %v3896, 4294901760
    %v3898 = vsub.f32 %v3896, %v3897
    %v3899 = vand.u32 %v3898, 4294901760
    %3900 = vmatprep.subr.mxu0 %v3899
    %v3901 = vand.u32 %v3016, 4294901760
    %v3902 = vsub.f32 %v3016, %v3901
    %v3903 = vand.u32 %v3902, 4294901760
    %v3904 = vsub.f32 %v3902, %v3903
    %v3905 = vand.u32 %v3904, 4294901760
    %3906 = vmatpush1.msra.mxu0 %v3905
    %v3907 = vand.u32 %v3021, 4294901760
    %v3908 = vsub.f32 %v3021, %v3907
    %v3909 = vand.u32 %v3908, 4294901760
    %v3910 = vsub.f32 %v3908, %v3909
    %v3911 = vand.u32 %v3910, 4294901760
    %3912 = vmatprep.subr.mxu0 %v3911
    %v3913 = vand.u32 %v3020, 4294901760
    %v3914 = vsub.f32 %v3020, %v3913
    %v3915 = vand.u32 %v3914, 4294901760
    %v3916 = vsub.f32 %v3914, %v3915
    %v3917 = vand.u32 %v3916, 4294901760
    %3918 = vmatpush1.msra.mxu0 %v3917
    %3919 = vmatprep.subr.mxu0 0.0
    %3920 = vmatpush1.msra.mxu0 0.0
    %3921 = vmatprep.subr.mxu0 0.0
    %3922 = vmatpush1.msra.mxu0 0.0
    %3923 = vmatprep.subr.mxu0 0.0
    %3924 = vmatpush1.msra.mxu0 0.0
    %3925 = vmatprep.subr.mxu0 0.0
    %3926 = vmatpush1.msra.mxu0 0.0
    %3927 = vmatprep.subr.mxu0 0.0
    %3928 = vmatpush1.msra.mxu0 0.0
    %3929 = vmatprep.subr.mxu0 0.0
    %3930 = vmatpush1.msra.mxu0 0.0
    %3931 = vmatprep.subr.mxu0 0.0
    %3932 = vmatpush1.msra.mxu0 0.0
    %3933 = vmatprep.subr.mxu0 0.0
    %3934 = vmatpush1.msra.mxu0 0.0
    %3935 = vmatprep.subr.mxu0 0.0
    %3936 = vmatpush1.msra.mxu0 0.0
    %3937 = vmatprep.subr.mxu0 0.0
    %3938 = vmatpush1.msra.mxu0 0.0
    %3939 = vmatprep.subr.mxu0 0.0
    %3940 = vmatpush1.msra.mxu0 0.0
    %3941 = vmatprep.subr.mxu0 0.0
    %3942 = vmatpush1.msra.mxu0 0.0
    %3943 = vmatprep.subr.mxu0 0.0
    %3944 = vmatpush1.msra.mxu0 0.0
    %3945 = vmatprep.subr.mxu0 0.0
    %3946 = vmatpush1.msra.mxu0 0.0
    %3947 = vmatprep.subr.mxu0 0.0
    %3948 = vmatpush1.msra.mxu0 0.0
    %3949 = vmatprep.subr.mxu0 0.0
    %3950 = vmatpush1.msra.mxu0 0.0
    %3951 = vmatprep.subr.mxu0 0.0
    %3952 = vmatpush1.msra.mxu0 0.0
    %3953 = vmatprep.subr.mxu0 0.0
    %3954 = vmatpush1.msra.mxu0 0.0
    %3955 = vmatprep.subr.mxu0 0.0
    %3956 = vmatpush1.msra.mxu0 0.0
    %3957 = vmatprep.subr.mxu0 0.0
    %3958 = vmatpush1.msra.mxu0 0.0
    %3959 = vmatprep.subr.mxu0 0.0
    %3960 = vmatpush1.msra.mxu0 0.0
    %3961 = vmatprep.subr.mxu0 0.0
    %3962 = vmatpush1.msra.mxu0 0.0
    %3963 = vmatprep.subr.mxu0 0.0
    %3964 = vmatpush1.msra.mxu0 0.0
    %3965 = vmatprep.subr.mxu0 0.0
    %3966 = vmatpush1.msra.mxu0 0.0
    %3967 = vmatprep.subr.mxu0 0.0
    %3968 = vmatpush1.msra.mxu0 0.0
    %3969 = vmatprep.subr.mxu0 0.0
    %3970 = vmatpush1.msra.mxu0 0.0
    %3971 = vmatprep.subr.mxu0 0.0
    %3972 = vmatpush1.msra.mxu0 0.0
    %3973 = vmatprep.subr.mxu0 0.0
    %3974 = vmatpush1.msra.mxu0 0.0
    %3975 = vmatprep.mubr.f32.mxu0 0.0
    %v3976 = vand.u32 %v3053, 4294901760
    %3977 = vmatmul.mubr.f32.gmra.mrb[0].mxu0 %v3976
    %v3978 = vpop.f32.mrb[0].mxu0
    %v3979 = vadd.f32 %v3834, %v3978
    %v3980 = vpop.f32.mrb[0].mxu0
    %v3981 = vadd.f32 %v3836, %v3980
    %3982 = vmatprep.mubr.f32.mxu0 0.0
    %v3983 = vand.u32 %v3056, 4294901760
    %3984 = vmatmul.mubr.f32.gmra.mrb[0].mxu0 %v3983
    %v3985 = vpop.f32.mrb[0].mxu0
    %v3986 = vadd.f32 %v3845, %v3985
    %v3987 = vpop.f32.mrb[0].mxu0
    %v3988 = vadd.f32 %v3847, %v3987
    %3989 = vmatprep.mubr.f32.mxu0 0.0
    %v3990 = vand.u32 %v3059, 4294901760
    %3991 = vmatmul.mubr.f32.gmra.mrb[0].mxu0 %v3990
    %v3992 = vpop.f32.mrb[0].mxu0
    %v3993 = vadd.f32 %v3856, %v3992
    %v3994 = vpop.f32.mrb[0].mxu0
    %v3995 = vadd.f32 %v3858, %v3994
    %3996 = vmatprep.mubr.f32.mxu0 0.0
    %v3997 = vand.u32 %v3062, 4294901760
    %3998 = vmatmul.mubr.f32.gmra.mrb[0].mxu0 %v3997
    %v3999 = vpop.f32.mrb[0].mxu0
    %v4000 = vadd.f32 %v3867, %v3999
    %v4001 = vpop.f32.mrb[0].mxu0
    %v4002 = vadd.f32 %v3869, %v4001
    %4003 = vdwg.mxu0
    %v4004 = vand.u32 %v3009, 4294901760
    %v4005 = vsub.f32 %v3009, %v4004
    %4006 = vmatprep.subr.mxu0 %v4005
    %v4007 = vand.u32 %v3008, 4294901760
    %v4008 = vsub.f32 %v3008, %v4007
    %4009 = vmatpush1.msra.mxu0 %v4008
    %v4010 = vand.u32 %v3013, 4294901760
    %v4011 = vsub.f32 %v3013, %v4010
    %4012 = vmatprep.subr.mxu0 %v4011
    %v4013 = vand.u32 %v3012, 4294901760
    %v4014 = vsub.f32 %v3012, %v4013
    %4015 = vmatpush1.msra.mxu0 %v4014
    %v4016 = vand.u32 %v3017, 4294901760
    %v4017 = vsub.f32 %v3017, %v4016
    %4018 = vmatprep.subr.mxu0 %v4017
    %v4019 = vand.u32 %v3016, 4294901760
    %v4020 = vsub.f32 %v3016, %v4019
    %4021 = vmatpush1.msra.mxu0 %v4020
    %v4022 = vand.u32 %v3021, 4294901760
    %v4023 = vsub.f32 %v3021, %v4022
    %4024 = vmatprep.subr.mxu0 %v4023
    %v4025 = vand.u32 %v3020, 4294901760
    %v4026 = vsub.f32 %v3020, %v4025
    %4027 = vmatpush1.msra.mxu0 %v4026
    %4028 = vmatprep.subr.mxu0 0.0
    %4029 = vmatpush1.msra.mxu0 0.0
    %4030 = vmatprep.subr.mxu0 0.0
    %4031 = vmatpush1.msra.mxu0 0.0
    %4032 = vmatprep.subr.mxu0 0.0
    %4033 = vmatpush1.msra.mxu0 0.0
    %4034 = vmatprep.subr.mxu0 0.0
    %4035 = vmatpush1.msra.mxu0 0.0
    %4036 = vmatprep.subr.mxu0 0.0
    %4037 = vmatpush1.msra.mxu0 0.0
    %4038 = vmatprep.subr.mxu0 0.0
    %4039 = vmatpush1.msra.mxu0 0.0
    %4040 = vmatprep.subr.mxu0 0.0
    %4041 = vmatpush1.msra.mxu0 0.0
    %4042 = vmatprep.subr.mxu0 0.0
    %4043 = vmatpush1.msra.mxu0 0.0
    %4044 = vmatprep.subr.mxu0 0.0
    %4045 = vmatpush1.msra.mxu0 0.0
    %4046 = vmatprep.subr.mxu0 0.0
    %4047 = vmatpush1.msra.mxu0 0.0
    %4048 = vmatprep.subr.mxu0 0.0
    %4049 = vmatpush1.msra.mxu0 0.0
    %4050 = vmatprep.subr.mxu0 0.0
    %4051 = vmatpush1.msra.mxu0 0.0
    %4052 = vmatprep.subr.mxu0 0.0
    %4053 = vmatpush1.msra.mxu0 0.0
    %4054 = vmatprep.subr.mxu0 0.0
    %4055 = vmatpush1.msra.mxu0 0.0
    %4056 = vmatprep.subr.mxu0 0.0
    %4057 = vmatpush1.msra.mxu0 0.0
    %4058 = vmatprep.subr.mxu0 0.0
    %4059 = vmatpush1.msra.mxu0 0.0
    %4060 = vmatprep.subr.mxu0 0.0
    %4061 = vmatpush1.msra.mxu0 0.0
    %4062 = vmatprep.subr.mxu0 0.0
    %4063 = vmatpush1.msra.mxu0 0.0
    %4064 = vmatprep.subr.mxu0 0.0
    %4065 = vmatpush1.msra.mxu0 0.0
    %4066 = vmatprep.subr.mxu0 0.0
    %4067 = vmatpush1.msra.mxu0 0.0
    %4068 = vmatprep.subr.mxu0 0.0
    %4069 = vmatpush1.msra.mxu0 0.0
    %4070 = vmatprep.subr.mxu0 0.0
    %4071 = vmatpush1.msra.mxu0 0.0
    %4072 = vmatprep.subr.mxu0 0.0
    %4073 = vmatpush1.msra.mxu0 0.0
    %4074 = vmatprep.subr.mxu0 0.0
    %4075 = vmatpush1.msra.mxu0 0.0
    %4076 = vmatprep.subr.mxu0 0.0
    %4077 = vmatpush1.msra.mxu0 0.0
    %4078 = vmatprep.subr.mxu0 0.0
    %4079 = vmatpush1.msra.mxu0 0.0
    %4080 = vmatprep.subr.mxu0 0.0
    %4081 = vmatpush1.msra.mxu0 0.0
    %4082 = vmatprep.subr.mxu0 0.0
    %4083 = vmatpush1.msra.mxu0 0.0
    %4084 = vmatprep.mubr.f32.mxu0 0.0
    %v4085 = vand.u32 %v3053, 4294901760
    %v4086 = vsub.f32 %v3053, %v4085
    %4087 = vmatmul.mubr.f32.gmra.mrb[0].mxu0 %v4086
    %v4088 = vpop.f32.mrb[0].mxu0
    %v4089 = vadd.f32 %v3979, %v4088
    %v4090 = vpop.f32.mrb[0].mxu0
    %v4091 = vadd.f32 %v3981, %v4090
    %4092 = vmatprep.mubr.f32.mxu0 0.0
    %v4093 = vand.u32 %v3056, 4294901760
    %v4094 = vsub.f32 %v3056, %v4093
    %4095 = vmatmul.mubr.f32.gmra.mrb[0].mxu0 %v4094
    %v4096 = vpop.f32.mrb[0].mxu0
    %v4097 = vadd.f32 %v3986, %v4096
    %v4098 = vpop.f32.mrb[0].mxu0
    %v4099 = vadd.f32 %v3988, %v4098
    %4100 = vmatprep.mubr.f32.mxu0 0.0
    %v4101 = vand.u32 %v3059, 4294901760
    %v4102 = vsub.f32 %v3059, %v4101
    %4103 = vmatmul.mubr.f32.gmra.mrb[0].mxu0 %v4102
    %v4104 = vpop.f32.mrb[0].mxu0
    %v4105 = vadd.f32 %v3993, %v4104
    %v4106 = vpop.f32.mrb[0].mxu0
    %v4107 = vadd.f32 %v3995, %v4106
    %4108 = vmatprep.mubr.f32.mxu0 0.0
    %v4109 = vand.u32 %v3062, 4294901760
    %v4110 = vsub.f32 %v3062, %v4109
    %4111 = vmatmul.mubr.f32.gmra.mrb[0].mxu0 %v4110
    %v4112 = vpop.f32.mrb[0].mxu0
    %v4113 = vadd.f32 %v4000, %v4112
    %v4114 = vpop.f32.mrb[0].mxu0
    %v4115 = vadd.f32 %v4002, %v4114
    %4116 = vdwg.mxu0
    %v4117 = vand.u32 %v3009, 4294901760
    %4118 = vmatprep.subr.mxu0 %v4117
    %v4119 = vand.u32 %v3008, 4294901760
    %4120 = vmatpush1.msra.mxu0 %v4119
    %v4121 = vand.u32 %v3013, 4294901760
    %4122 = vmatprep.subr.mxu0 %v4121
    %v4123 = vand.u32 %v3012, 4294901760
    %4124 = vmatpush1.msra.mxu0 %v4123
    %v4125 = vand.u32 %v3017, 4294901760
    %4126 = vmatprep.subr.mxu0 %v4125
    %v4127 = vand.u32 %v3016, 4294901760
    %4128 = vmatpush1.msra.mxu0 %v4127
    %v4129 = vand.u32 %v3021, 4294901760
    %4130 = vmatprep.subr.mxu0 %v4129
    %v4131 = vand.u32 %v3020, 4294901760
    %4132 = vmatpush1.msra.mxu0 %v4131
    %4133 = vmatprep.subr.mxu0 0.0
    %4134 = vmatpush1.msra.mxu0 0.0
    %4135 = vmatprep.subr.mxu0 0.0
    %4136 = vmatpush1.msra.mxu0 0.0
    %4137 = vmatprep.subr.mxu0 0.0
    %4138 = vmatpush1.msra.mxu0 0.0
    %4139 = vmatprep.subr.mxu0 0.0
    %4140 = vmatpush1.msra.mxu0 0.0
    %4141 = vmatprep.subr.mxu0 0.0
    %4142 = vmatpush1.msra.mxu0 0.0
    %4143 = vmatprep.subr.mxu0 0.0
    %4144 = vmatpush1.msra.mxu0 0.0
    %4145 = vmatprep.subr.mxu0 0.0
    %4146 = vmatpush1.msra.mxu0 0.0
    %4147 = vmatprep.subr.mxu0 0.0
    %4148 = vmatpush1.msra.mxu0 0.0
    %4149 = vmatprep.subr.mxu0 0.0
    %4150 = vmatpush1.msra.mxu0 0.0
    %4151 = vmatprep.subr.mxu0 0.0
    %4152 = vmatpush1.msra.mxu0 0.0
    %4153 = vmatprep.subr.mxu0 0.0
    %4154 = vmatpush1.msra.mxu0 0.0
    %4155 = vmatprep.subr.mxu0 0.0
    %4156 = vmatpush1.msra.mxu0 0.0
    %4157 = vmatprep.subr.mxu0 0.0
    %4158 = vmatpush1.msra.mxu0 0.0
    %4159 = vmatprep.subr.mxu0 0.0
    %4160 = vmatpush1.msra.mxu0 0.0
    %4161 = vmatprep.subr.mxu0 0.0
    %4162 = vmatpush1.msra.mxu0 0.0
    %4163 = vmatprep.subr.mxu0 0.0
    %4164 = vmatpush1.msra.mxu0 0.0
    %4165 = vmatprep.subr.mxu0 0.0
    %4166 = vmatpush1.msra.mxu0 0.0
    %4167 = vmatprep.subr.mxu0 0.0
    %4168 = vmatpush1.msra.mxu0 0.0
    %4169 = vmatprep.subr.mxu0 0.0
    %4170 = vmatpush1.msra.mxu0 0.0
    %4171 = vmatprep.subr.mxu0 0.0
    %4172 = vmatpush1.msra.mxu0 0.0
    %4173 = vmatprep.subr.mxu0 0.0
    %4174 = vmatpush1.msra.mxu0 0.0
    %4175 = vmatprep.subr.mxu0 0.0
    %4176 = vmatpush1.msra.mxu0 0.0
    %4177 = vmatprep.subr.mxu0 0.0
    %4178 = vmatpush1.msra.mxu0 0.0
    %4179 = vmatprep.subr.mxu0 0.0
    %4180 = vmatpush1.msra.mxu0 0.0
    %4181 = vmatprep.subr.mxu0 0.0
    %4182 = vmatpush1.msra.mxu0 0.0
    %4183 = vmatprep.subr.mxu0 0.0
    %4184 = vmatpush1.msra.mxu0 0.0
    %4185 = vmatprep.subr.mxu0 0.0
    %4186 = vmatpush1.msra.mxu0 0.0
    %4187 = vmatprep.subr.mxu0 0.0
    %4188 = vmatpush1.msra.mxu0 0.0
    %4189 = vmatprep.mubr.f32.mxu0 0.0
    %v4190 = vand.u32 %v3053, 4294901760
    %v4191 = vsub.f32 %v3053, %v4190
    %v4192 = vand.u32 %v4191, 4294901760
    %4193 = vmatmul.mubr.f32.gmra.mrb[0].mxu0 %v4192
    %v4194 = vpop.f32.mrb[0].mxu0
    %v4195 = vadd.f32 %v4089, %v4194
    %v4196 = vpop.f32.mrb[0].mxu0
    %v4197 = vadd.f32 %v4091, %v4196
    %4198 = vmatprep.mubr.f32.mxu0 0.0
    %v4199 = vand.u32 %v3056, 4294901760
    %v4200 = vsub.f32 %v3056, %v4199
    %v4201 = vand.u32 %v4200, 4294901760
    %4202 = vmatmul.mubr.f32.gmra.mrb[0].mxu0 %v4201
    %v4203 = vpop.f32.mrb[0].mxu0
    %v4204 = vadd.f32 %v4097, %v4203
    %v4205 = vpop.f32.mrb[0].mxu0
    %v4206 = vadd.f32 %v4099, %v4205
    %4207 = vmatprep.mubr.f32.mxu0 0.0
    %v4208 = vand.u32 %v3059, 4294901760
    %v4209 = vsub.f32 %v3059, %v4208
    %v4210 = vand.u32 %v4209, 4294901760
    %4211 = vmatmul.mubr.f32.gmra.mrb[0].mxu0 %v4210
    %v4212 = vpop.f32.mrb[0].mxu0
    %v4213 = vadd.f32 %v4105, %v4212
    %v4214 = vpop.f32.mrb[0].mxu0
    %v4215 = vadd.f32 %v4107, %v4214
    %4216 = vmatprep.mubr.f32.mxu0 0.0
    %v4217 = vand.u32 %v3062, 4294901760
    %v4218 = vsub.f32 %v3062, %v4217
    %v4219 = vand.u32 %v4218, 4294901760
    %4220 = vmatmul.mubr.f32.gmra.mrb[0].mxu0 %v4219
    %v4221 = vpop.f32.mrb[0].mxu0
    %v4222 = vadd.f32 %v4113, %v4221
    %v4223 = vpop.f32.mrb[0].mxu0
    %v4224 = vadd.f32 %v4115, %v4223
    %4225 = vdwg.mxu0
    %v4226 = vand.u32 %v3009, 4294901760
    %v4227 = vsub.f32 %v3009, %v4226
    %v4228 = vand.u32 %v4227, 4294901760
    %4229 = vmatprep.subr.mxu0 %v4228
    %v4230 = vand.u32 %v3008, 4294901760
    %v4231 = vsub.f32 %v3008, %v4230
    %v4232 = vand.u32 %v4231, 4294901760
    %4233 = vmatpush1.msra.mxu0 %v4232
    %v4234 = vand.u32 %v3013, 4294901760
    %v4235 = vsub.f32 %v3013, %v4234
    %v4236 = vand.u32 %v4235, 4294901760
    %4237 = vmatprep.subr.mxu0 %v4236
    %v4238 = vand.u32 %v3012, 4294901760
    %v4239 = vsub.f32 %v3012, %v4238
    %v4240 = vand.u32 %v4239, 4294901760
    %4241 = vmatpush1.msra.mxu0 %v4240
    %v4242 = vand.u32 %v3017, 4294901760
    %v4243 = vsub.f32 %v3017, %v4242
    %v4244 = vand.u32 %v4243, 4294901760
    %4245 = vmatprep.subr.mxu0 %v4244
    %v4246 = vand.u32 %v3016, 4294901760
    %v4247 = vsub.f32 %v3016, %v4246
    %v4248 = vand.u32 %v4247, 4294901760
    %4249 = vmatpush1.msra.mxu0 %v4248
    %v4250 = vand.u32 %v3021, 4294901760
    %v4251 = vsub.f32 %v3021, %v4250
    %v4252 = vand.u32 %v4251, 4294901760
    %4253 = vmatprep.subr.mxu0 %v4252
    %v4254 = vand.u32 %v3020, 4294901760
    %v4255 = vsub.f32 %v3020, %v4254
    %v4256 = vand.u32 %v4255, 4294901760
    %4257 = vmatpush1.msra.mxu0 %v4256
    %4258 = vmatprep.subr.mxu0 0.0
    %4259 = vmatpush1.msra.mxu0 0.0
    %4260 = vmatprep.subr.mxu0 0.0
    %4261 = vmatpush1.msra.mxu0 0.0
    %4262 = vmatprep.subr.mxu0 0.0
    %4263 = vmatpush1.msra.mxu0 0.0
    %4264 = vmatprep.subr.mxu0 0.0
    %4265 = vmatpush1.msra.mxu0 0.0
    %4266 = vmatprep.subr.mxu0 0.0
    %4267 = vmatpush1.msra.mxu0 0.0
    %4268 = vmatprep.subr.mxu0 0.0
    %4269 = vmatpush1.msra.mxu0 0.0
    %4270 = vmatprep.subr.mxu0 0.0
    %4271 = vmatpush1.msra.mxu0 0.0
    %4272 = vmatprep.subr.mxu0 0.0
    %4273 = vmatpush1.msra.mxu0 0.0
    %4274 = vmatprep.subr.mxu0 0.0
    %4275 = vmatpush1.msra.mxu0 0.0
    %4276 = vmatprep.subr.mxu0 0.0
    %4277 = vmatpush1.msra.mxu0 0.0
    %4278 = vmatprep.subr.mxu0 0.0
    %4279 = vmatpush1.msra.mxu0 0.0
    %4280 = vmatprep.subr.mxu0 0.0
    %4281 = vmatpush1.msra.mxu0 0.0
    %4282 = vmatprep.subr.mxu0 0.0
    %4283 = vmatpush1.msra.mxu0 0.0
    %4284 = vmatprep.subr.mxu0 0.0
    %4285 = vmatpush1.msra.mxu0 0.0
    %4286 = vmatprep.subr.mxu0 0.0
    %4287 = vmatpush1.msra.mxu0 0.0
    %4288 = vmatprep.subr.mxu0 0.0
    %4289 = vmatpush1.msra.mxu0 0.0
    %4290 = vmatprep.subr.mxu0 0.0
    %4291 = vmatpush1.msra.mxu0 0.0
    %4292 = vmatprep.subr.mxu0 0.0
    %4293 = vmatpush1.msra.mxu0 0.0
    %4294 = vmatprep.subr.mxu0 0.0
    %4295 = vmatpush1.msra.mxu0 0.0
    %4296 = vmatprep.subr.mxu0 0.0
    %4297 = vmatpush1.msra.mxu0 0.0
    %4298 = vmatprep.subr.mxu0 0.0
    %4299 = vmatpush1.msra.mxu0 0.0
    %4300 = vmatprep.subr.mxu0 0.0
    %4301 = vmatpush1.msra.mxu0 0.0
    %4302 = vmatprep.subr.mxu0 0.0
    %4303 = vmatpush1.msra.mxu0 0.0
    %4304 = vmatprep.subr.mxu0 0.0
    %4305 = vmatpush1.msra.mxu0 0.0
    %4306 = vmatprep.subr.mxu0 0.0
    %4307 = vmatpush1.msra.mxu0 0.0
    %4308 = vmatprep.subr.mxu0 0.0
    %4309 = vmatpush1.msra.mxu0 0.0
    %4310 = vmatprep.subr.mxu0 0.0
    %4311 = vmatpush1.msra.mxu0 0.0
    %4312 = vmatprep.subr.mxu0 0.0
    %4313 = vmatpush1.msra.mxu0 0.0
    %4314 = vmatprep.mubr.f32.mxu0 0.0
    %v4315 = vand.u32 %v3053, 4294901760
    %4316 = vmatmul.mubr.f32.gmra.mrb[0].mxu0 %v4315
    %v4317 = vpop.f32.mrb[0].mxu0
    %v4318 = vadd.f32 %v4195, %v4317
    %v4319 = vpop.f32.mrb[0].mxu0
    %v4320 = vadd.f32 %v4197, %v4319
    %4321 = vmatprep.mubr.f32.mxu0 0.0
    %v4322 = vand.u32 %v3056, 4294901760
    %4323 = vmatmul.mubr.f32.gmra.mrb[0].mxu0 %v4322
    %v4324 = vpop.f32.mrb[0].mxu0
    %v4325 = vadd.f32 %v4204, %v4324
    %v4326 = vpop.f32.mrb[0].mxu0
    %v4327 = vadd.f32 %v4206, %v4326
    %4328 = vmatprep.mubr.f32.mxu0 0.0
    %v4329 = vand.u32 %v3059, 4294901760
    %4330 = vmatmul.mubr.f32.gmra.mrb[0].mxu0 %v4329
    %v4331 = vpop.f32.mrb[0].mxu0
    %v4332 = vadd.f32 %v4213, %v4331
    %v4333 = vpop.f32.mrb[0].mxu0
    %v4334 = vadd.f32 %v4215, %v4333
    %4335 = vmatprep.mubr.f32.mxu0 0.0
    %v4336 = vand.u32 %v3062, 4294901760
    %4337 = vmatmul.mubr.f32.gmra.mrb[0].mxu0 %v4336
    %v4338 = vpop.f32.mrb[0].mxu0
    %v4339 = vadd.f32 %v4222, %v4338
    %v4340 = vpop.f32.mrb[0].mxu0
    %v4341 = vadd.f32 %v4224, %v4340
    %4342 = vdwg.mxu0
    %v4343 = vand.u32 %v3009, 4294901760
    %4344 = vmatprep.subr.mxu0 %v4343
    %v4345 = vand.u32 %v3008, 4294901760
    %4346 = vmatpush1.msra.mxu0 %v4345
    %v4347 = vand.u32 %v3013, 4294901760
    %4348 = vmatprep.subr.mxu0 %v4347
    %v4349 = vand.u32 %v3012, 4294901760
    %4350 = vmatpush1.msra.mxu0 %v4349
    %v4351 = vand.u32 %v3017, 4294901760
    %4352 = vmatprep.subr.mxu0 %v4351
    %v4353 = vand.u32 %v3016, 4294901760
    %4354 = vmatpush1.msra.mxu0 %v4353
    %v4355 = vand.u32 %v3021, 4294901760
    %4356 = vmatprep.subr.mxu0 %v4355
    %v4357 = vand.u32 %v3020, 4294901760
    %4358 = vmatpush1.msra.mxu0 %v4357
    %4359 = vmatprep.subr.mxu0 0.0
    %4360 = vmatpush1.msra.mxu0 0.0
    %4361 = vmatprep.subr.mxu0 0.0
    %4362 = vmatpush1.msra.mxu0 0.0
    %4363 = vmatprep.subr.mxu0 0.0
    %4364 = vmatpush1.msra.mxu0 0.0
    %4365 = vmatprep.subr.mxu0 0.0
    %4366 = vmatpush1.msra.mxu0 0.0
    %4367 = vmatprep.subr.mxu0 0.0
    %4368 = vmatpush1.msra.mxu0 0.0
    %4369 = vmatprep.subr.mxu0 0.0
    %4370 = vmatpush1.msra.mxu0 0.0
    %4371 = vmatprep.subr.mxu0 0.0
    %4372 = vmatpush1.msra.mxu0 0.0
    %4373 = vmatprep.subr.mxu0 0.0
    %4374 = vmatpush1.msra.mxu0 0.0
    %4375 = vmatprep.subr.mxu0 0.0
    %4376 = vmatpush1.msra.mxu0 0.0
    %4377 = vmatprep.subr.mxu0 0.0
    %4378 = vmatpush1.msra.mxu0 0.0
    %4379 = vmatprep.subr.mxu0 0.0
    %4380 = vmatpush1.msra.mxu0 0.0
    %4381 = vmatprep.subr.mxu0 0.0
    %4382 = vmatpush1.msra.mxu0 0.0
    %4383 = vmatprep.subr.mxu0 0.0
    %4384 = vmatpush1.msra.mxu0 0.0
    %4385 = vmatprep.subr.mxu0 0.0
    %4386 = vmatpush1.msra.mxu0 0.0
    %4387 = vmatprep.subr.mxu0 0.0
    %4388 = vmatpush1.msra.mxu0 0.0
    %4389 = vmatprep.subr.mxu0 0.0
    %4390 = vmatpush1.msra.mxu0 0.0
    %4391 = vmatprep.subr.mxu0 0.0
    %4392 = vmatpush1.msra.mxu0 0.0
    %4393 = vmatprep.subr.mxu0 0.0
    %4394 = vmatpush1.msra.mxu0 0.0
    %4395 = vmatprep.subr.mxu0 0.0
    %4396 = vmatpush1.msra.mxu0 0.0
    %4397 = vmatprep.subr.mxu0 0.0
    %4398 = vmatpush1.msra.mxu0 0.0
    %4399 = vmatprep.subr.mxu0 0.0
    %4400 = vmatpush1.msra.mxu0 0.0
    %4401 = vmatprep.subr.mxu0 0.0
    %4402 = vmatpush1.msra.mxu0 0.0
    %4403 = vmatprep.subr.mxu0 0.0
    %4404 = vmatpush1.msra.mxu0 0.0
    %4405 = vmatprep.subr.mxu0 0.0
    %4406 = vmatpush1.msra.mxu0 0.0
    %4407 = vmatprep.subr.mxu0 0.0
    %4408 = vmatpush1.msra.mxu0 0.0
    %4409 = vmatprep.subr.mxu0 0.0
    %4410 = vmatpush1.msra.mxu0 0.0
    %4411 = vmatprep.subr.mxu0 0.0
    %4412 = vmatpush1.msra.mxu0 0.0
    %4413 = vmatprep.subr.mxu0 0.0
    %4414 = vmatpush1.msra.mxu0 0.0
    %4415 = vmatprep.mubr.f32.mxu0 0.0
    %v4416 = vand.u32 %v3053, 4294901760
    %4417 = vmatmul.mubr.f32.gmra.mrb[0].mxu0 %v4416
    %v4418 = vpop.f32.mrb[0].mxu0
    %v4419 = vadd.f32 %v4318, %v4418
    %v4420 = vpop.f32.mrb[0].mxu0
    %v4421 = vadd.f32 %v4320, %v4420
    %4422 = vmatprep.mubr.f32.mxu0 0.0
    %v4423 = vand.u32 %v3056, 4294901760
    %4424 = vmatmul.mubr.f32.gmra.mrb[0].mxu0 %v4423
    %v4425 = vpop.f32.mrb[0].mxu0
    %v4426 = vadd.f32 %v4325, %v4425
    %v4427 = vpop.f32.mrb[0].mxu0
    %v4428 = vadd.f32 %v4327, %v4427
    %4429 = vmatprep.mubr.f32.mxu0 0.0
    %v4430 = vand.u32 %v3059, 4294901760
    %4431 = vmatmul.mubr.f32.gmra.mrb[0].mxu0 %v4430
    %v4432 = vpop.f32.mrb[0].mxu0
    %v4433 = vadd.f32 %v4332, %v4432
    %v4434 = vpop.f32.mrb[0].mxu0
    %v4435 = vadd.f32 %v4334, %v4434
    %4436 = vmatprep.mubr.f32.mxu0 0.0
    %v4437 = vand.u32 %v3062, 4294901760
    %4438 = vmatmul.mubr.f32.gmra.mrb[0].mxu0 %v4437
    %v4439 = vpop.f32.mrb[0].mxu0
    %v4440 = vadd.f32 %v4339, %v4439
    %v4441 = vpop.f32.mrb[0].mxu0
    %v4442 = vadd.f32 %v4341, %v4441
    %4443 = vdwg.mxu0
    %v4444 = vtanh.pop %v3729
    %v4445 = vtanh.pop %v3731
    %v4446 = vtanh.pop %v4419
    %v4447 = vtanh.pop %v4421
    %v4448 = vtanh.pop %v3736
    %v4449 = vtanh.pop %v3738
    %v4450 = vtanh.pop %v4426
    %v4451 = vtanh.pop %v4428
    %v4452 = vtanh.pop %v3743
    %v4453 = vtanh.pop %v3745
    %v4454 = vtanh.pop %v4433
    %v4455 = vtanh.pop %v4435
    %v4456 = vtanh.pop %v3750
    %v4457 = vtanh.pop %v3752
    %v4458 = vtanh.pop %v4440
    %v4459 = vtanh.pop %v4442
    %v4460 = vld [vmem:[%s5] sm:$0xff]
    %v4461 = vld [vmem:[%s5 + $0x8] sm:$0xff]
    %v4462 = vld [vmem:[%s5 + $0x10] sm:$0xff]
    %v4463 = vld [vmem:[%s5 + $0x18] sm:$0xff]
    %4465 = vset.pattern.permute.xlu0 0
    %4466 = vperm.xlu0 %4465, %v4460
    %v4467 = vpop.permute.xlu0 %4466
    %4470 = vset.pattern.permute.xlu0 0
    %4471 = vperm.xlu0 %4470, %v4461
    %v4472 = vpop.permute.xlu0 %4471
    %4475 = vset.pattern.permute.xlu0 0
    %4476 = vperm.xlu0 %4475, %v4462
    %v4477 = vpop.permute.xlu0 %4476
    %4480 = vset.pattern.permute.xlu0 0
    %4481 = vperm.xlu0 %4480, %v4463
    %v4482 = vpop.permute.xlu0 %4481
    %v4484 = vmul.f32 %v4467, %v4444
    %v4485 = vmul.f32 %v4467, %v4445
    %v4486 = vmul.f32 %v4467, %v4446
    %v4487 = vmul.f32 %v4467, %v4447
    %v4488 = vmul.f32 %v4472, %v4448
    %v4489 = vmul.f32 %v4472, %v4449
    %v4490 = vmul.f32 %v4472, %v4450
    %v4491 = vmul.f32 %v4472, %v4451
    %v4492 = vmul.f32 %v4477, %v4452
    %v4493 = vmul.f32 %v4477, %v4453
    %v4494 = vmul.f32 %v4477, %v4454
    %v4495 = vmul.f32 %v4477, %v4455
    %v4496 = vmul.f32 %v4482, %v4456
    %v4497 = vmul.f32 %v4482, %v4457
    %v4498 = vmul.f32 %v4482, %v4458
    %v4499 = vmul.f32 %v4482, %v4459
    %v4500 = vadd.f32 %v4484, %v4488
    %v4501 = vadd.f32 %v4500, %v4492
    %v4502 = vadd.f32 %v4501, %v4496
    %v4503 = vrot.slane %v4502, 4
    %v4504 = vadd.f32 %v4502, %v4503
    %v4505 = vrot.slane %v4504, 2
    %v4506 = vadd.f32 %v4504, %v4505
    %v4507 = vrot.slane %v4506, 1
    %v4508 = vadd.f32 %v4506, %v4507
    %v4509 = vadd.f32 %v4485, %v4489
    %v4510 = vadd.f32 %v4509, %v4493
    %v4511 = vadd.f32 %v4510, %v4497
    %v4512 = vrot.slane %v4511, 4
    %v4513 = vadd.f32 %v4511, %v4512
    %v4514 = vrot.slane %v4513, 2
    %v4515 = vadd.f32 %v4513, %v4514
    %v4516 = vrot.slane %v4515, 1
    %v4517 = vadd.f32 %v4515, %v4516
    %v4518 = vadd.f32 %v4486, %v4490
    %v4519 = vadd.f32 %v4518, %v4494
    %v4520 = vadd.f32 %v4519, %v4498
    %v4521 = vrot.slane %v4520, 4
    %v4522 = vadd.f32 %v4520, %v4521
    %v4523 = vrot.slane %v4522, 2
    %v4524 = vadd.f32 %v4522, %v4523
    %v4525 = vrot.slane %v4524, 1
    %v4526 = vadd.f32 %v4524, %v4525
    %vm4527 = vcmask 949248
    %v4528 = vsel %vm4527, %v4487, 0.0
    %v4529 = vsel %vm4527, %v4491, 0.0
    %v4530 = vadd.f32 %v4528, %v4529
    %v4531 = vsel %vm4527, %v4495, 0.0
    %v4532 = vadd.f32 %v4530, %v4531
    %v4533 = vsel %vm4527, %v4499, 0.0
    %v4534 = vadd.f32 %v4532, %v4533
    %v4535 = vrot.slane %v4534, 4
    %v4536 = vadd.f32 %v4534, %v4535
    %v4537 = vrot.slane %v4536, 2
    %v4538 = vadd.f32 %v4536, %v4537
    %v4539 = vrot.slane %v4538, 1
    %v4540 = vadd.f32 %v4538, %v4539
    %v4541 = vld [vmem:[#allocation2] sm:$0x1]
    %4543 = vset.pattern.permute.xlu0 0
    %4544 = vperm.xlu0 %4543, %v4541
    %v4545 = vpop.permute.xlu0 %4544
    %v4547 = vlaneseq
    %v4548 = vshrl.u32 %v4547, 7
    %v4549 = vsub.s32 0, %v4548
    %v4550 = vrot.slane %v4545, %v4549
    %v4551 = vadd.f32 %v4508, %v4550
    %v4552 = vadd.f32 %v4517, %v4550
    %v4553 = vadd.f32 %v4526, %v4550
    %v4554 = vadd.f32 %v4540, %v4550
    %v4559 = vcombine.low %v4551, %v4552
    %v4560 = vcombine.low %v4553, %v4554
    %v4562 = vunpack.c.l.s4 1966171168
    %v4563 = vunpack.c.0.s8 %v4562
    %v4564 = vlaneseq
    %v4565 = vshrl.u32 %v4564, 7
    %v4566 = vsub.s32 %v4563, %v4565
    %v4567 = vrot.slane %v4559, %v4566
    %v4569 = vunpack.c.l.s4 1966171168
    %v4570 = vunpack.c.0.s8 %v4569
    %v4571 = vlaneseq
    %v4572 = vshrl.u32 %v4571, 7
    %v4573 = vsub.s32 %v4570, %v4572
    %v4574 = vrot.slane %v4560, %v4573
    %v4575 = vcombine.low %v4567, %v4574
    %v4577 = vunpack.c.l.s4 1966171168
    %v4578 = vunpack.c.0.s8 %v4577
    %v4579 = vlaneseq
    %v4580 = vshrl.u32 %v4579, 7
    %v4581 = vsub.s32 %v4578, %v4580
    %v4582 = vrot.slane %v4575, %v4581
    %v4584 = vlaneseq
    %vm4585 = vcmp.ge.s32.totalorder %v4584, 0
    %vm4586 = vcmp.lt.s32.totalorder %v4584, 500
    %vm4587 = vmand %vm4585, %vm4586
    %4588 = vst.msk [vmem:[#allocation3] sm:$0xf] %vm4587, %v4582
    // Predicated region
    $region30: #{fcn_forward.1} parent=1 // pred_check
      _
    $region31: #{fcn_forward.1} parent=1 // pred_check_branch
      %4590 = sbr.rel (0) target = $region33
    $region32: #{fcn_forward.1} parent=1 // pred_region
      %s4592 = ssub.s32 64, 64
      %4593 = vsyncadd [#allocation4], %s4592
      %s4595 = sshll.u32 [#allocation3], 4
      %s4596 = int_to_ptr.vmem [resolvable:$true] %s4595
      %4598 = dma.vmem_to_hbm [thread:$0]  %s4596, 64, %s7, [#allocation4]
    $region33: #{fcn_forward.1} parent=1 // pred_fallthru
      _
    // Predicated region
    $region34: #{fcn_forward.1} parent=1 // pred_check
      _
    $region35: #{fcn_forward.1} parent=1 // pred_check_branch
      %4600 = sbr.rel (0) target = $region37
    $region36: #{fcn_forward.1} parent=1 // pred_region
      %4601 = dma.done [#allocation4], 64
    $region37: #{fcn_forward.1} parent=1 // pred_fallthru
      _
    %4602 = vsyncpa [#allocation4], 1

</llo_original>
